<compile_context>
chip_gen: v7x
topology: tpu7x:2x2x1
jax: 0.10.0
libtpu: 0.0.40
codegen_flags: <defaults>
</compile_context>

<pallas_src>
import jax
import jax.numpy as jnp
from jax.experimental import pallas as pl
from jax.experimental.pallas import tpu as pltpu

NEG_SLOPE = 0.2

LATENT = 100
H1 = 256
H3 = 1024
OUT = 784

LATENT_P = 128   # 100 -> 128 (lane pad for the first dot's K dim)


def _round_up(x, m):
    return ((x + m - 1) // m) * m


def _leaky_relu(x):
    return jnp.where(x > 0, x, NEG_SLOPE * x)


def _choose_tm(B):
    """Batch tile size.  Big tiles amortize the ~0.35us/step pipeline overhead;
    the >=2-steps cap keeps both v7x TensorCores busy for large batches."""
    if B <= 512:
        return _round_up(max(B, 1), 16)      # small batch: one tile, 16-row aligned
    if B >= 2048:
        return 1024                          # >= 2 grid steps guaranteed
    return 512                               # mid-size: >= 2 steps once B > 512


def generator_kernel(x_ref, w1_ref, b1_ref, w3_ref, b3_ref, w4_ref, b4_ref, out_ref):
    # x tile: [TM, 128] bf16 (pre-cast in wrapper); weights bf16 [in, out];
    # biases f32 [1, out]; all accumulation in f32 on the MXU.

    # fc1 + LeakyReLU (+ dropout1 == identity in eval)
    h = jnp.dot(x_ref[...], w1_ref[...],
                preferred_element_type=jnp.float32) + b1_ref[...]
    h = _leaky_relu(h)                                        # [TM, 256] f32

    # fc3 + LeakyReLU (+ dropout3 == identity in eval)
    h = jnp.dot(h.astype(jnp.bfloat16), w3_ref[...],
                preferred_element_type=jnp.float32) + b3_ref[...]
    h = _leaky_relu(h)                                        # [TM, 1024] f32

    # fc4 + tanh (tanh in f32 on the EUP, store in out dtype)
    h = jnp.dot(h.astype(jnp.bfloat16), w4_ref[...],
                preferred_element_type=jnp.float32) + b4_ref[...]
    out_ref[...] = jnp.tanh(h).astype(out_ref.dtype)          # [TM, 784]


def generator_forward(x, device_params, *, tm=None, out_dtype=jnp.bfloat16):
    """x: [B, 100] f32. device_params: lane-padded bf16 weights + f32 biases."""
    w1, b1, w3, b3, w4, b4 = device_params
    B = x.shape[0]

    if tm is None:
        tm = _choose_tm(B)
    b_pad = _round_up(max(B, 1), tm)

    # Pad latent lanes 100 -> 128, batch rows to a tile multiple, cast to bf16
    # (halves the per-tile x DMA; the cast fuses into the pad op on the XLA side).
    xp = jnp.pad(x, ((0, b_pad - B), (0, LATENT_P - x.shape[1]))).astype(jnp.bfloat16)

    grid = (b_pad // tm,)

    def const_spec(shape):
        # Constant index_map: weight/bias blocks are DMA'd once and stay resident.
        return pl.BlockSpec(shape, lambda i: (0, 0))

    out_isize = jnp.dtype(out_dtype).itemsize
    flops = 2 * b_pad * (LATENT_P * H1 + H1 * H3 + H3 * OUT)
    bytes_accessed = (
        xp.size * 2
        + (w1.size + w3.size + w4.size) * 2
        + (b1.size + b3.size + b4.size) * 4
        + b_pad * OUT * out_isize
    )
    cost = pl.CostEstimate(flops=flops,
                           transcendentals=b_pad * OUT,
                           bytes_accessed=bytes_accessed)

    out = pl.pallas_call(
        generator_kernel,
        out_shape=jax.ShapeDtypeStruct((b_pad, OUT), out_dtype),
        grid=grid,
        in_specs=[
            pl.BlockSpec((tm, LATENT_P), lambda i: (i, 0)),   # x: tiled on batch
            const_spec((LATENT_P, H1)),                       # w1: VMEM-resident
            const_spec((1, H1)),                              # b1
            const_spec((H1, H3)),                             # w3
            const_spec((1, H3)),                              # b3
            const_spec((H3, OUT)),                            # w4 (784 cols, full dim)
            const_spec((1, OUT)),                             # b4
        ],
        # 784 == full array dim -> legal block; only the final 16-lane remainder
        # of each row's last vreg is a masked store.  No wrapper column slice.
        out_specs=pl.BlockSpec((tm, OUT), lambda i: (i, 0)),
        compiler_params=pltpu.CompilerParams(
            dimension_semantics=("parallel",),                # megacore on v7x
        ),
        cost_estimate=cost,
    )(xp, w1, b1, w3, b3, w4, b4)

    # Row slice only if the batch was padded (no-op for tile-aligned batches).
    return out if b_pad == B else out[:B]


def init_params(key):
    """f32 params matching PyTorch nn.Linear default init, stored as [in, out]."""
    def linear(key, fan_in, fan_out):
        kw, kb = jax.random.split(key)
        bound = 1.0 / jnp.sqrt(fan_in)
        w = jax.random.uniform(kw, (fan_in, fan_out), jnp.float32, -bound, bound)
        b = jax.random.uniform(kb, (1, fan_out), jnp.float32, -bound, bound)
        return w, b

    k1, k3, k4 = jax.random.split(key, 3)
    w1, b1 = linear(k1, LATENT, H1)
    w3, b3 = linear(k3, H1, H3)
    w4, b4 = linear(k4, H3, OUT)
    return (w1, b1, w3, b3, w4, b4)


def prepare_params(params):
    """Pad w1's latent rows to 128 and cast weights to bf16 (biases stay f32)."""
    w1, b1, w3, b3, w4, b4 = params
    w1p = jnp.pad(w1, ((0, LATENT_P - LATENT), (0, 0))).astype(jnp.bfloat16)
    w3p = w3.astype(jnp.bfloat16)
    w4p = w4.astype(jnp.bfloat16)
    return (w1p, b1, w3p, b3, w4p, b4)


def reference_forward_f32(x, params):
    w1, b1, w3, b3, w4, b4 = params
    h = jnp.dot(x, w1) + b1
    h = jnp.where(h > 0, h, NEG_SLOPE * h)
    h = jnp.dot(h, w3) + b3
    h = jnp.where(h > 0, h, NEG_SLOPE * h)
    return jnp.tanh(jnp.dot(h, w4) + b4)


def reference_forward_bf16(x, params):
    """Mirrors the kernel's mixed precision: bf16 dot inputs, f32 accumulation."""
    w1, b1, w3, b3, w4, b4 = params
    bf = jnp.bfloat16
    h = jnp.dot(x.astype(bf), w1.astype(bf), preferred_element_type=jnp.float32) + b1
    h = jnp.where(h > 0, h, NEG_SLOPE * h)
    h = jnp.dot(h.astype(bf), w3.astype(bf), preferred_element_type=jnp.float32) + b3
    h = jnp.where(h > 0, h, NEG_SLOPE * h)
    h = jnp.dot(h.astype(bf), w4.astype(bf), preferred_element_type=jnp.float32) + b4
    return jnp.tanh(h)


if __name__ == "__main__":
    key = jax.random.PRNGKey(0)
    kx, kp = jax.random.split(key)

    B = 2                                    # small batch of latent vectors
    x = jax.random.normal(kx, (B, LATENT), dtype=jnp.float32)

    params_f32 = init_params(kp)
    params_dev = prepare_params(params_f32)

    # Default (bf16 output) and exact-dtype (f32 output) paths.
    out_bf16 = jax.block_until_ready(generator_forward(x, params_dev))
    out_f32 = jax.block_until_ready(
        generator_forward(x, params_dev, out_dtype=jnp.float32))

    assert out_bf16.shape == (B, OUT), out_bf16.shape
    assert out_bf16.dtype == jnp.bfloat16
    assert out_f32.shape == (B, OUT), out_f32.shape
    assert out_f32.dtype == jnp.float32

    ref_bf16 = reference_forward_bf16(x, params_f32)
    ref_f32 = reference_forward_f32(x, params_f32)

    assert jnp.allclose(out_f32, ref_bf16, atol=1e-3, rtol=1e-3), \
        "f32-out mismatch vs bf16 reference"
    assert jnp.allclose(out_f32, ref_f32, atol=5e-2), \
        "f32-out mismatch vs f32 reference"
    assert jnp.allclose(out_bf16.astype(jnp.float32), ref_bf16, atol=1e-2), \
        "bf16-out mismatch vs bf16 reference"
    assert jnp.allclose(out_bf16.astype(jnp.float32), ref_f32, atol=6e-2), \
        "bf16-out mismatch vs f32 reference"

    # Exercise the multi-tile grid path (batch padding + pipelined batch tiles).
    B2 = 40
    x2 = jax.random.normal(kx, (B2, LATENT), dtype=jnp.float32)
    out2 = jax.block_until_ready(
        generator_forward(x2, params_dev, tm=16, out_dtype=jnp.float32))
    assert out2.shape == (B2, OUT), out2.shape
    assert jnp.allclose(out2, reference_forward_bf16(x2, params_f32),
                        atol=1e-3, rtol=1e-3), "tiled-path mismatch vs bf16 reference"

    print("KERNEL_OK")
</pallas_src>

<mosaic_0001>
module attributes {stable_mosaic.version = 11 : i64} {
  func.func @generator_kernel(%arg0: i32, %arg1: memref<16x128xbf16, #tpu.memory_space<vmem>>, %arg2: memref<128x256xbf16, #tpu.memory_space<vmem>>, %arg3: memref<1x256xf32, #tpu.memory_space<vmem>>, %arg4: memref<256x1024xbf16, #tpu.memory_space<vmem>>, %arg5: memref<1x1024xf32, #tpu.memory_space<vmem>>, %arg6: memref<1024x784xbf16, #tpu.memory_space<vmem>>, %arg7: memref<1x784xf32, #tpu.memory_space<vmem>>, %arg8: memref<16x784xbf16, #tpu.memory_space<vmem>>) attributes {dimension_semantics = [#tpu.dimension_semantics<parallel>], iteration_bounds = array<i64: 1>, scalar_prefetch = 0 : i64, scratch_operands = 0 : i64, tpu.core_type = #tpu.core_type<tc>, window_params = [{transform_indices = @transform_0, window_bounds = array<i64: 16, 128>}, {pipeline_mode = #tpu.pipeline_mode<synchronous>, transform_indices = @transform_1, window_bounds = array<i64: 128, 256>}, {pipeline_mode = #tpu.pipeline_mode<synchronous>, transform_indices = @transform_2, window_bounds = array<i64: 1, 256>}, {pipeline_mode = #tpu.pipeline_mode<synchronous>, transform_indices = @transform_3, window_bounds = array<i64: 256, 1024>}, {pipeline_mode = #tpu.pipeline_mode<synchronous>, transform_indices = @transform_4, window_bounds = array<i64: 1, 1024>}, {pipeline_mode = #tpu.pipeline_mode<synchronous>, transform_indices = @transform_5, window_bounds = array<i64: 1024, 784>}, {pipeline_mode = #tpu.pipeline_mode<synchronous>, transform_indices = @transform_6, window_bounds = array<i64: 1, 784>}, {transform_indices = @transform_7, window_bounds = array<i64: 16, 784>}]} {
    %c0 = arith.constant 0 : index
    %c0_0 = arith.constant 0 : index
    %0 = vector.load %arg1[%c0, %c0_0] : memref<16x128xbf16, #tpu.memory_space<vmem>>, vector<16x128xbf16>
    %c0_1 = arith.constant 0 : index
    %c0_2 = arith.constant 0 : index
    %1 = vector.load %arg2[%c0_1, %c0_2] : memref<128x256xbf16, #tpu.memory_space<vmem>>, vector<128x256xbf16>
    %cst = arith.constant dense<0.000000e+00> : vector<16x256xf32>
    %2 = tpu.matmul %0, %1, %cst {dimension_numbers = #tpu.dot_dimension_numbers<[1], [0], [0], [1], [0, 0, 1, 1], [], []>} : vector<16x128xbf16>, vector<128x256xbf16>, vector<16x256xf32> -> vector<16x256xf32>
    %c0_3 = arith.constant 0 : index
    %c0_4 = arith.constant 0 : index
    %3 = vector.load %arg3[%c0_3, %c0_4] : memref<1x256xf32, #tpu.memory_space<vmem>>, vector<1x256xf32>
    %4 = vector.broadcast %3 : vector<1x256xf32> to vector<16x256xf32>
    %5 = arith.addf %2, %4 : vector<16x256xf32>
    %cst_5 = arith.constant 0.000000e+00 : f32
    %6 = vector.broadcast %cst_5 : f32 to vector<16x256xf32>
    %7 = arith.cmpf ogt, %5, %6 : vector<16x256xf32>
    %cst_6 = arith.constant 2.000000e-01 : f32
    %8 = vector.broadcast %cst_6 : f32 to vector<16x256xf32>
    %9 = arith.mulf %8, %5 : vector<16x256xf32>
    %10 = arith.select %7, %5, %9 : vector<16x256xi1>, vector<16x256xf32>
    %11 = arith.truncf %10 : vector<16x256xf32> to vector<16x256xbf16>
    %c0_7 = arith.constant 0 : index
    %c0_8 = arith.constant 0 : index
    %12 = vector.load %arg4[%c0_7, %c0_8] : memref<256x1024xbf16, #tpu.memory_space<vmem>>, vector<256x1024xbf16>
    %cst_9 = arith.constant dense<0.000000e+00> : vector<16x1024xf32>
    %13 = tpu.matmul %11, %12, %cst_9 {dimension_numbers = #tpu.dot_dimension_numbers<[1], [0], [0], [1], [0, 0, 1, 1], [], []>} : vector<16x256xbf16>, vector<256x1024xbf16>, vector<16x1024xf32> -> vector<16x1024xf32>
    %c0_10 = arith.constant 0 : index
    %c0_11 = arith.constant 0 : index
    %14 = vector.load %arg5[%c0_10, %c0_11] : memref<1x1024xf32, #tpu.memory_space<vmem>>, vector<1x1024xf32>
    %15 = vector.broadcast %14 : vector<1x1024xf32> to vector<16x1024xf32>
    %16 = arith.addf %13, %15 : vector<16x1024xf32>
    %cst_12 = arith.constant 0.000000e+00 : f32
    %17 = vector.broadcast %cst_12 : f32 to vector<16x1024xf32>
    %18 = arith.cmpf ogt, %16, %17 : vector<16x1024xf32>
    %cst_13 = arith.constant 2.000000e-01 : f32
    %19 = vector.broadcast %cst_13 : f32 to vector<16x1024xf32>
    %20 = arith.mulf %19, %16 : vector<16x1024xf32>
    %21 = arith.select %18, %16, %20 : vector<16x1024xi1>, vector<16x1024xf32>
    %22 = arith.truncf %21 : vector<16x1024xf32> to vector<16x1024xbf16>
    %c0_14 = arith.constant 0 : index
    %c0_15 = arith.constant 0 : index
    %23 = vector.load %arg6[%c0_14, %c0_15] : memref<1024x784xbf16, #tpu.memory_space<vmem>>, vector<1024x784xbf16>
    %cst_16 = arith.constant dense<0.000000e+00> : vector<16x784xf32>
    %24 = tpu.matmul %22, %23, %cst_16 {dimension_numbers = #tpu.dot_dimension_numbers<[1], [0], [0], [1], [0, 0, 1, 1], [], []>} : vector<16x1024xbf16>, vector<1024x784xbf16>, vector<16x784xf32> -> vector<16x784xf32>
    %c0_17 = arith.constant 0 : index
    %c0_18 = arith.constant 0 : index
    %25 = vector.load %arg7[%c0_17, %c0_18] : memref<1x784xf32, #tpu.memory_space<vmem>>, vector<1x784xf32>
    %26 = vector.broadcast %25 : vector<1x784xf32> to vector<16x784xf32>
    %27 = arith.addf %24, %26 : vector<16x784xf32>
    %28 = math.tanh %27 : vector<16x784xf32>
    %29 = arith.truncf %28 : vector<16x784xf32> to vector<16x784xbf16>
    %c0_19 = arith.constant 0 : index
    %c0_20 = arith.constant 0 : index
    %30 = vector.load %arg8[%c0_19, %c0_20] : memref<16x784xbf16, #tpu.memory_space<vmem>>, vector<16x784xbf16>
    tpu.vector_store %arg8[%c0_19, %c0_20], %29 {strides = array<i32>} : memref<16x784xbf16, #tpu.memory_space<vmem>>, vector<16x784xbf16>,
    return
  }
  func.func @transform_0(%arg0: i32) -> (i32, i32) {
    %c0_i32 = arith.constant 0 : i32
    %c0_i32_0 = arith.constant 0 : i32
    return %arg0, %c0_i32 : i32, i32
  }
  func.func @transform_1(%arg0: i32) -> (i32, i32) {
    %c0_i32 = arith.constant 0 : i32
    %c0_i32_0 = arith.constant 0 : i32
    %c0_i32_1 = arith.constant 0 : i32
    return %c0_i32, %c0_i32_0 : i32, i32
  }
  func.func @transform_2(%arg0: i32) -> (i32, i32) {
    %c0_i32 = arith.constant 0 : i32
    %c0_i32_0 = arith.constant 0 : i32
    %c0_i32_1 = arith.constant 0 : i32
    return %c0_i32, %c0_i32_0 : i32, i32
  }
  func.func @transform_3(%arg0: i32) -> (i32, i32) {
    %c0_i32 = arith.constant 0 : i32
    %c0_i32_0 = arith.constant 0 : i32
    %c0_i32_1 = arith.constant 0 : i32
    return %c0_i32, %c0_i32_0 : i32, i32
  }
  func.func @transform_4(%arg0: i32) -> (i32, i32) {
    %c0_i32 = arith.constant 0 : i32
    %c0_i32_0 = arith.constant 0 : i32
    %c0_i32_1 = arith.constant 0 : i32
    return %c0_i32, %c0_i32_0 : i32, i32
  }
  func.func @transform_5(%arg0: i32) -> (i32, i32) {
    %c0_i32 = arith.constant 0 : i32
    %c0_i32_0 = arith.constant 0 : i32
    %c0_i32_1 = arith.constant 0 : i32
    return %c0_i32, %c0_i32_0 : i32, i32
  }
  func.func @transform_6(%arg0: i32) -> (i32, i32) {
    %c0_i32 = arith.constant 0 : i32
    %c0_i32_0 = arith.constant 0 : i32
    %c0_i32_1 = arith.constant 0 : i32
    return %c0_i32, %c0_i32_0 : i32, i32
  }
  func.func @transform_7(%arg0: i32) -> (i32, i32) {
    %c0_i32 = arith.constant 0 : i32
    %c0_i32_0 = arith.constant 0 : i32
    return %arg0, %c0_i32 : i32, i32
  }
}

</mosaic_0001>

<llo_original>
// kernel: tpu_custom_call.1
$region0: #{tpu_custom_call.1}
  #allocation0 [shape = 'u32[]', space=smem, size = 0x4, offset = 0x4, fixed_abs, tag = 'smem constant byte address 0x4 - core index']
  #allocation1 [shape = 'u32[144,128]{1,0:T(1,128)}', space=vmem, size = 0x12000, scoped, tag = 'internal scratch']
  %s0 = inlined_call_operand.vmem [shape: bf16[16,128], index: 0, kind: input, shape index: {}]
  %s1 = inlined_call_operand.vmem [shape: bf16[128,256], index: 1, kind: input, shape index: {}]
  %s2 = inlined_call_operand.vmem [shape: f32[1,256], index: 2, kind: input, shape index: {}]
  %s3 = inlined_call_operand.vmem [shape: bf16[256,1024], index: 3, kind: input, shape index: {}]
  %s4 = inlined_call_operand.vmem [shape: f32[1,1024], index: 4, kind: input, shape index: {}]
  %s5 = inlined_call_operand.vmem [shape: bf16[1024,784], index: 5, kind: input, shape index: {}]
  %s6 = inlined_call_operand.vmem [shape: f32[1,784], index: 6, kind: input, shape index: {}]
  %s7 = inlined_call_operand.hbm [shape: bf16[16,784], index: 7, kind: output, shape index: {}]
  %s8 = sld [smem:[#allocation0]]
  $region38: #{tpu_custom_call.1} parent=0
    _
  %s10 = ssub.s32 1, %s8
  %s11 = scalar_select 0, %s10, %s8
  $region1: #{tpu_custom_call.1} parent=0
    #allocation2 [shape = 'u8[28672]{0}', space=vmem, size = 0x7000, scoped, tag = 'output window, operand 0, single buffered']
    #allocation3 [shape = 's32[1]{0}', space=sflag, size = 0x4, scoped, tag = 'scoped memory for tpu_custom_call.1']
    %12 = vsyncpa [#allocation3], 0
    // Predicated region
    $region2: #{tpu_custom_call.1} parent=1 // pred_check
      _
    $region3: #{tpu_custom_call.1} parent=1 // pred_check_branch
      %14 = sbr.rel (0) target = $region5
    $region4: #{tpu_custom_call.1} parent=1 // pred_region
      _
    $region5: #{tpu_custom_call.1} parent=1 // pred_fallthru
      _
    // Predicated region
    $region6: #{tpu_custom_call.1} parent=1 // pred_check
      _
    $region7: #{tpu_custom_call.1} parent=1 // pred_check_branch
      %16 = sbr.rel (0) target = $region9
    $region8: #{tpu_custom_call.1} parent=1 // pred_region
      _
    $region9: #{tpu_custom_call.1} parent=1 // pred_fallthru
      _
    // Predicated region
    $region10: #{tpu_custom_call.1} parent=1 // pred_check
      _
    $region11: #{tpu_custom_call.1} parent=1 // pred_check_branch
      %18 = sbr.rel (0) target = $region13
    $region12: #{tpu_custom_call.1} parent=1 // pred_region
      _
    $region13: #{tpu_custom_call.1} parent=1 // pred_fallthru
      _
    // Predicated region
    $region14: #{tpu_custom_call.1} parent=1 // pred_check
      _
    $region15: #{tpu_custom_call.1} parent=1 // pred_check_branch
      %20 = sbr.rel (0) target = $region17
    $region16: #{tpu_custom_call.1} parent=1 // pred_region
      _
    $region17: #{tpu_custom_call.1} parent=1 // pred_fallthru
      _
    // Predicated region
    $region18: #{tpu_custom_call.1} parent=1 // pred_check
      _
    $region19: #{tpu_custom_call.1} parent=1 // pred_check_branch
      %22 = sbr.rel (0) target = $region21
    $region20: #{tpu_custom_call.1} parent=1 // pred_region
      _
    $region21: #{tpu_custom_call.1} parent=1 // pred_fallthru
      _
    // Predicated region
    $region22: #{tpu_custom_call.1} parent=1 // pred_check
      _
    $region23: #{tpu_custom_call.1} parent=1 // pred_check_branch
      %24 = sbr.rel (0) target = $region25
    $region24: #{tpu_custom_call.1} parent=1 // pred_region
      _
    $region25: #{tpu_custom_call.1} parent=1 // pred_fallthru
      _
    // Predicated region
    $region26: #{tpu_custom_call.1} parent=1 // pred_check
      _
    $region27: #{tpu_custom_call.1} parent=1 // pred_check_branch
      %26 = sbr.rel (0) target = $region29
    $region28: #{tpu_custom_call.1} parent=1 // pred_region
      _
    $region29: #{tpu_custom_call.1} parent=1 // pred_fallthru
      _
    %v28 = vld [vmem:[%s0] sm:$0xf]
    %v29 = vld [vmem:[%s0 + $0x4] sm:$0xf]
    %v30 = vld [vmem:[%s1] sm:$0xff]
    %v31 = vld [vmem:[%s1 + $0x8] sm:$0xff]
    %v32 = vld [vmem:[%s1 + $0x10] sm:$0xff]
    %v33 = vld [vmem:[%s1 + $0x18] sm:$0xff]
    %v34 = vld [vmem:[%s1 + $0x20] sm:$0xff]
    %v35 = vld [vmem:[%s1 + $0x28] sm:$0xff]
    %v36 = vld [vmem:[%s1 + $0x30] sm:$0xff]
    %v37 = vld [vmem:[%s1 + $0x38] sm:$0xff]
    %v38 = vld [vmem:[%s1 + $0x40] sm:$0xff]
    %v39 = vld [vmem:[%s1 + $0x48] sm:$0xff]
    %v40 = vld [vmem:[%s1 + $0x50] sm:$0xff]
    %v41 = vld [vmem:[%s1 + $0x58] sm:$0xff]
    %v42 = vld [vmem:[%s1 + $0x60] sm:$0xff]
    %v43 = vld [vmem:[%s1 + $0x68] sm:$0xff]
    %v44 = vld [vmem:[%s1 + $0x70] sm:$0xff]
    %v45 = vld [vmem:[%s1 + $0x78] sm:$0xff]
    %v46 = vld [vmem:[%s2] sm:$0x3]
    %v48 = vlaneseq
    %v49 = vshrl.u32 %v48, 7
    %v50 = vsub.s32 0, %v49
    %v51 = vrot.slane %v46, %v50
    %v52 = vlaneseq
    %v53 = vshrl.u32 %v52, 7
    %v54 = vsub.s32 1, %v53
    %v55 = vrot.slane %v46, %v54
    %v60 = vunpack.c.l.b16 %v28
    %v61 = vunpack.c.l.b16 %v29
    %v62 = vpack.c.b16 %v61, %v60
    %v80 = vunpack.c.l.b16 %v30
    %v81 = vunpack.c.h.b16 %v30
    %v82 = vunpack.c.l.b16 %v31
    %v83 = vunpack.c.h.b16 %v31
    %v84 = vunpack.c.l.b16 %v32
    %v85 = vunpack.c.h.b16 %v32
    %v86 = vunpack.c.l.b16 %v33
    %v87 = vunpack.c.h.b16 %v33
    %v88 = vunpack.c.l.b16 %v34
    %v89 = vunpack.c.h.b16 %v34
    %v90 = vunpack.c.l.b16 %v35
    %v91 = vunpack.c.h.b16 %v35
    %v92 = vunpack.c.l.b16 %v36
    %v93 = vunpack.c.h.b16 %v36
    %v94 = vunpack.c.l.b16 %v37
    %v95 = vunpack.c.h.b16 %v37
    %v96 = vunpack.c.l.b16 %v38
    %v97 = vunpack.c.h.b16 %v38
    %v98 = vunpack.c.l.b16 %v39
    %v99 = vunpack.c.h.b16 %v39
    %v100 = vunpack.c.l.b16 %v40
    %v101 = vunpack.c.h.b16 %v40
    %v102 = vunpack.c.l.b16 %v41
    %v103 = vunpack.c.h.b16 %v41
    %v104 = vunpack.c.l.b16 %v42
    %v105 = vunpack.c.h.b16 %v42
    %v106 = vunpack.c.l.b16 %v43
    %v107 = vunpack.c.h.b16 %v43
    %v108 = vunpack.c.l.b16 %v44
    %v109 = vunpack.c.h.b16 %v44
    %v110 = vunpack.c.l.b16 %v45
    %v111 = vunpack.c.h.b16 %v45
    %v112 = vpack.c.b16 %v82, %v80
    %v113 = vpack.c.b16 %v83, %v81
    %v114 = vpack.c.b16 %v86, %v84
    %v115 = vpack.c.b16 %v87, %v85
    %v116 = vpack.c.b16 %v90, %v88
    %v117 = vpack.c.b16 %v91, %v89
    %v118 = vpack.c.b16 %v94, %v92
    %v119 = vpack.c.b16 %v95, %v93
    %v120 = vpack.c.b16 %v98, %v96
    %v121 = vpack.c.b16 %v99, %v97
    %v122 = vpack.c.b16 %v102, %v100
    %v123 = vpack.c.b16 %v103, %v101
    %v124 = vpack.c.b16 %v106, %v104
    %v125 = vpack.c.b16 %v107, %v105
    %v126 = vpack.c.b16 %v110, %v108
    %v127 = vpack.c.b16 %v111, %v109
    %144 = vmatprep.subr.bf16.mxu0 %v113
    %145 = vmatpush1.bf16.msra.mxu0 %v112
    %146 = vmatprep.subr.bf16.mxu0 %v115
    %147 = vmatpush1.bf16.msra.mxu0 %v114
    %148 = vmatprep.subr.bf16.mxu0 %v117
    %149 = vmatpush1.bf16.msra.mxu0 %v116
    %150 = vmatprep.subr.bf16.mxu0 %v119
    %151 = vmatpush1.bf16.msra.mxu0 %v118
    %152 = vmatprep.subr.bf16.mxu0 %v121
    %153 = vmatpush1.bf16.msra.mxu0 %v120
    %154 = vmatprep.subr.bf16.mxu0 %v123
    %155 = vmatpush1.bf16.msra.mxu0 %v122
    %156 = vmatprep.subr.bf16.mxu0 %v125
    %157 = vmatpush1.bf16.msra.mxu0 %v124
    %158 = vmatprep.subr.bf16.mxu0 %v127
    %159 = vmatpush1.bf16.msra.mxu0 %v126
    %160 = vmatprep.subr.bf16.mxu0 0
    %161 = vmatpush1.bf16.msra.mxu0 0
    %162 = vmatprep.subr.bf16.mxu0 0
    %163 = vmatpush1.bf16.msra.mxu0 0
    %164 = vmatprep.subr.bf16.mxu0 0
    %165 = vmatpush1.bf16.msra.mxu0 0
    %166 = vmatprep.subr.bf16.mxu0 0
    %167 = vmatpush1.bf16.msra.mxu0 0
    %168 = vmatprep.subr.bf16.mxu0 0
    %169 = vmatpush1.bf16.msra.mxu0 0
    %170 = vmatprep.subr.bf16.mxu0 0
    %171 = vmatpush1.bf16.msra.mxu0 0
    %172 = vmatprep.subr.bf16.mxu0 0
    %173 = vmatpush1.bf16.msra.mxu0 0
    %174 = vmatprep.subr.bf16.mxu0 0
    %175 = vmatpush1.bf16.msra.mxu0 0
    %176 = vmatprep.mubr.bf16.mxu0 0
    %177 = vmatmul.mubr.bf16.gmra.mrb[0].mxu0 %v62
    %v178 = vpop.f32.mrb[0].mxu0
    %v179 = vadd.f32 %v51, %v178
    %v180 = vpop.f32.mrb[0].mxu0
    %v181 = vadd.f32 %v55, %v180
    %v182 = vpop.f32.mrb[0].mxu0
    %v183 = vadd.f32 %v51, %v182
    %v184 = vpop.f32.mrb[0].mxu0
    %v185 = vadd.f32 %v55, %v184
    %186 = vdwg.mxu0
    %vm187 = vcmp.gt.f32.partialorder %v179, 0.0
    %vm188 = vcmp.gt.f32.partialorder %v181, 0.0
    %vm189 = vcmp.gt.f32.partialorder %v183, 0.0
    %vm190 = vcmp.gt.f32.partialorder %v185, 0.0
    %v191 = vmul.f32 %v179, 0.2
    %v192 = vmul.f32 %v181, 0.2
    %v193 = vmul.f32 %v183, 0.2
    %v194 = vmul.f32 %v185, 0.2
    %v195 = vsel %vm187, %v179, %v191
    %v196 = vsel %vm188, %v181, %v192
    %v197 = vsel %vm189, %v183, %v193
    %v198 = vsel %vm190, %v185, %v194
    %v199 = vpack.c.bf16 %v197, %v195
    %v200 = vpack.c.bf16 %v198, %v196
    %v201 = vld [vmem:[%s3] sm:$0xff]
    %v202 = vld [vmem:[%s3 + $0x8] sm:$0xff]
    %v203 = vld [vmem:[%s3 + $0x10] sm:$0xff]
    %v204 = vld [vmem:[%s3 + $0x18] sm:$0xff]
    %v205 = vld [vmem:[%s3 + $0x20] sm:$0xff]
    %v206 = vld [vmem:[%s3 + $0x28] sm:$0xff]
    %v207 = vld [vmem:[%s3 + $0x30] sm:$0xff]
    %v208 = vld [vmem:[%s3 + $0x38] sm:$0xff]
    %v209 = vld [vmem:[%s3 + $0x40] sm:$0xff]
    %v210 = vld [vmem:[%s3 + $0x48] sm:$0xff]
    %v211 = vld [vmem:[%s3 + $0x50] sm:$0xff]
    %v212 = vld [vmem:[%s3 + $0x58] sm:$0xff]
    %v213 = vld [vmem:[%s3 + $0x60] sm:$0xff]
    %v214 = vld [vmem:[%s3 + $0x68] sm:$0xff]
    %v215 = vld [vmem:[%s3 + $0x70] sm:$0xff]
    %v216 = vld [vmem:[%s3 + $0x78] sm:$0xff]
    %v217 = vld [vmem:[%s3 + $0x80] sm:$0xff]
    %v218 = vld [vmem:[%s3 + $0x88] sm:$0xff]
    %v219 = vld [vmem:[%s3 + $0x90] sm:$0xff]
    %v220 = vld [vmem:[%s3 + $0x98] sm:$0xff]
    %v221 = vld [vmem:[%s3 + $0xa0] sm:$0xff]
    %v222 = vld [vmem:[%s3 + $0xa8] sm:$0xff]
    %v223 = vld [vmem:[%s3 + $0xb0] sm:$0xff]
    %v224 = vld [vmem:[%s3 + $0xb8] sm:$0xff]
    %v225 = vld [vmem:[%s3 + $0xc0] sm:$0xff]
    %v226 = vld [vmem:[%s3 + $0xc8] sm:$0xff]
    %v227 = vld [vmem:[%s3 + $0xd0] sm:$0xff]
    %v228 = vld [vmem:[%s3 + $0xd8] sm:$0xff]
    %v229 = vld [vmem:[%s3 + $0xe0] sm:$0xff]
    %v230 = vld [vmem:[%s3 + $0xe8] sm:$0xff]
    %v231 = vld [vmem:[%s3 + $0xf0] sm:$0xff]
    %v232 = vld [vmem:[%s3 + $0xf8] sm:$0xff]
    %v233 = vld [vmem:[%s3 + $0x100] sm:$0xff]
    %v234 = vld [vmem:[%s3 + $0x108] sm:$0xff]
    %v235 = vld [vmem:[%s3 + $0x110] sm:$0xff]
    %v236 = vld [vmem:[%s3 + $0x118] sm:$0xff]
    %v237 = vld [vmem:[%s3 + $0x120] sm:$0xff]
    %v238 = vld [vmem:[%s3 + $0x128] sm:$0xff]
    %v239 = vld [vmem:[%s3 + $0x130] sm:$0xff]
    %v240 = vld [vmem:[%s3 + $0x138] sm:$0xff]
    %v241 = vld [vmem:[%s3 + $0x140] sm:$0xff]
    %v242 = vld [vmem:[%s3 + $0x148] sm:$0xff]
    %v243 = vld [vmem:[%s3 + $0x150] sm:$0xff]
    %v244 = vld [vmem:[%s3 + $0x158] sm:$0xff]
    %v245 = vld [vmem:[%s3 + $0x160] sm:$0xff]
    %v246 = vld [vmem:[%s3 + $0x168] sm:$0xff]
    %v247 = vld [vmem:[%s3 + $0x170] sm:$0xff]
    %v248 = vld [vmem:[%s3 + $0x178] sm:$0xff]
    %v249 = vld [vmem:[%s3 + $0x180] sm:$0xff]
    %v250 = vld [vmem:[%s3 + $0x188] sm:$0xff]
    %v251 = vld [vmem:[%s3 + $0x190] sm:$0xff]
    %v252 = vld [vmem:[%s3 + $0x198] sm:$0xff]
    %v253 = vld [vmem:[%s3 + $0x1a0] sm:$0xff]
    %v254 = vld [vmem:[%s3 + $0x1a8] sm:$0xff]
    %v255 = vld [vmem:[%s3 + $0x1b0] sm:$0xff]
    %v256 = vld [vmem:[%s3 + $0x1b8] sm:$0xff]
    %v257 = vld [vmem:[%s3 + $0x1c0] sm:$0xff]
    %v258 = vld [vmem:[%s3 + $0x1c8] sm:$0xff]
    %v259 = vld [vmem:[%s3 + $0x1d0] sm:$0xff]
    %v260 = vld [vmem:[%s3 + $0x1d8] sm:$0xff]
    %v261 = vld [vmem:[%s3 + $0x1e0] sm:$0xff]
    %v262 = vld [vmem:[%s3 + $0x1e8] sm:$0xff]
    %v263 = vld [vmem:[%s3 + $0x1f0] sm:$0xff]
    %v264 = vld [vmem:[%s3 + $0x1f8] sm:$0xff]
    %v265 = vld [vmem:[%s3 + $0x200] sm:$0xff]
    %v266 = vld [vmem:[%s3 + $0x208] sm:$0xff]
    %v267 = vld [vmem:[%s3 + $0x210] sm:$0xff]
    %v268 = vld [vmem:[%s3 + $0x218] sm:$0xff]
    %v269 = vld [vmem:[%s3 + $0x220] sm:$0xff]
    %v270 = vld [vmem:[%s3 + $0x228] sm:$0xff]
    %v271 = vld [vmem:[%s3 + $0x230] sm:$0xff]
    %v272 = vld [vmem:[%s3 + $0x238] sm:$0xff]
    %v273 = vld [vmem:[%s3 + $0x240] sm:$0xff]
    %v274 = vld [vmem:[%s3 + $0x248] sm:$0xff]
    %v275 = vld [vmem:[%s3 + $0x250] sm:$0xff]
    %v276 = vld [vmem:[%s3 + $0x258] sm:$0xff]
    %v277 = vld [vmem:[%s3 + $0x260] sm:$0xff]
    %v278 = vld [vmem:[%s3 + $0x268] sm:$0xff]
    %v279 = vld [vmem:[%s3 + $0x270] sm:$0xff]
    %v280 = vld [vmem:[%s3 + $0x278] sm:$0xff]
    %v281 = vld [vmem:[%s3 + $0x280] sm:$0xff]
    %v282 = vld [vmem:[%s3 + $0x288] sm:$0xff]
    %v283 = vld [vmem:[%s3 + $0x290] sm:$0xff]
    %v284 = vld [vmem:[%s3 + $0x298] sm:$0xff]
    %v285 = vld [vmem:[%s3 + $0x2a0] sm:$0xff]
    %v286 = vld [vmem:[%s3 + $0x2a8] sm:$0xff]
    %v287 = vld [vmem:[%s3 + $0x2b0] sm:$0xff]
    %v288 = vld [vmem:[%s3 + $0x2b8] sm:$0xff]
    %v289 = vld [vmem:[%s3 + $0x2c0] sm:$0xff]
    %v290 = vld [vmem:[%s3 + $0x2c8] sm:$0xff]
    %v291 = vld [vmem:[%s3 + $0x2d0] sm:$0xff]
    %v292 = vld [vmem:[%s3 + $0x2d8] sm:$0xff]
    %v293 = vld [vmem:[%s3 + $0x2e0] sm:$0xff]
    %v294 = vld [vmem:[%s3 + $0x2e8] sm:$0xff]
    %v295 = vld [vmem:[%s3 + $0x2f0] sm:$0xff]
    %v296 = vld [vmem:[%s3 + $0x2f8] sm:$0xff]
    %v297 = vld [vmem:[%s3 + $0x300] sm:$0xff]
    %v298 = vld [vmem:[%s3 + $0x308] sm:$0xff]
    %v299 = vld [vmem:[%s3 + $0x310] sm:$0xff]
    %v300 = vld [vmem:[%s3 + $0x318] sm:$0xff]
    %v301 = vld [vmem:[%s3 + $0x320] sm:$0xff]
    %v302 = vld [vmem:[%s3 + $0x328] sm:$0xff]
    %v303 = vld [vmem:[%s3 + $0x330] sm:$0xff]
    %v304 = vld [vmem:[%s3 + $0x338] sm:$0xff]
    %v305 = vld [vmem:[%s3 + $0x340] sm:$0xff]
    %v306 = vld [vmem:[%s3 + $0x348] sm:$0xff]
    %v307 = vld [vmem:[%s3 + $0x350] sm:$0xff]
    %v308 = vld [vmem:[%s3 + $0x358] sm:$0xff]
    %v309 = vld [vmem:[%s3 + $0x360] sm:$0xff]
    %v310 = vld [vmem:[%s3 + $0x368] sm:$0xff]
    %v311 = vld [vmem:[%s3 + $0x370] sm:$0xff]
    %v312 = vld [vmem:[%s3 + $0x378] sm:$0xff]
    %v313 = vld [vmem:[%s3 + $0x380] sm:$0xff]
    %v314 = vld [vmem:[%s3 + $0x388] sm:$0xff]
    %v315 = vld [vmem:[%s3 + $0x390] sm:$0xff]
    %v316 = vld [vmem:[%s3 + $0x398] sm:$0xff]
    %v317 = vld [vmem:[%s3 + $0x3a0] sm:$0xff]
    %v318 = vld [vmem:[%s3 + $0x3a8] sm:$0xff]
    %v319 = vld [vmem:[%s3 + $0x3b0] sm:$0xff]
    %v320 = vld [vmem:[%s3 + $0x3b8] sm:$0xff]
    %v321 = vld [vmem:[%s3 + $0x3c0] sm:$0xff]
    %v322 = vld [vmem:[%s3 + $0x3c8] sm:$0xff]
    %v323 = vld [vmem:[%s3 + $0x3d0] sm:$0xff]
    %v324 = vld [vmem:[%s3 + $0x3d8] sm:$0xff]
    %v325 = vld [vmem:[%s3 + $0x3e0] sm:$0xff]
    %v326 = vld [vmem:[%s3 + $0x3e8] sm:$0xff]
    %v327 = vld [vmem:[%s3 + $0x3f0] sm:$0xff]
    %v328 = vld [vmem:[%s3 + $0x3f8] sm:$0xff]
    %v329 = vld [vmem:[%s4] sm:$0xff]
    %v331 = vlaneseq
    %v332 = vshrl.u32 %v331, 7
    %v333 = vsub.s32 0, %v332
    %v334 = vrot.slane %v329, %v333
    %v335 = vlaneseq
    %v336 = vshrl.u32 %v335, 7
    %v337 = vsub.s32 1, %v336
    %v338 = vrot.slane %v329, %v337
    %v339 = vlaneseq
    %v340 = vshrl.u32 %v339, 7
    %v341 = vsub.s32 2, %v340
    %v342 = vrot.slane %v329, %v341
    %v343 = vlaneseq
    %v344 = vshrl.u32 %v343, 7
    %v345 = vsub.s32 3, %v344
    %v346 = vrot.slane %v329, %v345
    %v347 = vlaneseq
    %v348 = vshrl.u32 %v347, 7
    %v349 = vsub.s32 4, %v348
    %v350 = vrot.slane %v329, %v349
    %v351 = vlaneseq
    %v352 = vshrl.u32 %v351, 7
    %v353 = vsub.s32 5, %v352
    %v354 = vrot.slane %v329, %v353
    %v355 = vlaneseq
    %v356 = vshrl.u32 %v355, 7
    %v357 = vsub.s32 6, %v356
    %v358 = vrot.slane %v329, %v357
    %v359 = vlaneseq
    %v360 = vshrl.u32 %v359, 7
    %v361 = vsub.s32 7, %v360
    %v362 = vrot.slane %v329, %v361
    %v499 = vunpack.c.l.b16 %v201
    %v500 = vunpack.c.h.b16 %v201
    %v501 = vunpack.c.l.b16 %v202
    %v502 = vunpack.c.h.b16 %v202
    %v503 = vunpack.c.l.b16 %v203
    %v504 = vunpack.c.h.b16 %v203
    %v505 = vunpack.c.l.b16 %v204
    %v506 = vunpack.c.h.b16 %v204
    %v507 = vunpack.c.l.b16 %v205
    %v508 = vunpack.c.h.b16 %v205
    %v509 = vunpack.c.l.b16 %v206
    %v510 = vunpack.c.h.b16 %v206
    %v511 = vunpack.c.l.b16 %v207
    %v512 = vunpack.c.h.b16 %v207
    %v513 = vunpack.c.l.b16 %v208
    %v514 = vunpack.c.h.b16 %v208
    %v515 = vunpack.c.l.b16 %v209
    %v516 = vunpack.c.h.b16 %v209
    %v517 = vunpack.c.l.b16 %v210
    %v518 = vunpack.c.h.b16 %v210
    %v519 = vunpack.c.l.b16 %v211
    %v520 = vunpack.c.h.b16 %v211
    %v521 = vunpack.c.l.b16 %v212
    %v522 = vunpack.c.h.b16 %v212
    %v523 = vunpack.c.l.b16 %v213
    %v524 = vunpack.c.h.b16 %v213
    %v525 = vunpack.c.l.b16 %v214
    %v526 = vunpack.c.h.b16 %v214
    %v527 = vunpack.c.l.b16 %v215
    %v528 = vunpack.c.h.b16 %v215
    %v529 = vunpack.c.l.b16 %v216
    %v530 = vunpack.c.h.b16 %v216
    %v531 = vunpack.c.l.b16 %v217
    %v532 = vunpack.c.h.b16 %v217
    %v533 = vunpack.c.l.b16 %v218
    %v534 = vunpack.c.h.b16 %v218
    %v535 = vunpack.c.l.b16 %v219
    %v536 = vunpack.c.h.b16 %v219
    %v537 = vunpack.c.l.b16 %v220
    %v538 = vunpack.c.h.b16 %v220
    %v539 = vunpack.c.l.b16 %v221
    %v540 = vunpack.c.h.b16 %v221
    %v541 = vunpack.c.l.b16 %v222
    %v542 = vunpack.c.h.b16 %v222
    %v543 = vunpack.c.l.b16 %v223
    %v544 = vunpack.c.h.b16 %v223
    %v545 = vunpack.c.l.b16 %v224
    %v546 = vunpack.c.h.b16 %v224
    %v547 = vunpack.c.l.b16 %v225
    %v548 = vunpack.c.h.b16 %v225
    %v549 = vunpack.c.l.b16 %v226
    %v550 = vunpack.c.h.b16 %v226
    %v551 = vunpack.c.l.b16 %v227
    %v552 = vunpack.c.h.b16 %v227
    %v553 = vunpack.c.l.b16 %v228
    %v554 = vunpack.c.h.b16 %v228
    %v555 = vunpack.c.l.b16 %v229
    %v556 = vunpack.c.h.b16 %v229
    %v557 = vunpack.c.l.b16 %v230
    %v558 = vunpack.c.h.b16 %v230
    %v559 = vunpack.c.l.b16 %v231
    %v560 = vunpack.c.h.b16 %v231
    %v561 = vunpack.c.l.b16 %v232
    %v562 = vunpack.c.h.b16 %v232
    %v563 = vunpack.c.l.b16 %v233
    %v564 = vunpack.c.h.b16 %v233
    %v565 = vunpack.c.l.b16 %v234
    %v566 = vunpack.c.h.b16 %v234
    %v567 = vunpack.c.l.b16 %v235
    %v568 = vunpack.c.h.b16 %v235
    %v569 = vunpack.c.l.b16 %v236
    %v570 = vunpack.c.h.b16 %v236
    %v571 = vunpack.c.l.b16 %v237
    %v572 = vunpack.c.h.b16 %v237
    %v573 = vunpack.c.l.b16 %v238
    %v574 = vunpack.c.h.b16 %v238
    %v575 = vunpack.c.l.b16 %v239
    %v576 = vunpack.c.h.b16 %v239
    %v577 = vunpack.c.l.b16 %v240
    %v578 = vunpack.c.h.b16 %v240
    %v579 = vunpack.c.l.b16 %v241
    %v580 = vunpack.c.h.b16 %v241
    %v581 = vunpack.c.l.b16 %v242
    %v582 = vunpack.c.h.b16 %v242
    %v583 = vunpack.c.l.b16 %v243
    %v584 = vunpack.c.h.b16 %v243
    %v585 = vunpack.c.l.b16 %v244
    %v586 = vunpack.c.h.b16 %v244
    %v587 = vunpack.c.l.b16 %v245
    %v588 = vunpack.c.h.b16 %v245
    %v589 = vunpack.c.l.b16 %v246
    %v590 = vunpack.c.h.b16 %v246
    %v591 = vunpack.c.l.b16 %v247
    %v592 = vunpack.c.h.b16 %v247
    %v593 = vunpack.c.l.b16 %v248
    %v594 = vunpack.c.h.b16 %v248
    %v595 = vunpack.c.l.b16 %v249
    %v596 = vunpack.c.h.b16 %v249
    %v597 = vunpack.c.l.b16 %v250
    %v598 = vunpack.c.h.b16 %v250
    %v599 = vunpack.c.l.b16 %v251
    %v600 = vunpack.c.h.b16 %v251
    %v601 = vunpack.c.l.b16 %v252
    %v602 = vunpack.c.h.b16 %v252
    %v603 = vunpack.c.l.b16 %v253
    %v604 = vunpack.c.h.b16 %v253
    %v605 = vunpack.c.l.b16 %v254
    %v606 = vunpack.c.h.b16 %v254
    %v607 = vunpack.c.l.b16 %v255
    %v608 = vunpack.c.h.b16 %v255
    %v609 = vunpack.c.l.b16 %v256
    %v610 = vunpack.c.h.b16 %v256
    %v611 = vunpack.c.l.b16 %v257
    %v612 = vunpack.c.h.b16 %v257
    %v613 = vunpack.c.l.b16 %v258
    %v614 = vunpack.c.h.b16 %v258
    %v615 = vunpack.c.l.b16 %v259
    %v616 = vunpack.c.h.b16 %v259
    %v617 = vunpack.c.l.b16 %v260
    %v618 = vunpack.c.h.b16 %v260
    %v619 = vunpack.c.l.b16 %v261
    %v620 = vunpack.c.h.b16 %v261
    %v621 = vunpack.c.l.b16 %v262
    %v622 = vunpack.c.h.b16 %v262
    %v623 = vunpack.c.l.b16 %v263
    %v624 = vunpack.c.h.b16 %v263
    %v625 = vunpack.c.l.b16 %v264
    %v626 = vunpack.c.h.b16 %v264
    %v627 = vunpack.c.l.b16 %v265
    %v628 = vunpack.c.h.b16 %v265
    %v629 = vunpack.c.l.b16 %v266
    %v630 = vunpack.c.h.b16 %v266
    %v631 = vunpack.c.l.b16 %v267
    %v632 = vunpack.c.h.b16 %v267
    %v633 = vunpack.c.l.b16 %v268
    %v634 = vunpack.c.h.b16 %v268
    %v635 = vunpack.c.l.b16 %v269
    %v636 = vunpack.c.h.b16 %v269
    %v637 = vunpack.c.l.b16 %v270
    %v638 = vunpack.c.h.b16 %v270
    %v639 = vunpack.c.l.b16 %v271
    %v640 = vunpack.c.h.b16 %v271
    %v641 = vunpack.c.l.b16 %v272
    %v642 = vunpack.c.h.b16 %v272
    %v643 = vunpack.c.l.b16 %v273
    %v644 = vunpack.c.h.b16 %v273
    %v645 = vunpack.c.l.b16 %v274
    %v646 = vunpack.c.h.b16 %v274
    %v647 = vunpack.c.l.b16 %v275
    %v648 = vunpack.c.h.b16 %v275
    %v649 = vunpack.c.l.b16 %v276
    %v650 = vunpack.c.h.b16 %v276
    %v651 = vunpack.c.l.b16 %v277
    %v652 = vunpack.c.h.b16 %v277
    %v653 = vunpack.c.l.b16 %v278
    %v654 = vunpack.c.h.b16 %v278
    %v655 = vunpack.c.l.b16 %v279
    %v656 = vunpack.c.h.b16 %v279
    %v657 = vunpack.c.l.b16 %v280
    %v658 = vunpack.c.h.b16 %v280
    %v659 = vunpack.c.l.b16 %v281
    %v660 = vunpack.c.h.b16 %v281
    %v661 = vunpack.c.l.b16 %v282
    %v662 = vunpack.c.h.b16 %v282
    %v663 = vunpack.c.l.b16 %v283
    %v664 = vunpack.c.h.b16 %v283
    %v665 = vunpack.c.l.b16 %v284
    %v666 = vunpack.c.h.b16 %v284
    %v667 = vunpack.c.l.b16 %v285
    %v668 = vunpack.c.h.b16 %v285
    %v669 = vunpack.c.l.b16 %v286
    %v670 = vunpack.c.h.b16 %v286
    %v671 = vunpack.c.l.b16 %v287
    %v672 = vunpack.c.h.b16 %v287
    %v673 = vunpack.c.l.b16 %v288
    %v674 = vunpack.c.h.b16 %v288
    %v675 = vunpack.c.l.b16 %v289
    %v676 = vunpack.c.h.b16 %v289
    %v677 = vunpack.c.l.b16 %v290
    %v678 = vunpack.c.h.b16 %v290
    %v679 = vunpack.c.l.b16 %v291
    %v680 = vunpack.c.h.b16 %v291
    %v681 = vunpack.c.l.b16 %v292
    %v682 = vunpack.c.h.b16 %v292
    %v683 = vunpack.c.l.b16 %v293
    %v684 = vunpack.c.h.b16 %v293
    %v685 = vunpack.c.l.b16 %v294
    %v686 = vunpack.c.h.b16 %v294
    %v687 = vunpack.c.l.b16 %v295
    %v688 = vunpack.c.h.b16 %v295
    %v689 = vunpack.c.l.b16 %v296
    %v690 = vunpack.c.h.b16 %v296
    %v691 = vunpack.c.l.b16 %v297
    %v692 = vunpack.c.h.b16 %v297
    %v693 = vunpack.c.l.b16 %v298
    %v694 = vunpack.c.h.b16 %v298
    %v695 = vunpack.c.l.b16 %v299
    %v696 = vunpack.c.h.b16 %v299
    %v697 = vunpack.c.l.b16 %v300
    %v698 = vunpack.c.h.b16 %v300
    %v699 = vunpack.c.l.b16 %v301
    %v700 = vunpack.c.h.b16 %v301
    %v701 = vunpack.c.l.b16 %v302
    %v702 = vunpack.c.h.b16 %v302
    %v703 = vunpack.c.l.b16 %v303
    %v704 = vunpack.c.h.b16 %v303
    %v705 = vunpack.c.l.b16 %v304
    %v706 = vunpack.c.h.b16 %v304
    %v707 = vunpack.c.l.b16 %v305
    %v708 = vunpack.c.h.b16 %v305
    %v709 = vunpack.c.l.b16 %v306
    %v710 = vunpack.c.h.b16 %v306
    %v711 = vunpack.c.l.b16 %v307
    %v712 = vunpack.c.h.b16 %v307
    %v713 = vunpack.c.l.b16 %v308
    %v714 = vunpack.c.h.b16 %v308
    %v715 = vunpack.c.l.b16 %v309
    %v716 = vunpack.c.h.b16 %v309
    %v717 = vunpack.c.l.b16 %v310
    %v718 = vunpack.c.h.b16 %v310
    %v719 = vunpack.c.l.b16 %v311
    %v720 = vunpack.c.h.b16 %v311
    %v721 = vunpack.c.l.b16 %v312
    %v722 = vunpack.c.h.b16 %v312
    %v723 = vunpack.c.l.b16 %v313
    %v724 = vunpack.c.h.b16 %v313
    %v725 = vunpack.c.l.b16 %v314
    %v726 = vunpack.c.h.b16 %v314
    %v727 = vunpack.c.l.b16 %v315
    %v728 = vunpack.c.h.b16 %v315
    %v729 = vunpack.c.l.b16 %v316
    %v730 = vunpack.c.h.b16 %v316
    %v731 = vunpack.c.l.b16 %v317
    %v732 = vunpack.c.h.b16 %v317
    %v733 = vunpack.c.l.b16 %v318
    %v734 = vunpack.c.h.b16 %v318
    %v735 = vunpack.c.l.b16 %v319
    %v736 = vunpack.c.h.b16 %v319
    %v737 = vunpack.c.l.b16 %v320
    %v738 = vunpack.c.h.b16 %v320
    %v739 = vunpack.c.l.b16 %v321
    %v740 = vunpack.c.h.b16 %v321
    %v741 = vunpack.c.l.b16 %v322
    %v742 = vunpack.c.h.b16 %v322
    %v743 = vunpack.c.l.b16 %v323
    %v744 = vunpack.c.h.b16 %v323
    %v745 = vunpack.c.l.b16 %v324
    %v746 = vunpack.c.h.b16 %v324
    %v747 = vunpack.c.l.b16 %v325
    %v748 = vunpack.c.h.b16 %v325
    %v749 = vunpack.c.l.b16 %v326
    %v750 = vunpack.c.h.b16 %v326
    %v751 = vunpack.c.l.b16 %v327
    %v752 = vunpack.c.h.b16 %v327
    %v753 = vunpack.c.l.b16 %v328
    %v754 = vunpack.c.h.b16 %v328
    %v755 = vpack.c.b16 %v507, %v499
    %v756 = vpack.c.b16 %v508, %v500
    %v757 = vpack.c.b16 %v509, %v501
    %v758 = vpack.c.b16 %v510, %v502
    %v759 = vpack.c.b16 %v511, %v503
    %v760 = vpack.c.b16 %v512, %v504
    %v761 = vpack.c.b16 %v513, %v505
    %v762 = vpack.c.b16 %v514, %v506
    %v763 = vpack.c.b16 %v523, %v515
    %v764 = vpack.c.b16 %v524, %v516
    %v765 = vpack.c.b16 %v525, %v517
    %v766 = vpack.c.b16 %v526, %v518
    %v767 = vpack.c.b16 %v527, %v519
    %v768 = vpack.c.b16 %v528, %v520
    %v769 = vpack.c.b16 %v529, %v521
    %v770 = vpack.c.b16 %v530, %v522
    %v771 = vpack.c.b16 %v539, %v531
    %v772 = vpack.c.b16 %v540, %v532
    %v773 = vpack.c.b16 %v541, %v533
    %v774 = vpack.c.b16 %v542, %v534
    %v775 = vpack.c.b16 %v543, %v535
    %v776 = vpack.c.b16 %v544, %v536
    %v777 = vpack.c.b16 %v545, %v537
    %v778 = vpack.c.b16 %v546, %v538
    %v779 = vpack.c.b16 %v555, %v547
    %v780 = vpack.c.b16 %v556, %v548
    %v781 = vpack.c.b16 %v557, %v549
    %v782 = vpack.c.b16 %v558, %v550
    %v783 = vpack.c.b16 %v559, %v551
    %v784 = vpack.c.b16 %v560, %v552
    %v785 = vpack.c.b16 %v561, %v553
    %v786 = vpack.c.b16 %v562, %v554
    %v787 = vpack.c.b16 %v571, %v563
    %v788 = vpack.c.b16 %v572, %v564
    %v789 = vpack.c.b16 %v573, %v565
    %v790 = vpack.c.b16 %v574, %v566
    %v791 = vpack.c.b16 %v575, %v567
    %v792 = vpack.c.b16 %v576, %v568
    %v793 = vpack.c.b16 %v577, %v569
    %v794 = vpack.c.b16 %v578, %v570
    %v795 = vpack.c.b16 %v587, %v579
    %v796 = vpack.c.b16 %v588, %v580
    %v797 = vpack.c.b16 %v589, %v581
    %v798 = vpack.c.b16 %v590, %v582
    %v799 = vpack.c.b16 %v591, %v583
    %v800 = vpack.c.b16 %v592, %v584
    %v801 = vpack.c.b16 %v593, %v585
    %v802 = vpack.c.b16 %v594, %v586
    %v803 = vpack.c.b16 %v603, %v595
    %v804 = vpack.c.b16 %v604, %v596
    %v805 = vpack.c.b16 %v605, %v597
    %v806 = vpack.c.b16 %v606, %v598
    %v807 = vpack.c.b16 %v607, %v599
    %v808 = vpack.c.b16 %v608, %v600
    %v809 = vpack.c.b16 %v609, %v601
    %v810 = vpack.c.b16 %v610, %v602
    %v811 = vpack.c.b16 %v619, %v611
    %v812 = vpack.c.b16 %v620, %v612
    %v813 = vpack.c.b16 %v621, %v613
    %v814 = vpack.c.b16 %v622, %v614
    %v815 = vpack.c.b16 %v623, %v615
    %v816 = vpack.c.b16 %v624, %v616
    %v817 = vpack.c.b16 %v625, %v617
    %v818 = vpack.c.b16 %v626, %v618
    %v819 = vpack.c.b16 %v635, %v627
    %v820 = vpack.c.b16 %v636, %v628
    %v821 = vpack.c.b16 %v637, %v629
    %v822 = vpack.c.b16 %v638, %v630
    %v823 = vpack.c.b16 %v639, %v631
    %v824 = vpack.c.b16 %v640, %v632
    %v825 = vpack.c.b16 %v641, %v633
    %v826 = vpack.c.b16 %v642, %v634
    %v827 = vpack.c.b16 %v651, %v643
    %v828 = vpack.c.b16 %v652, %v644
    %v829 = vpack.c.b16 %v653, %v645
    %v830 = vpack.c.b16 %v654, %v646
    %v831 = vpack.c.b16 %v655, %v647
    %v832 = vpack.c.b16 %v656, %v648
    %v833 = vpack.c.b16 %v657, %v649
    %v834 = vpack.c.b16 %v658, %v650
    %v835 = vpack.c.b16 %v667, %v659
    %v836 = vpack.c.b16 %v668, %v660
    %v837 = vpack.c.b16 %v669, %v661
    %v838 = vpack.c.b16 %v670, %v662
    %v839 = vpack.c.b16 %v671, %v663
    %v840 = vpack.c.b16 %v672, %v664
    %v841 = vpack.c.b16 %v673, %v665
    %v842 = vpack.c.b16 %v674, %v666
    %v843 = vpack.c.b16 %v683, %v675
    %v844 = vpack.c.b16 %v684, %v676
    %v845 = vpack.c.b16 %v685, %v677
    %v846 = vpack.c.b16 %v686, %v678
    %v847 = vpack.c.b16 %v687, %v679
    %v848 = vpack.c.b16 %v688, %v680
    %v849 = vpack.c.b16 %v689, %v681
    %v850 = vpack.c.b16 %v690, %v682
    %v851 = vpack.c.b16 %v699, %v691
    %v852 = vpack.c.b16 %v700, %v692
    %v853 = vpack.c.b16 %v701, %v693
    %v854 = vpack.c.b16 %v702, %v694
    %v855 = vpack.c.b16 %v703, %v695
    %v856 = vpack.c.b16 %v704, %v696
    %v857 = vpack.c.b16 %v705, %v697
    %v858 = vpack.c.b16 %v706, %v698
    %v859 = vpack.c.b16 %v715, %v707
    %v860 = vpack.c.b16 %v716, %v708
    %v861 = vpack.c.b16 %v717, %v709
    %v862 = vpack.c.b16 %v718, %v710
    %v863 = vpack.c.b16 %v719, %v711
    %v864 = vpack.c.b16 %v720, %v712
    %v865 = vpack.c.b16 %v721, %v713
    %v866 = vpack.c.b16 %v722, %v714
    %v867 = vpack.c.b16 %v731, %v723
    %v868 = vpack.c.b16 %v732, %v724
    %v869 = vpack.c.b16 %v733, %v725
    %v870 = vpack.c.b16 %v734, %v726
    %v871 = vpack.c.b16 %v735, %v727
    %v872 = vpack.c.b16 %v736, %v728
    %v873 = vpack.c.b16 %v737, %v729
    %v874 = vpack.c.b16 %v738, %v730
    %v875 = vpack.c.b16 %v747, %v739
    %v876 = vpack.c.b16 %v748, %v740
    %v877 = vpack.c.b16 %v749, %v741
    %v878 = vpack.c.b16 %v750, %v742
    %v879 = vpack.c.b16 %v751, %v743
    %v880 = vpack.c.b16 %v752, %v744
    %v881 = vpack.c.b16 %v753, %v745
    %v882 = vpack.c.b16 %v754, %v746
    %1011 = vmatprep.subr.bf16.mxu0 %v756
    %1012 = vmatpush1.bf16.msra.mxu0 %v755
    %1013 = vmatprep.subr.bf16.mxu0 %v764
    %1014 = vmatpush1.bf16.msra.mxu0 %v763
    %1015 = vmatprep.subr.bf16.mxu0 %v772
    %1016 = vmatpush1.bf16.msra.mxu0 %v771
    %1017 = vmatprep.subr.bf16.mxu0 %v780
    %1018 = vmatpush1.bf16.msra.mxu0 %v779
    %1019 = vmatprep.subr.bf16.mxu0 %v788
    %1020 = vmatpush1.bf16.msra.mxu0 %v787
    %1021 = vmatprep.subr.bf16.mxu0 %v796
    %1022 = vmatpush1.bf16.msra.mxu0 %v795
    %1023 = vmatprep.subr.bf16.mxu0 %v804
    %1024 = vmatpush1.bf16.msra.mxu0 %v803
    %1025 = vmatprep.subr.bf16.mxu0 %v812
    %1026 = vmatpush1.bf16.msra.mxu0 %v811
    %1027 = vmatprep.subr.bf16.mxu0 %v820
    %1028 = vmatpush1.bf16.msra.mxu0 %v819
    %1029 = vmatprep.subr.bf16.mxu0 %v828
    %1030 = vmatpush1.bf16.msra.mxu0 %v827
    %1031 = vmatprep.subr.bf16.mxu0 %v836
    %1032 = vmatpush1.bf16.msra.mxu0 %v835
    %1033 = vmatprep.subr.bf16.mxu0 %v844
    %1034 = vmatpush1.bf16.msra.mxu0 %v843
    %1035 = vmatprep.subr.bf16.mxu0 %v852
    %1036 = vmatpush1.bf16.msra.mxu0 %v851
    %1037 = vmatprep.subr.bf16.mxu0 %v860
    %1038 = vmatpush1.bf16.msra.mxu0 %v859
    %1039 = vmatprep.subr.bf16.mxu0 %v868
    %1040 = vmatpush1.bf16.msra.mxu0 %v867
    %1041 = vmatprep.subr.bf16.mxu0 %v876
    %1042 = vmatpush1.bf16.msra.mxu0 %v875
    %1043 = vmatprep.mubr.bf16.mxu0 %v200
    %1044 = vmatmul.mubr.bf16.gmra.mrb[0].mxu0 %v199
    %v1045 = vpop.f32.mrb[0].mxu0
    %v1046 = vadd.f32 %v334, %v1045
    %v1047 = vpop.f32.mrb[0].mxu0
    %v1048 = vadd.f32 %v338, %v1047
    %v1049 = vpop.f32.mrb[0].mxu0
    %v1050 = vadd.f32 %v334, %v1049
    %v1051 = vpop.f32.mrb[0].mxu0
    %v1052 = vadd.f32 %v338, %v1051
    %1053 = vdwg.mxu0
    %1054 = vmatprep.subr.bf16.mxu0 %v758
    %1055 = vmatpush1.bf16.msra.mxu0 %v757
    %1056 = vmatprep.subr.bf16.mxu0 %v766
    %1057 = vmatpush1.bf16.msra.mxu0 %v765
    %1058 = vmatprep.subr.bf16.mxu0 %v774
    %1059 = vmatpush1.bf16.msra.mxu0 %v773
    %1060 = vmatprep.subr.bf16.mxu0 %v782
    %1061 = vmatpush1.bf16.msra.mxu0 %v781
    %1062 = vmatprep.subr.bf16.mxu0 %v790
    %1063 = vmatpush1.bf16.msra.mxu0 %v789
    %1064 = vmatprep.subr.bf16.mxu0 %v798
    %1065 = vmatpush1.bf16.msra.mxu0 %v797
    %1066 = vmatprep.subr.bf16.mxu0 %v806
    %1067 = vmatpush1.bf16.msra.mxu0 %v805
    %1068 = vmatprep.subr.bf16.mxu0 %v814
    %1069 = vmatpush1.bf16.msra.mxu0 %v813
    %1070 = vmatprep.subr.bf16.mxu0 %v822
    %1071 = vmatpush1.bf16.msra.mxu0 %v821
    %1072 = vmatprep.subr.bf16.mxu0 %v830
    %1073 = vmatpush1.bf16.msra.mxu0 %v829
    %1074 = vmatprep.subr.bf16.mxu0 %v838
    %1075 = vmatpush1.bf16.msra.mxu0 %v837
    %1076 = vmatprep.subr.bf16.mxu0 %v846
    %1077 = vmatpush1.bf16.msra.mxu0 %v845
    %1078 = vmatprep.subr.bf16.mxu0 %v854
    %1079 = vmatpush1.bf16.msra.mxu0 %v853
    %1080 = vmatprep.subr.bf16.mxu0 %v862
    %1081 = vmatpush1.bf16.msra.mxu0 %v861
    %1082 = vmatprep.subr.bf16.mxu0 %v870
    %1083 = vmatpush1.bf16.msra.mxu0 %v869
    %1084 = vmatprep.subr.bf16.mxu0 %v878
    %1085 = vmatpush1.bf16.msra.mxu0 %v877
    %1086 = vmatprep.mubr.bf16.mxu0 %v200
    %1087 = vmatmul.mubr.bf16.gmra.mrb[0].mxu0 %v199
    %v1088 = vpop.f32.mrb[0].mxu0
    %v1089 = vadd.f32 %v342, %v1088
    %v1090 = vpop.f32.mrb[0].mxu0
    %v1091 = vadd.f32 %v346, %v1090
    %v1092 = vpop.f32.mrb[0].mxu0
    %v1093 = vadd.f32 %v342, %v1092
    %v1094 = vpop.f32.mrb[0].mxu0
    %v1095 = vadd.f32 %v346, %v1094
    %1096 = vdwg.mxu0
    %1097 = vmatprep.subr.bf16.mxu0 %v760
    %1098 = vmatpush1.bf16.msra.mxu0 %v759
    %1099 = vmatprep.subr.bf16.mxu0 %v768
    %1100 = vmatpush1.bf16.msra.mxu0 %v767
    %1101 = vmatprep.subr.bf16.mxu0 %v776
    %1102 = vmatpush1.bf16.msra.mxu0 %v775
    %1103 = vmatprep.subr.bf16.mxu0 %v784
    %1104 = vmatpush1.bf16.msra.mxu0 %v783
    %1105 = vmatprep.subr.bf16.mxu0 %v792
    %1106 = vmatpush1.bf16.msra.mxu0 %v791
    %1107 = vmatprep.subr.bf16.mxu0 %v800
    %1108 = vmatpush1.bf16.msra.mxu0 %v799
    %1109 = vmatprep.subr.bf16.mxu0 %v808
    %1110 = vmatpush1.bf16.msra.mxu0 %v807
    %1111 = vmatprep.subr.bf16.mxu0 %v816
    %1112 = vmatpush1.bf16.msra.mxu0 %v815
    %1113 = vmatprep.subr.bf16.mxu0 %v824
    %1114 = vmatpush1.bf16.msra.mxu0 %v823
    %1115 = vmatprep.subr.bf16.mxu0 %v832
    %1116 = vmatpush1.bf16.msra.mxu0 %v831
    %1117 = vmatprep.subr.bf16.mxu0 %v840
    %1118 = vmatpush1.bf16.msra.mxu0 %v839
    %1119 = vmatprep.subr.bf16.mxu0 %v848
    %1120 = vmatpush1.bf16.msra.mxu0 %v847
    %1121 = vmatprep.subr.bf16.mxu0 %v856
    %1122 = vmatpush1.bf16.msra.mxu0 %v855
    %1123 = vmatprep.subr.bf16.mxu0 %v864
    %1124 = vmatpush1.bf16.msra.mxu0 %v863
    %1125 = vmatprep.subr.bf16.mxu0 %v872
    %1126 = vmatpush1.bf16.msra.mxu0 %v871
    %1127 = vmatprep.subr.bf16.mxu0 %v880
    %1128 = vmatpush1.bf16.msra.mxu0 %v879
    %1129 = vmatprep.mubr.bf16.mxu0 %v200
    %1130 = vmatmul.mubr.bf16.gmra.mrb[0].mxu0 %v199
    %v1131 = vpop.f32.mrb[0].mxu0
    %v1132 = vadd.f32 %v350, %v1131
    %v1133 = vpop.f32.mrb[0].mxu0
    %v1134 = vadd.f32 %v354, %v1133
    %v1135 = vpop.f32.mrb[0].mxu0
    %v1136 = vadd.f32 %v350, %v1135
    %v1137 = vpop.f32.mrb[0].mxu0
    %v1138 = vadd.f32 %v354, %v1137
    %1139 = vdwg.mxu0
    %1140 = vmatprep.subr.bf16.mxu0 %v762
    %1141 = vmatpush1.bf16.msra.mxu0 %v761
    %1142 = vmatprep.subr.bf16.mxu0 %v770
    %1143 = vmatpush1.bf16.msra.mxu0 %v769
    %1144 = vmatprep.subr.bf16.mxu0 %v778
    %1145 = vmatpush1.bf16.msra.mxu0 %v777
    %1146 = vmatprep.subr.bf16.mxu0 %v786
    %1147 = vmatpush1.bf16.msra.mxu0 %v785
    %1148 = vmatprep.subr.bf16.mxu0 %v794
    %1149 = vmatpush1.bf16.msra.mxu0 %v793
    %1150 = vmatprep.subr.bf16.mxu0 %v802
    %1151 = vmatpush1.bf16.msra.mxu0 %v801
    %1152 = vmatprep.subr.bf16.mxu0 %v810
    %1153 = vmatpush1.bf16.msra.mxu0 %v809
    %1154 = vmatprep.subr.bf16.mxu0 %v818
    %1155 = vmatpush1.bf16.msra.mxu0 %v817
    %1156 = vmatprep.subr.bf16.mxu0 %v826
    %1157 = vmatpush1.bf16.msra.mxu0 %v825
    %1158 = vmatprep.subr.bf16.mxu0 %v834
    %1159 = vmatpush1.bf16.msra.mxu0 %v833
    %1160 = vmatprep.subr.bf16.mxu0 %v842
    %1161 = vmatpush1.bf16.msra.mxu0 %v841
    %1162 = vmatprep.subr.bf16.mxu0 %v850
    %1163 = vmatpush1.bf16.msra.mxu0 %v849
    %1164 = vmatprep.subr.bf16.mxu0 %v858
    %1165 = vmatpush1.bf16.msra.mxu0 %v857
    %1166 = vmatprep.subr.bf16.mxu0 %v866
    %1167 = vmatpush1.bf16.msra.mxu0 %v865
    %1168 = vmatprep.subr.bf16.mxu0 %v874
    %1169 = vmatpush1.bf16.msra.mxu0 %v873
    %1170 = vmatprep.subr.bf16.mxu0 %v882
    %1171 = vmatpush1.bf16.msra.mxu0 %v881
    %1172 = vmatprep.mubr.bf16.mxu0 %v200
    %1173 = vmatmul.mubr.bf16.gmra.mrb[0].mxu0 %v199
    %v1174 = vpop.f32.mrb[0].mxu0
    %v1175 = vadd.f32 %v358, %v1174
    %v1176 = vpop.f32.mrb[0].mxu0
    %v1177 = vadd.f32 %v362, %v1176
    %v1178 = vpop.f32.mrb[0].mxu0
    %v1179 = vadd.f32 %v358, %v1178
    %v1180 = vpop.f32.mrb[0].mxu0
    %v1181 = vadd.f32 %v362, %v1180
    %1182 = vdwg.mxu0
    %vm1183 = vcmp.gt.f32.partialorder %v1046, 0.0
    %vm1184 = vcmp.gt.f32.partialorder %v1048, 0.0
    %vm1185 = vcmp.gt.f32.partialorder %v1089, 0.0
    %vm1186 = vcmp.gt.f32.partialorder %v1091, 0.0
    %vm1187 = vcmp.gt.f32.partialorder %v1132, 0.0
    %vm1188 = vcmp.gt.f32.partialorder %v1134, 0.0
    %vm1189 = vcmp.gt.f32.partialorder %v1175, 0.0
    %vm1190 = vcmp.gt.f32.partialorder %v1177, 0.0
    %vm1191 = vcmp.gt.f32.partialorder %v1050, 0.0
    %vm1192 = vcmp.gt.f32.partialorder %v1052, 0.0
    %vm1193 = vcmp.gt.f32.partialorder %v1093, 0.0
    %vm1194 = vcmp.gt.f32.partialorder %v1095, 0.0
    %vm1195 = vcmp.gt.f32.partialorder %v1136, 0.0
    %vm1196 = vcmp.gt.f32.partialorder %v1138, 0.0
    %vm1197 = vcmp.gt.f32.partialorder %v1179, 0.0
    %vm1198 = vcmp.gt.f32.partialorder %v1181, 0.0
    %v1199 = vmul.f32 %v1046, 0.2
    %v1200 = vmul.f32 %v1048, 0.2
    %v1201 = vmul.f32 %v1089, 0.2
    %v1202 = vmul.f32 %v1091, 0.2
    %v1203 = vmul.f32 %v1132, 0.2
    %v1204 = vmul.f32 %v1134, 0.2
    %v1205 = vmul.f32 %v1175, 0.2
    %v1206 = vmul.f32 %v1177, 0.2
    %v1207 = vmul.f32 %v1050, 0.2
    %v1208 = vmul.f32 %v1052, 0.2
    %v1209 = vmul.f32 %v1093, 0.2
    %v1210 = vmul.f32 %v1095, 0.2
    %v1211 = vmul.f32 %v1136, 0.2
    %v1212 = vmul.f32 %v1138, 0.2
    %v1213 = vmul.f32 %v1179, 0.2
    %v1214 = vmul.f32 %v1181, 0.2
    %v1215 = vsel %vm1183, %v1046, %v1199
    %v1216 = vsel %vm1184, %v1048, %v1200
    %v1217 = vsel %vm1185, %v1089, %v1201
    %v1218 = vsel %vm1186, %v1091, %v1202
    %v1219 = vsel %vm1187, %v1132, %v1203
    %v1220 = vsel %vm1188, %v1134, %v1204
    %v1221 = vsel %vm1189, %v1175, %v1205
    %v1222 = vsel %vm1190, %v1177, %v1206
    %v1223 = vsel %vm1191, %v1050, %v1207
    %v1224 = vsel %vm1192, %v1052, %v1208
    %v1225 = vsel %vm1193, %v1093, %v1209
    %v1226 = vsel %vm1194, %v1095, %v1210
    %v1227 = vsel %vm1195, %v1136, %v1211
    %v1228 = vsel %vm1196, %v1138, %v1212
    %v1229 = vsel %vm1197, %v1179, %v1213
    %v1230 = vsel %vm1198, %v1181, %v1214
    %v1231 = vpack.c.bf16 %v1223, %v1215
    %v1232 = vpack.c.bf16 %v1224, %v1216
    %v1233 = vpack.c.bf16 %v1225, %v1217
    %v1234 = vpack.c.bf16 %v1226, %v1218
    %v1235 = vpack.c.bf16 %v1227, %v1219
    %v1236 = vpack.c.bf16 %v1228, %v1220
    %v1237 = vpack.c.bf16 %v1229, %v1221
    %v1238 = vpack.c.bf16 %v1230, %v1222
    %v1239 = vld [vmem:[%s5] sm:$0xff]
    %v1240 = vld [vmem:[%s5 + $0x8] sm:$0xff]
    %v1241 = vld [vmem:[%s5 + $0x10] sm:$0xff]
    %v1242 = vld [vmem:[%s5 + $0x18] sm:$0xf]
    %v1243 = vld [vmem:[%s5 + $0x1c] sm:$0xff]
    %v1244 = vld [vmem:[%s5 + $0x24] sm:$0xff]
    %v1245 = vld [vmem:[%s5 + $0x2c] sm:$0xff]
    %v1246 = vld [vmem:[%s5 + $0x34] sm:$0xf]
    %v1247 = vld [vmem:[%s5 + $0x38] sm:$0xff]
    %v1248 = vld [vmem:[%s5 + $0x40] sm:$0xff]
    %v1249 = vld [vmem:[%s5 + $0x48] sm:$0xff]
    %v1250 = vld [vmem:[%s5 + $0x50] sm:$0xf]
    %v1251 = vld [vmem:[%s5 + $0x54] sm:$0xff]
    %v1252 = vld [vmem:[%s5 + $0x5c] sm:$0xff]
    %v1253 = vld [vmem:[%s5 + $0x64] sm:$0xff]
    %v1254 = vld [vmem:[%s5 + $0x6c] sm:$0xf]
    %v1255 = vld [vmem:[%s5 + $0x70] sm:$0xff]
    %v1256 = vld [vmem:[%s5 + $0x78] sm:$0xff]
    %v1257 = vld [vmem:[%s5 + $0x80] sm:$0xff]
    %v1258 = vld [vmem:[%s5 + $0x88] sm:$0xf]
    %v1259 = vld [vmem:[%s5 + $0x8c] sm:$0xff]
    %v1260 = vld [vmem:[%s5 + $0x94] sm:$0xff]
    %v1261 = vld [vmem:[%s5 + $0x9c] sm:$0xff]
    %v1262 = vld [vmem:[%s5 + $0xa4] sm:$0xf]
    %v1263 = vld [vmem:[%s5 + $0xa8] sm:$0xff]
    %v1264 = vld [vmem:[%s5 + $0xb0] sm:$0xff]
    %v1265 = vld [vmem:[%s5 + $0xb8] sm:$0xff]
    %v1266 = vld [vmem:[%s5 + $0xc0] sm:$0xf]
    %v1267 = vld [vmem:[%s5 + $0xc4] sm:$0xff]
    %v1268 = vld [vmem:[%s5 + $0xcc] sm:$0xff]
    %v1269 = vld [vmem:[%s5 + $0xd4] sm:$0xff]
    %v1270 = vld [vmem:[%s5 + $0xdc] sm:$0xf]
    %v1271 = vld [vmem:[%s5 + $0xe0] sm:$0xff]
    %v1272 = vld [vmem:[%s5 + $0xe8] sm:$0xff]
    %v1273 = vld [vmem:[%s5 + $0xf0] sm:$0xff]
    %v1274 = vld [vmem:[%s5 + $0xf8] sm:$0xf]
    %v1275 = vld [vmem:[%s5 + $0xfc] sm:$0xff]
    %v1276 = vld [vmem:[%s5 + $0x104] sm:$0xff]
    %v1277 = vld [vmem:[%s5 + $0x10c] sm:$0xff]
    %v1278 = vld [vmem:[%s5 + $0x114] sm:$0xf]
    %v1279 = vld [vmem:[%s5 + $0x118] sm:$0xff]
    %v1280 = vld [vmem:[%s5 + $0x120] sm:$0xff]
    %v1281 = vld [vmem:[%s5 + $0x128] sm:$0xff]
    %v1282 = vld [vmem:[%s5 + $0x130] sm:$0xf]
    %v1283 = vld [vmem:[%s5 + $0x134] sm:$0xff]
    %v1284 = vld [vmem:[%s5 + $0x13c] sm:$0xff]
    %v1285 = vld [vmem:[%s5 + $0x144] sm:$0xff]
    %v1286 = vld [vmem:[%s5 + $0x14c] sm:$0xf]
    %v1287 = vld [vmem:[%s5 + $0x150] sm:$0xff]
    %v1288 = vld [vmem:[%s5 + $0x158] sm:$0xff]
    %v1289 = vld [vmem:[%s5 + $0x160] sm:$0xff]
    %v1290 = vld [vmem:[%s5 + $0x168] sm:$0xf]
    %v1291 = vld [vmem:[%s5 + $0x16c] sm:$0xff]
    %v1292 = vld [vmem:[%s5 + $0x174] sm:$0xff]
    %v1293 = vld [vmem:[%s5 + $0x17c] sm:$0xff]
    %v1294 = vld [vmem:[%s5 + $0x184] sm:$0xf]
    %v1295 = vld [vmem:[%s5 + $0x188] sm:$0xff]
    %v1296 = vld [vmem:[%s5 + $0x190] sm:$0xff]
    %v1297 = vld [vmem:[%s5 + $0x198] sm:$0xff]
    %v1298 = vld [vmem:[%s5 + $0x1a0] sm:$0xf]
    %v1299 = vld [vmem:[%s5 + $0x1a4] sm:$0xff]
    %v1300 = vld [vmem:[%s5 + $0x1ac] sm:$0xff]
    %v1301 = vld [vmem:[%s5 + $0x1b4] sm:$0xff]
    %v1302 = vld [vmem:[%s5 + $0x1bc] sm:$0xf]
    %v1303 = vld [vmem:[%s5 + $0x1c0] sm:$0xff]
    %v1304 = vld [vmem:[%s5 + $0x1c8] sm:$0xff]
    %v1305 = vld [vmem:[%s5 + $0x1d0] sm:$0xff]
    %v1306 = vld [vmem:[%s5 + $0x1d8] sm:$0xf]
    %v1307 = vld [vmem:[%s5 + $0x1dc] sm:$0xff]
    %v1308 = vld [vmem:[%s5 + $0x1e4] sm:$0xff]
    %v1309 = vld [vmem:[%s5 + $0x1ec] sm:$0xff]
    %v1310 = vld [vmem:[%s5 + $0x1f4] sm:$0xf]
    %v1311 = vld [vmem:[%s5 + $0x1f8] sm:$0xff]
    %v1312 = vld [vmem:[%s5 + $0x200] sm:$0xff]
    %v1313 = vld [vmem:[%s5 + $0x208] sm:$0xff]
    %v1314 = vld [vmem:[%s5 + $0x210] sm:$0xf]
    %v1315 = vld [vmem:[%s5 + $0x214] sm:$0xff]
    %v1316 = vld [vmem:[%s5 + $0x21c] sm:$0xff]
    %v1317 = vld [vmem:[%s5 + $0x224] sm:$0xff]
    %v1318 = vld [vmem:[%s5 + $0x22c] sm:$0xf]
    %v1319 = vld [vmem:[%s5 + $0x230] sm:$0xff]
    %v1320 = vld [vmem:[%s5 + $0x238] sm:$0xff]
    %v1321 = vld [vmem:[%s5 + $0x240] sm:$0xff]
    %v1322 = vld [vmem:[%s5 + $0x248] sm:$0xf]
    %v1323 = vld [vmem:[%s5 + $0x24c] sm:$0xff]
    %v1324 = vld [vmem:[%s5 + $0x254] sm:$0xff]
    %v1325 = vld [vmem:[%s5 + $0x25c] sm:$0xff]
    %v1326 = vld [vmem:[%s5 + $0x264] sm:$0xf]
    %v1327 = vld [vmem:[%s5 + $0x268] sm:$0xff]
    %v1328 = vld [vmem:[%s5 + $0x270] sm:$0xff]
    %v1329 = vld [vmem:[%s5 + $0x278] sm:$0xff]
    %v1330 = vld [vmem:[%s5 + $0x280] sm:$0xf]
    %v1331 = vld [vmem:[%s5 + $0x284] sm:$0xff]
    %v1332 = vld [vmem:[%s5 + $0x28c] sm:$0xff]
    %v1333 = vld [vmem:[%s5 + $0x294] sm:$0xff]
    %v1334 = vld [vmem:[%s5 + $0x29c] sm:$0xf]
    %v1335 = vld [vmem:[%s5 + $0x2a0] sm:$0xff]
    %v1336 = vld [vmem:[%s5 + $0x2a8] sm:$0xff]
    %v1337 = vld [vmem:[%s5 + $0x2b0] sm:$0xff]
    %v1338 = vld [vmem:[%s5 + $0x2b8] sm:$0xf]
    %v1339 = vld [vmem:[%s5 + $0x2bc] sm:$0xff]
    %v1340 = vld [vmem:[%s5 + $0x2c4] sm:$0xff]
    %v1341 = vld [vmem:[%s5 + $0x2cc] sm:$0xff]
    %v1342 = vld [vmem:[%s5 + $0x2d4] sm:$0xf]
    %v1343 = vld [vmem:[%s5 + $0x2d8] sm:$0xff]
    %v1344 = vld [vmem:[%s5 + $0x2e0] sm:$0xff]
    %v1345 = vld [vmem:[%s5 + $0x2e8] sm:$0xff]
    %v1346 = vld [vmem:[%s5 + $0x2f0] sm:$0xf]
    %v1347 = vld [vmem:[%s5 + $0x2f4] sm:$0xff]
    %v1348 = vld [vmem:[%s5 + $0x2fc] sm:$0xff]
    %v1349 = vld [vmem:[%s5 + $0x304] sm:$0xff]
    %v1350 = vld [vmem:[%s5 + $0x30c] sm:$0xf]
    %v1351 = vld [vmem:[%s5 + $0x310] sm:$0xff]
    %v1352 = vld [vmem:[%s5 + $0x318] sm:$0xff]
    %v1353 = vld [vmem:[%s5 + $0x320] sm:$0xff]
    %v1354 = vld [vmem:[%s5 + $0x328] sm:$0xf]
    %v1355 = vld [vmem:[%s5 + $0x32c] sm:$0xff]
    %v1356 = vld [vmem:[%s5 + $0x334] sm:$0xff]
    %v1357 = vld [vmem:[%s5 + $0x33c] sm:$0xff]
    %v1358 = vld [vmem:[%s5 + $0x344] sm:$0xf]
    %v1359 = vld [vmem:[%s5 + $0x348] sm:$0xff]
    %v1360 = vld [vmem:[%s5 + $0x350] sm:$0xff]
    %v1361 = vld [vmem:[%s5 + $0x358] sm:$0xff]
    %v1362 = vld [vmem:[%s5 + $0x360] sm:$0xf]
    %v1363 = vld [vmem:[%s5 + $0x364] sm:$0xff]
    %v1364 = vld [vmem:[%s5 + $0x36c] sm:$0xff]
    %v1365 = vld [vmem:[%s5 + $0x374] sm:$0xff]
    %v1366 = vld [vmem:[%s5 + $0x37c] sm:$0xf]
    %v1367 = vld [vmem:[%s5 + $0x380] sm:$0xff]
    %v1368 = vld [vmem:[%s5 + $0x388] sm:$0xff]
    %v1369 = vld [vmem:[%s5 + $0x390] sm:$0xff]
    %v1370 = vld [vmem:[%s5 + $0x398] sm:$0xf]
    %v1371 = vld [vmem:[%s5 + $0x39c] sm:$0xff]
    %v1372 = vld [vmem:[%s5 + $0x3a4] sm:$0xff]
    %v1373 = vld [vmem:[%s5 + $0x3ac] sm:$0xff]
    %v1374 = vld [vmem:[%s5 + $0x3b4] sm:$0xf]
    %v1375 = vld [vmem:[%s5 + $0x3b8] sm:$0xff]
    %v1376 = vld [vmem:[%s5 + $0x3c0] sm:$0xff]
    %v1377 = vld [vmem:[%s5 + $0x3c8] sm:$0xff]
    %v1378 = vld [vmem:[%s5 + $0x3d0] sm:$0xf]
    %v1379 = vld [vmem:[%s5 + $0x3d4] sm:$0xff]
    %v1380 = vld [vmem:[%s5 + $0x3dc] sm:$0xff]
    %v1381 = vld [vmem:[%s5 + $0x3e4] sm:$0xff]
    %v1382 = vld [vmem:[%s5 + $0x3ec] sm:$0xf]
    %v1383 = vld [vmem:[%s5 + $0x3f0] sm:$0xff]
    %v1384 = vld [vmem:[%s5 + $0x3f8] sm:$0xff]
    %v1385 = vld [vmem:[%s5 + $0x400] sm:$0xff]
    %v1386 = vld [vmem:[%s5 + $0x408] sm:$0xf]
    %v1387 = vld [vmem:[%s5 + $0x40c] sm:$0xff]
    %v1388 = vld [vmem:[%s5 + $0x414] sm:$0xff]
    %v1389 = vld [vmem:[%s5 + $0x41c] sm:$0xff]
    %v1390 = vld [vmem:[%s5 + $0x424] sm:$0xf]
    %v1391 = vld [vmem:[%s5 + $0x428] sm:$0xff]
    %v1392 = vld [vmem:[%s5 + $0x430] sm:$0xff]
    %v1393 = vld [vmem:[%s5 + $0x438] sm:$0xff]
    %v1394 = vld [vmem:[%s5 + $0x440] sm:$0xf]
    %v1395 = vld [vmem:[%s5 + $0x444] sm:$0xff]
    %v1396 = vld [vmem:[%s5 + $0x44c] sm:$0xff]
    %v1397 = vld [vmem:[%s5 + $0x454] sm:$0xff]
    %v1398 = vld [vmem:[%s5 + $0x45c] sm:$0xf]
    %v1399 = vld [vmem:[%s5 + $0x460] sm:$0xff]
    %v1400 = vld [vmem:[%s5 + $0x468] sm:$0xff]
    %v1401 = vld [vmem:[%s5 + $0x470] sm:$0xff]
    %v1402 = vld [vmem:[%s5 + $0x478] sm:$0xf]
    %v1403 = vld [vmem:[%s5 + $0x47c] sm:$0xff]
    %v1404 = vld [vmem:[%s5 + $0x484] sm:$0xff]
    %v1405 = vld [vmem:[%s5 + $0x48c] sm:$0xff]
    %v1406 = vld [vmem:[%s5 + $0x494] sm:$0xf]
    %v1407 = vld [vmem:[%s5 + $0x498] sm:$0xff]
    %v1408 = vld [vmem:[%s5 + $0x4a0] sm:$0xff]
    %v1409 = vld [vmem:[%s5 + $0x4a8] sm:$0xff]
    %v1410 = vld [vmem:[%s5 + $0x4b0] sm:$0xf]
    %v1411 = vld [vmem:[%s5 + $0x4b4] sm:$0xff]
    %v1412 = vld [vmem:[%s5 + $0x4bc] sm:$0xff]
    %v1413 = vld [vmem:[%s5 + $0x4c4] sm:$0xff]
    %v1414 = vld [vmem:[%s5 + $0x4cc] sm:$0xf]
    %v1415 = vld [vmem:[%s5 + $0x4d0] sm:$0xff]
    %v1416 = vld [vmem:[%s5 + $0x4d8] sm:$0xff]
    %v1417 = vld [vmem:[%s5 + $0x4e0] sm:$0xff]
    %v1418 = vld [vmem:[%s5 + $0x4e8] sm:$0xf]
    %v1419 = vld [vmem:[%s5 + $0x4ec] sm:$0xff]
    %v1420 = vld [vmem:[%s5 + $0x4f4] sm:$0xff]
    %v1421 = vld [vmem:[%s5 + $0x4fc] sm:$0xff]
    %v1422 = vld [vmem:[%s5 + $0x504] sm:$0xf]
    %v1423 = vld [vmem:[%s5 + $0x508] sm:$0xff]
    %v1424 = vld [vmem:[%s5 + $0x510] sm:$0xff]
    %v1425 = vld [vmem:[%s5 + $0x518] sm:$0xff]
    %v1426 = vld [vmem:[%s5 + $0x520] sm:$0xf]
    %v1427 = vld [vmem:[%s5 + $0x524] sm:$0xff]
    %v1428 = vld [vmem:[%s5 + $0x52c] sm:$0xff]
    %v1429 = vld [vmem:[%s5 + $0x534] sm:$0xff]
    %v1430 = vld [vmem:[%s5 + $0x53c] sm:$0xf]
    %v1431 = vld [vmem:[%s5 + $0x540] sm:$0xff]
    %v1432 = vld [vmem:[%s5 + $0x548] sm:$0xff]
    %v1433 = vld [vmem:[%s5 + $0x550] sm:$0xff]
    %v1434 = vld [vmem:[%s5 + $0x558] sm:$0xf]
    %v1435 = vld [vmem:[%s5 + $0x55c] sm:$0xff]
    %v1436 = vld [vmem:[%s5 + $0x564] sm:$0xff]
    %v1437 = vld [vmem:[%s5 + $0x56c] sm:$0xff]
    %v1438 = vld [vmem:[%s5 + $0x574] sm:$0xf]
    %v1439 = vld [vmem:[%s5 + $0x578] sm:$0xff]
    %v1440 = vld [vmem:[%s5 + $0x580] sm:$0xff]
    %v1441 = vld [vmem:[%s5 + $0x588] sm:$0xff]
    %v1442 = vld [vmem:[%s5 + $0x590] sm:$0xf]
    %v1443 = vld [vmem:[%s5 + $0x594] sm:$0xff]
    %v1444 = vld [vmem:[%s5 + $0x59c] sm:$0xff]
    %v1445 = vld [vmem:[%s5 + $0x5a4] sm:$0xff]
    %v1446 = vld [vmem:[%s5 + $0x5ac] sm:$0xf]
    %v1447 = vld [vmem:[%s5 + $0x5b0] sm:$0xff]
    %v1448 = vld [vmem:[%s5 + $0x5b8] sm:$0xff]
    %v1449 = vld [vmem:[%s5 + $0x5c0] sm:$0xff]
    %v1450 = vld [vmem:[%s5 + $0x5c8] sm:$0xf]
    %v1451 = vld [vmem:[%s5 + $0x5cc] sm:$0xff]
    %v1452 = vld [vmem:[%s5 + $0x5d4] sm:$0xff]
    %v1453 = vld [vmem:[%s5 + $0x5dc] sm:$0xff]
    %v1454 = vld [vmem:[%s5 + $0x5e4] sm:$0xf]
    %v1455 = vld [vmem:[%s5 + $0x5e8] sm:$0xff]
    %v1456 = vld [vmem:[%s5 + $0x5f0] sm:$0xff]
    %v1457 = vld [vmem:[%s5 + $0x5f8] sm:$0xff]
    %v1458 = vld [vmem:[%s5 + $0x600] sm:$0xf]
    %v1459 = vld [vmem:[%s5 + $0x604] sm:$0xff]
    %v1460 = vld [vmem:[%s5 + $0x60c] sm:$0xff]
    %v1461 = vld [vmem:[%s5 + $0x614] sm:$0xff]
    %v1462 = vld [vmem:[%s5 + $0x61c] sm:$0xf]
    %v1463 = vld [vmem:[%s5 + $0x620] sm:$0xff]
    %v1464 = vld [vmem:[%s5 + $0x628] sm:$0xff]
    %v1465 = vld [vmem:[%s5 + $0x630] sm:$0xff]
    %v1466 = vld [vmem:[%s5 + $0x638] sm:$0xf]
    %v1467 = vld [vmem:[%s5 + $0x63c] sm:$0xff]
    %v1468 = vld [vmem:[%s5 + $0x644] sm:$0xff]
    %v1469 = vld [vmem:[%s5 + $0x64c] sm:$0xff]
    %v1470 = vld [vmem:[%s5 + $0x654] sm:$0xf]
    %v1471 = vld [vmem:[%s5 + $0x658] sm:$0xff]
    %v1472 = vld [vmem:[%s5 + $0x660] sm:$0xff]
    %v1473 = vld [vmem:[%s5 + $0x668] sm:$0xff]
    %v1474 = vld [vmem:[%s5 + $0x670] sm:$0xf]
    %v1475 = vld [vmem:[%s5 + $0x674] sm:$0xff]
    %v1476 = vld [vmem:[%s5 + $0x67c] sm:$0xff]
    %v1477 = vld [vmem:[%s5 + $0x684] sm:$0xff]
    %v1478 = vld [vmem:[%s5 + $0x68c] sm:$0xf]
    %v1479 = vld [vmem:[%s5 + $0x690] sm:$0xff]
    %v1480 = vld [vmem:[%s5 + $0x698] sm:$0xff]
    %v1481 = vld [vmem:[%s5 + $0x6a0] sm:$0xff]
    %v1482 = vld [vmem:[%s5 + $0x6a8] sm:$0xf]
    %v1483 = vld [vmem:[%s5 + $0x6ac] sm:$0xff]
    %v1484 = vld [vmem:[%s5 + $0x6b4] sm:$0xff]
    %v1485 = vld [vmem:[%s5 + $0x6bc] sm:$0xff]
    %v1486 = vld [vmem:[%s5 + $0x6c4] sm:$0xf]
    %v1487 = vld [vmem:[%s5 + $0x6c8] sm:$0xff]
    %v1488 = vld [vmem:[%s5 + $0x6d0] sm:$0xff]
    %v1489 = vld [vmem:[%s5 + $0x6d8] sm:$0xff]
    %v1490 = vld [vmem:[%s5 + $0x6e0] sm:$0xf]
    %v1491 = vld [vmem:[%s5 + $0x6e4] sm:$0xff]
    %v1492 = vld [vmem:[%s5 + $0x6ec] sm:$0xff]
    %v1493 = vld [vmem:[%s5 + $0x6f4] sm:$0xff]
    %v1494 = vld [vmem:[%s5 + $0x6fc] sm:$0xf]
    %v1495 = vld [vmem:[%s5 + $0x700] sm:$0xff]
    %v1496 = vld [vmem:[%s5 + $0x708] sm:$0xff]
    %v1497 = vld [vmem:[%s5 + $0x710] sm:$0xff]
    %v1498 = vld [vmem:[%s5 + $0x718] sm:$0xf]
    %v1499 = vld [vmem:[%s5 + $0x71c] sm:$0xff]
    %v1500 = vld [vmem:[%s5 + $0x724] sm:$0xff]
    %v1501 = vld [vmem:[%s5 + $0x72c] sm:$0xff]
    %v1502 = vld [vmem:[%s5 + $0x734] sm:$0xf]
    %v1503 = vld [vmem:[%s5 + $0x738] sm:$0xff]
    %v1504 = vld [vmem:[%s5 + $0x740] sm:$0xff]
    %v1505 = vld [vmem:[%s5 + $0x748] sm:$0xff]
    %v1506 = vld [vmem:[%s5 + $0x750] sm:$0xf]
    %v1507 = vld [vmem:[%s5 + $0x754] sm:$0xff]
    %v1508 = vld [vmem:[%s5 + $0x75c] sm:$0xff]
    %v1509 = vld [vmem:[%s5 + $0x764] sm:$0xff]
    %v1510 = vld [vmem:[%s5 + $0x76c] sm:$0xf]
    %v1511 = vld [vmem:[%s5 + $0x770] sm:$0xff]
    %v1512 = vld [vmem:[%s5 + $0x778] sm:$0xff]
    %v1513 = vld [vmem:[%s5 + $0x780] sm:$0xff]
    %v1514 = vld [vmem:[%s5 + $0x788] sm:$0xf]
    %v1515 = vld [vmem:[%s5 + $0x78c] sm:$0xff]
    %v1516 = vld [vmem:[%s5 + $0x794] sm:$0xff]
    %v1517 = vld [vmem:[%s5 + $0x79c] sm:$0xff]
    %v1518 = vld [vmem:[%s5 + $0x7a4] sm:$0xf]
    %v1519 = vld [vmem:[%s5 + $0x7a8] sm:$0xff]
    %v1520 = vld [vmem:[%s5 + $0x7b0] sm:$0xff]
    %v1521 = vld [vmem:[%s5 + $0x7b8] sm:$0xff]
    %v1522 = vld [vmem:[%s5 + $0x7c0] sm:$0xf]
    %v1523 = vld [vmem:[%s5 + $0x7c4] sm:$0xff]
    %v1524 = vld [vmem:[%s5 + $0x7cc] sm:$0xff]
    %v1525 = vld [vmem:[%s5 + $0x7d4] sm:$0xff]
    %v1526 = vld [vmem:[%s5 + $0x7dc] sm:$0xf]
    %v1527 = vld [vmem:[%s5 + $0x7e0] sm:$0xff]
    %v1528 = vld [vmem:[%s5 + $0x7e8] sm:$0xff]
    %v1529 = vld [vmem:[%s5 + $0x7f0] sm:$0xff]
    %v1530 = vld [vmem:[%s5 + $0x7f8] sm:$0xf]
    %v1531 = vld [vmem:[%s5 + $0x7fc] sm:$0xff]
    %v1532 = vld [vmem:[%s5 + $0x804] sm:$0xff]
    %v1533 = vld [vmem:[%s5 + $0x80c] sm:$0xff]
    %v1534 = vld [vmem:[%s5 + $0x814] sm:$0xf]
    %v1535 = vld [vmem:[%s5 + $0x818] sm:$0xff]
    %v1536 = vld [vmem:[%s5 + $0x820] sm:$0xff]
    %v1537 = vld [vmem:[%s5 + $0x828] sm:$0xff]
    %v1538 = vld [vmem:[%s5 + $0x830] sm:$0xf]
    %v1539 = vld [vmem:[%s5 + $0x834] sm:$0xff]
    %v1540 = vld [vmem:[%s5 + $0x83c] sm:$0xff]
    %v1541 = vld [vmem:[%s5 + $0x844] sm:$0xff]
    %v1542 = vld [vmem:[%s5 + $0x84c] sm:$0xf]
    %v1543 = vld [vmem:[%s5 + $0x850] sm:$0xff]
    %v1544 = vld [vmem:[%s5 + $0x858] sm:$0xff]
    %v1545 = vld [vmem:[%s5 + $0x860] sm:$0xff]
    %v1546 = vld [vmem:[%s5 + $0x868] sm:$0xf]
    %v1547 = vld [vmem:[%s5 + $0x86c] sm:$0xff]
    %v1548 = vld [vmem:[%s5 + $0x874] sm:$0xff]
    %v1549 = vld [vmem:[%s5 + $0x87c] sm:$0xff]
    %v1550 = vld [vmem:[%s5 + $0x884] sm:$0xf]
    %v1551 = vld [vmem:[%s5 + $0x888] sm:$0xff]
    %v1552 = vld [vmem:[%s5 + $0x890] sm:$0xff]
    %v1553 = vld [vmem:[%s5 + $0x898] sm:$0xff]
    %v1554 = vld [vmem:[%s5 + $0x8a0] sm:$0xf]
    %v1555 = vld [vmem:[%s5 + $0x8a4] sm:$0xff]
    %v1556 = vld [vmem:[%s5 + $0x8ac] sm:$0xff]
    %v1557 = vld [vmem:[%s5 + $0x8b4] sm:$0xff]
    %v1558 = vld [vmem:[%s5 + $0x8bc] sm:$0xf]
    %v1559 = vld [vmem:[%s5 + $0x8c0] sm:$0xff]
    %v1560 = vld [vmem:[%s5 + $0x8c8] sm:$0xff]
    %v1561 = vld [vmem:[%s5 + $0x8d0] sm:$0xff]
    %v1562 = vld [vmem:[%s5 + $0x8d8] sm:$0xf]
    %v1563 = vld [vmem:[%s5 + $0x8dc] sm:$0xff]
    %v1564 = vld [vmem:[%s5 + $0x8e4] sm:$0xff]
    %v1565 = vld [vmem:[%s5 + $0x8ec] sm:$0xff]
    %v1566 = vld [vmem:[%s5 + $0x8f4] sm:$0xf]
    %v1567 = vld [vmem:[%s5 + $0x8f8] sm:$0xff]
    %v1568 = vld [vmem:[%s5 + $0x900] sm:$0xff]
    %v1569 = vld [vmem:[%s5 + $0x908] sm:$0xff]
    %v1570 = vld [vmem:[%s5 + $0x910] sm:$0xf]
    %v1571 = vld [vmem:[%s5 + $0x914] sm:$0xff]
    %v1572 = vld [vmem:[%s5 + $0x91c] sm:$0xff]
    %v1573 = vld [vmem:[%s5 + $0x924] sm:$0xff]
    %v1574 = vld [vmem:[%s5 + $0x92c] sm:$0xf]
    %v1575 = vld [vmem:[%s5 + $0x930] sm:$0xff]
    %v1576 = vld [vmem:[%s5 + $0x938] sm:$0xff]
    %v1577 = vld [vmem:[%s5 + $0x940] sm:$0xff]
    %v1578 = vld [vmem:[%s5 + $0x948] sm:$0xf]
    %v1579 = vld [vmem:[%s5 + $0x94c] sm:$0xff]
    %v1580 = vld [vmem:[%s5 + $0x954] sm:$0xff]
    %v1581 = vld [vmem:[%s5 + $0x95c] sm:$0xff]
    %v1582 = vld [vmem:[%s5 + $0x964] sm:$0xf]
    %v1583 = vld [vmem:[%s5 + $0x968] sm:$0xff]
    %v1584 = vld [vmem:[%s5 + $0x970] sm:$0xff]
    %v1585 = vld [vmem:[%s5 + $0x978] sm:$0xff]
    %v1586 = vld [vmem:[%s5 + $0x980] sm:$0xf]
    %v1587 = vld [vmem:[%s5 + $0x984] sm:$0xff]
    %v1588 = vld [vmem:[%s5 + $0x98c] sm:$0xff]
    %v1589 = vld [vmem:[%s5 + $0x994] sm:$0xff]
    %v1590 = vld [vmem:[%s5 + $0x99c] sm:$0xf]
    %v1591 = vld [vmem:[%s5 + $0x9a0] sm:$0xff]
    %v1592 = vld [vmem:[%s5 + $0x9a8] sm:$0xff]
    %v1593 = vld [vmem:[%s5 + $0x9b0] sm:$0xff]
    %v1594 = vld [vmem:[%s5 + $0x9b8] sm:$0xf]
    %v1595 = vld [vmem:[%s5 + $0x9bc] sm:$0xff]
    %v1596 = vld [vmem:[%s5 + $0x9c4] sm:$0xff]
    %v1597 = vld [vmem:[%s5 + $0x9cc] sm:$0xff]
    %v1598 = vld [vmem:[%s5 + $0x9d4] sm:$0xf]
    %v1599 = vld [vmem:[%s5 + $0x9d8] sm:$0xff]
    %v1600 = vld [vmem:[%s5 + $0x9e0] sm:$0xff]
    %v1601 = vld [vmem:[%s5 + $0x9e8] sm:$0xff]
    %v1602 = vld [vmem:[%s5 + $0x9f0] sm:$0xf]
    %v1603 = vld [vmem:[%s5 + $0x9f4] sm:$0xff]
    %v1604 = vld [vmem:[%s5 + $0x9fc] sm:$0xff]
    %v1605 = vld [vmem:[%s5 + $0xa04] sm:$0xff]
    %v1606 = vld [vmem:[%s5 + $0xa0c] sm:$0xf]
    %v1607 = vld [vmem:[%s5 + $0xa10] sm:$0xff]
    %v1608 = vld [vmem:[%s5 + $0xa18] sm:$0xff]
    %v1609 = vld [vmem:[%s5 + $0xa20] sm:$0xff]
    %v1610 = vld [vmem:[%s5 + $0xa28] sm:$0xf]
    %v1611 = vld [vmem:[%s5 + $0xa2c] sm:$0xff]
    %v1612 = vld [vmem:[%s5 + $0xa34] sm:$0xff]
    %v1613 = vld [vmem:[%s5 + $0xa3c] sm:$0xff]
    %v1614 = vld [vmem:[%s5 + $0xa44] sm:$0xf]
    %v1615 = vld [vmem:[%s5 + $0xa48] sm:$0xff]
    %v1616 = vld [vmem:[%s5 + $0xa50] sm:$0xff]
    %v1617 = vld [vmem:[%s5 + $0xa58] sm:$0xff]
    %v1618 = vld [vmem:[%s5 + $0xa60] sm:$0xf]
    %v1619 = vld [vmem:[%s5 + $0xa64] sm:$0xff]
    %v1620 = vld [vmem:[%s5 + $0xa6c] sm:$0xff]
    %v1621 = vld [vmem:[%s5 + $0xa74] sm:$0xff]
    %v1622 = vld [vmem:[%s5 + $0xa7c] sm:$0xf]
    %v1623 = vld [vmem:[%s5 + $0xa80] sm:$0xff]
    %v1624 = vld [vmem:[%s5 + $0xa88] sm:$0xff]
    %v1625 = vld [vmem:[%s5 + $0xa90] sm:$0xff]
    %v1626 = vld [vmem:[%s5 + $0xa98] sm:$0xf]
    %v1627 = vld [vmem:[%s5 + $0xa9c] sm:$0xff]
    %v1628 = vld [vmem:[%s5 + $0xaa4] sm:$0xff]
    %v1629 = vld [vmem:[%s5 + $0xaac] sm:$0xff]
    %v1630 = vld [vmem:[%s5 + $0xab4] sm:$0xf]
    %v1631 = vld [vmem:[%s5 + $0xab8] sm:$0xff]
    %v1632 = vld [vmem:[%s5 + $0xac0] sm:$0xff]
    %v1633 = vld [vmem:[%s5 + $0xac8] sm:$0xff]
    %v1634 = vld [vmem:[%s5 + $0xad0] sm:$0xf]
    %v1635 = vld [vmem:[%s5 + $0xad4] sm:$0xff]
    %v1636 = vld [vmem:[%s5 + $0xadc] sm:$0xff]
    %v1637 = vld [vmem:[%s5 + $0xae4] sm:$0xff]
    %v1638 = vld [vmem:[%s5 + $0xaec] sm:$0xf]
    %v1639 = vld [vmem:[%s5 + $0xaf0] sm:$0xff]
    %v1640 = vld [vmem:[%s5 + $0xaf8] sm:$0xff]
    %v1641 = vld [vmem:[%s5 + $0xb00] sm:$0xff]
    %v1642 = vld [vmem:[%s5 + $0xb08] sm:$0xf]
    %v1643 = vld [vmem:[%s5 + $0xb0c] sm:$0xff]
    %v1644 = vld [vmem:[%s5 + $0xb14] sm:$0xff]
    %v1645 = vld [vmem:[%s5 + $0xb1c] sm:$0xff]
    %v1646 = vld [vmem:[%s5 + $0xb24] sm:$0xf]
    %v1647 = vld [vmem:[%s5 + $0xb28] sm:$0xff]
    %v1648 = vld [vmem:[%s5 + $0xb30] sm:$0xff]
    %v1649 = vld [vmem:[%s5 + $0xb38] sm:$0xff]
    %v1650 = vld [vmem:[%s5 + $0xb40] sm:$0xf]
    %v1651 = vld [vmem:[%s5 + $0xb44] sm:$0xff]
    %v1652 = vld [vmem:[%s5 + $0xb4c] sm:$0xff]
    %v1653 = vld [vmem:[%s5 + $0xb54] sm:$0xff]
    %v1654 = vld [vmem:[%s5 + $0xb5c] sm:$0xf]
    %v1655 = vld [vmem:[%s5 + $0xb60] sm:$0xff]
    %v1656 = vld [vmem:[%s5 + $0xb68] sm:$0xff]
    %v1657 = vld [vmem:[%s5 + $0xb70] sm:$0xff]
    %v1658 = vld [vmem:[%s5 + $0xb78] sm:$0xf]
    %v1659 = vld [vmem:[%s5 + $0xb7c] sm:$0xff]
    %v1660 = vld [vmem:[%s5 + $0xb84] sm:$0xff]
    %v1661 = vld [vmem:[%s5 + $0xb8c] sm:$0xff]
    %v1662 = vld [vmem:[%s5 + $0xb94] sm:$0xf]
    %v1663 = vld [vmem:[%s5 + $0xb98] sm:$0xff]
    %v1664 = vld [vmem:[%s5 + $0xba0] sm:$0xff]
    %v1665 = vld [vmem:[%s5 + $0xba8] sm:$0xff]
    %v1666 = vld [vmem:[%s5 + $0xbb0] sm:$0xf]
    %v1667 = vld [vmem:[%s5 + $0xbb4] sm:$0xff]
    %v1668 = vld [vmem:[%s5 + $0xbbc] sm:$0xff]
    %v1669 = vld [vmem:[%s5 + $0xbc4] sm:$0xff]
    %v1670 = vld [vmem:[%s5 + $0xbcc] sm:$0xf]
    %v1671 = vld [vmem:[%s5 + $0xbd0] sm:$0xff]
    %v1672 = vld [vmem:[%s5 + $0xbd8] sm:$0xff]
    %v1673 = vld [vmem:[%s5 + $0xbe0] sm:$0xff]
    %v1674 = vld [vmem:[%s5 + $0xbe8] sm:$0xf]
    %v1675 = vld [vmem:[%s5 + $0xbec] sm:$0xff]
    %v1676 = vld [vmem:[%s5 + $0xbf4] sm:$0xff]
    %v1677 = vld [vmem:[%s5 + $0xbfc] sm:$0xff]
    %v1678 = vld [vmem:[%s5 + $0xc04] sm:$0xf]
    %v1679 = vld [vmem:[%s5 + $0xc08] sm:$0xff]
    %v1680 = vld [vmem:[%s5 + $0xc10] sm:$0xff]
    %v1681 = vld [vmem:[%s5 + $0xc18] sm:$0xff]
    %v1682 = vld [vmem:[%s5 + $0xc20] sm:$0xf]
    %v1683 = vld [vmem:[%s5 + $0xc24] sm:$0xff]
    %v1684 = vld [vmem:[%s5 + $0xc2c] sm:$0xff]
    %v1685 = vld [vmem:[%s5 + $0xc34] sm:$0xff]
    %v1686 = vld [vmem:[%s5 + $0xc3c] sm:$0xf]
    %v1687 = vld [vmem:[%s5 + $0xc40] sm:$0xff]
    %v1688 = vld [vmem:[%s5 + $0xc48] sm:$0xff]
    %v1689 = vld [vmem:[%s5 + $0xc50] sm:$0xff]
    %v1690 = vld [vmem:[%s5 + $0xc58] sm:$0xf]
    %v1691 = vld [vmem:[%s5 + $0xc5c] sm:$0xff]
    %v1692 = vld [vmem:[%s5 + $0xc64] sm:$0xff]
    %v1693 = vld [vmem:[%s5 + $0xc6c] sm:$0xff]
    %v1694 = vld [vmem:[%s5 + $0xc74] sm:$0xf]
    %v1695 = vld [vmem:[%s5 + $0xc78] sm:$0xff]
    %v1696 = vld [vmem:[%s5 + $0xc80] sm:$0xff]
    %v1697 = vld [vmem:[%s5 + $0xc88] sm:$0xff]
    %v1698 = vld [vmem:[%s5 + $0xc90] sm:$0xf]
    %v1699 = vld [vmem:[%s5 + $0xc94] sm:$0xff]
    %v1700 = vld [vmem:[%s5 + $0xc9c] sm:$0xff]
    %v1701 = vld [vmem:[%s5 + $0xca4] sm:$0xff]
    %v1702 = vld [vmem:[%s5 + $0xcac] sm:$0xf]
    %v1703 = vld [vmem:[%s5 + $0xcb0] sm:$0xff]
    %v1704 = vld [vmem:[%s5 + $0xcb8] sm:$0xff]
    %v1705 = vld [vmem:[%s5 + $0xcc0] sm:$0xff]
    %v1706 = vld [vmem:[%s5 + $0xcc8] sm:$0xf]
    %v1707 = vld [vmem:[%s5 + $0xccc] sm:$0xff]
    %v1708 = vld [vmem:[%s5 + $0xcd4] sm:$0xff]
    %v1709 = vld [vmem:[%s5 + $0xcdc] sm:$0xff]
    %v1710 = vld [vmem:[%s5 + $0xce4] sm:$0xf]
    %v1711 = vld [vmem:[%s5 + $0xce8] sm:$0xff]
    %v1712 = vld [vmem:[%s5 + $0xcf0] sm:$0xff]
    %v1713 = vld [vmem:[%s5 + $0xcf8] sm:$0xff]
    %v1714 = vld [vmem:[%s5 + $0xd00] sm:$0xf]
    %v1715 = vld [vmem:[%s5 + $0xd04] sm:$0xff]
    %v1716 = vld [vmem:[%s5 + $0xd0c] sm:$0xff]
    %v1717 = vld [vmem:[%s5 + $0xd14] sm:$0xff]
    %v1718 = vld [vmem:[%s5 + $0xd1c] sm:$0xf]
    %v1719 = vld [vmem:[%s5 + $0xd20] sm:$0xff]
    %v1720 = vld [vmem:[%s5 + $0xd28] sm:$0xff]
    %v1721 = vld [vmem:[%s5 + $0xd30] sm:$0xff]
    %v1722 = vld [vmem:[%s5 + $0xd38] sm:$0xf]
    %v1723 = vld [vmem:[%s5 + $0xd3c] sm:$0xff]
    %v1724 = vld [vmem:[%s5 + $0xd44] sm:$0xff]
    %v1725 = vld [vmem:[%s5 + $0xd4c] sm:$0xff]
    %v1726 = vld [vmem:[%s5 + $0xd54] sm:$0xf]
    %v1727 = vld [vmem:[%s5 + $0xd58] sm:$0xff]
    %v1728 = vld [vmem:[%s5 + $0xd60] sm:$0xff]
    %v1729 = vld [vmem:[%s5 + $0xd68] sm:$0xff]
    %v1730 = vld [vmem:[%s5 + $0xd70] sm:$0xf]
    %v1731 = vld [vmem:[%s5 + $0xd74] sm:$0xff]
    %v1732 = vld [vmem:[%s5 + $0xd7c] sm:$0xff]
    %v1733 = vld [vmem:[%s5 + $0xd84] sm:$0xff]
    %v1734 = vld [vmem:[%s5 + $0xd8c] sm:$0xf]
    %v1735 = vld [vmem:[%s5 + $0xd90] sm:$0xff]
    %v1736 = vld [vmem:[%s5 + $0xd98] sm:$0xff]
    %v1737 = vld [vmem:[%s5 + $0xda0] sm:$0xff]
    %v1738 = vld [vmem:[%s5 + $0xda8] sm:$0xf]
    %v1739 = vld [vmem:[%s5 + $0xdac] sm:$0xff]
    %v1740 = vld [vmem:[%s5 + $0xdb4] sm:$0xff]
    %v1741 = vld [vmem:[%s5 + $0xdbc] sm:$0xff]
    %v1742 = vld [vmem:[%s5 + $0xdc4] sm:$0xf]
    %v1743 = vld [vmem:[%s5 + $0xdc8] sm:$0xff]
    %v1744 = vld [vmem:[%s5 + $0xdd0] sm:$0xff]
    %v1745 = vld [vmem:[%s5 + $0xdd8] sm:$0xff]
    %v1746 = vld [vmem:[%s5 + $0xde0] sm:$0xf]
    %v1747 = vld [vmem:[%s5 + $0xde4] sm:$0xff]
    %v1748 = vld [vmem:[%s5 + $0xdec] sm:$0xff]
    %v1749 = vld [vmem:[%s5 + $0xdf4] sm:$0xff]
    %v1750 = vld [vmem:[%s5 + $0xdfc] sm:$0xf]
    %v1751 = vld [vmem:[%s6] sm:$0x7f]
    %v1753 = vlaneseq
    %v1754 = vshrl.u32 %v1753, 7
    %v1755 = vsub.s32 0, %v1754
    %v1756 = vrot.slane %v1751, %v1755
    %v1757 = vlaneseq
    %v1758 = vshrl.u32 %v1757, 7
    %v1759 = vsub.s32 1, %v1758
    %v1760 = vrot.slane %v1751, %v1759
    %v1761 = vlaneseq
    %v1762 = vshrl.u32 %v1761, 7
    %v1763 = vsub.s32 2, %v1762
    %v1764 = vrot.slane %v1751, %v1763
    %v1765 = vlaneseq
    %v1766 = vshrl.u32 %v1765, 7
    %v1767 = vsub.s32 3, %v1766
    %v1768 = vrot.slane %v1751, %v1767
    %v1769 = vlaneseq
    %v1770 = vshrl.u32 %v1769, 7
    %v1771 = vsub.s32 4, %v1770
    %v1772 = vrot.slane %v1751, %v1771
    %v1773 = vlaneseq
    %v1774 = vshrl.u32 %v1773, 7
    %v1775 = vsub.s32 5, %v1774
    %v1776 = vrot.slane %v1751, %v1775
    %v1777 = vlaneseq
    %v1778 = vshrl.u32 %v1777, 7
    %v1779 = vsub.s32 6, %v1778
    %v1780 = vrot.slane %v1751, %v1779
    %v2300 = vunpack.c.l.b16 %v1239
    %v2301 = vunpack.c.h.b16 %v1239
    %v2302 = vunpack.c.l.b16 %v1240
    %v2303 = vunpack.c.h.b16 %v1240
    %v2304 = vunpack.c.l.b16 %v1241
    %v2305 = vunpack.c.h.b16 %v1241
    %v2306 = vunpack.c.l.b16 %v1242
    %v2307 = vunpack.c.l.b16 %v1243
    %v2308 = vunpack.c.h.b16 %v1243
    %v2309 = vunpack.c.l.b16 %v1244
    %v2310 = vunpack.c.h.b16 %v1244
    %v2311 = vunpack.c.l.b16 %v1245
    %v2312 = vunpack.c.h.b16 %v1245
    %v2313 = vunpack.c.l.b16 %v1246
    %v2314 = vunpack.c.l.b16 %v1247
    %v2315 = vunpack.c.h.b16 %v1247
    %v2316 = vunpack.c.l.b16 %v1248
    %v2317 = vunpack.c.h.b16 %v1248
    %v2318 = vunpack.c.l.b16 %v1249
    %v2319 = vunpack.c.h.b16 %v1249
    %v2320 = vunpack.c.l.b16 %v1250
    %v2321 = vunpack.c.l.b16 %v1251
    %v2322 = vunpack.c.h.b16 %v1251
    %v2323 = vunpack.c.l.b16 %v1252
    %v2324 = vunpack.c.h.b16 %v1252
    %v2325 = vunpack.c.l.b16 %v1253
    %v2326 = vunpack.c.h.b16 %v1253
    %v2327 = vunpack.c.l.b16 %v1254
    %v2328 = vunpack.c.l.b16 %v1255
    %v2329 = vunpack.c.h.b16 %v1255
    %v2330 = vunpack.c.l.b16 %v1256
    %v2331 = vunpack.c.h.b16 %v1256
    %v2332 = vunpack.c.l.b16 %v1257
    %v2333 = vunpack.c.h.b16 %v1257
    %v2334 = vunpack.c.l.b16 %v1258
    %v2335 = vunpack.c.l.b16 %v1259
    %v2336 = vunpack.c.h.b16 %v1259
    %v2337 = vunpack.c.l.b16 %v1260
    %v2338 = vunpack.c.h.b16 %v1260
    %v2339 = vunpack.c.l.b16 %v1261
    %v2340 = vunpack.c.h.b16 %v1261
    %v2341 = vunpack.c.l.b16 %v1262
    %v2342 = vunpack.c.l.b16 %v1263
    %v2343 = vunpack.c.h.b16 %v1263
    %v2344 = vunpack.c.l.b16 %v1264
    %v2345 = vunpack.c.h.b16 %v1264
    %v2346 = vunpack.c.l.b16 %v1265
    %v2347 = vunpack.c.h.b16 %v1265
    %v2348 = vunpack.c.l.b16 %v1266
    %v2349 = vunpack.c.l.b16 %v1267
    %v2350 = vunpack.c.h.b16 %v1267
    %v2351 = vunpack.c.l.b16 %v1268
    %v2352 = vunpack.c.h.b16 %v1268
    %v2353 = vunpack.c.l.b16 %v1269
    %v2354 = vunpack.c.h.b16 %v1269
    %v2355 = vunpack.c.l.b16 %v1270
    %v2356 = vunpack.c.l.b16 %v1271
    %v2357 = vunpack.c.h.b16 %v1271
    %v2358 = vunpack.c.l.b16 %v1272
    %v2359 = vunpack.c.h.b16 %v1272
    %v2360 = vunpack.c.l.b16 %v1273
    %v2361 = vunpack.c.h.b16 %v1273
    %v2362 = vunpack.c.l.b16 %v1274
    %v2363 = vunpack.c.l.b16 %v1275
    %v2364 = vunpack.c.h.b16 %v1275
    %v2365 = vunpack.c.l.b16 %v1276
    %v2366 = vunpack.c.h.b16 %v1276
    %v2367 = vunpack.c.l.b16 %v1277
    %v2368 = vunpack.c.h.b16 %v1277
    %v2369 = vunpack.c.l.b16 %v1278
    %v2370 = vunpack.c.l.b16 %v1279
    %v2371 = vunpack.c.h.b16 %v1279
    %v2372 = vunpack.c.l.b16 %v1280
    %v2373 = vunpack.c.h.b16 %v1280
    %v2374 = vunpack.c.l.b16 %v1281
    %v2375 = vunpack.c.h.b16 %v1281
    %v2376 = vunpack.c.l.b16 %v1282
    %v2377 = vunpack.c.l.b16 %v1283
    %v2378 = vunpack.c.h.b16 %v1283
    %v2379 = vunpack.c.l.b16 %v1284
    %v2380 = vunpack.c.h.b16 %v1284
    %v2381 = vunpack.c.l.b16 %v1285
    %v2382 = vunpack.c.h.b16 %v1285
    %v2383 = vunpack.c.l.b16 %v1286
    %v2384 = vunpack.c.l.b16 %v1287
    %v2385 = vunpack.c.h.b16 %v1287
    %v2386 = vunpack.c.l.b16 %v1288
    %v2387 = vunpack.c.h.b16 %v1288
    %v2388 = vunpack.c.l.b16 %v1289
    %v2389 = vunpack.c.h.b16 %v1289
    %v2390 = vunpack.c.l.b16 %v1290
    %v2391 = vunpack.c.l.b16 %v1291
    %v2392 = vunpack.c.h.b16 %v1291
    %v2393 = vunpack.c.l.b16 %v1292
    %v2394 = vunpack.c.h.b16 %v1292
    %v2395 = vunpack.c.l.b16 %v1293
    %v2396 = vunpack.c.h.b16 %v1293
    %v2397 = vunpack.c.l.b16 %v1294
    %v2398 = vunpack.c.l.b16 %v1295
    %v2399 = vunpack.c.h.b16 %v1295
    %v2400 = vunpack.c.l.b16 %v1296
    %v2401 = vunpack.c.h.b16 %v1296
    %v2402 = vunpack.c.l.b16 %v1297
    %v2403 = vunpack.c.h.b16 %v1297
    %v2404 = vunpack.c.l.b16 %v1298
    %v2405 = vunpack.c.l.b16 %v1299
    %v2406 = vunpack.c.h.b16 %v1299
    %v2407 = vunpack.c.l.b16 %v1300
    %v2408 = vunpack.c.h.b16 %v1300
    %v2409 = vunpack.c.l.b16 %v1301
    %v2410 = vunpack.c.h.b16 %v1301
    %v2411 = vunpack.c.l.b16 %v1302
    %v2412 = vunpack.c.l.b16 %v1303
    %v2413 = vunpack.c.h.b16 %v1303
    %v2414 = vunpack.c.l.b16 %v1304
    %v2415 = vunpack.c.h.b16 %v1304
    %v2416 = vunpack.c.l.b16 %v1305
    %v2417 = vunpack.c.h.b16 %v1305
    %v2418 = vunpack.c.l.b16 %v1306
    %v2419 = vunpack.c.l.b16 %v1307
    %v2420 = vunpack.c.h.b16 %v1307
    %v2421 = vunpack.c.l.b16 %v1308
    %v2422 = vunpack.c.h.b16 %v1308
    %v2423 = vunpack.c.l.b16 %v1309
    %v2424 = vunpack.c.h.b16 %v1309
    %v2425 = vunpack.c.l.b16 %v1310
    %v2426 = vunpack.c.l.b16 %v1311
    %v2427 = vunpack.c.h.b16 %v1311
    %v2428 = vunpack.c.l.b16 %v1312
    %v2429 = vunpack.c.h.b16 %v1312
    %v2430 = vunpack.c.l.b16 %v1313
    %v2431 = vunpack.c.h.b16 %v1313
    %v2432 = vunpack.c.l.b16 %v1314
    %v2433 = vunpack.c.l.b16 %v1315
    %v2434 = vunpack.c.h.b16 %v1315
    %v2435 = vunpack.c.l.b16 %v1316
    %v2436 = vunpack.c.h.b16 %v1316
    %v2437 = vunpack.c.l.b16 %v1317
    %v2438 = vunpack.c.h.b16 %v1317
    %v2439 = vunpack.c.l.b16 %v1318
    %v2440 = vunpack.c.l.b16 %v1319
    %v2441 = vunpack.c.h.b16 %v1319
    %v2442 = vunpack.c.l.b16 %v1320
    %v2443 = vunpack.c.h.b16 %v1320
    %v2444 = vunpack.c.l.b16 %v1321
    %v2445 = vunpack.c.h.b16 %v1321
    %v2446 = vunpack.c.l.b16 %v1322
    %v2447 = vunpack.c.l.b16 %v1323
    %v2448 = vunpack.c.h.b16 %v1323
    %v2449 = vunpack.c.l.b16 %v1324
    %v2450 = vunpack.c.h.b16 %v1324
    %v2451 = vunpack.c.l.b16 %v1325
    %v2452 = vunpack.c.h.b16 %v1325
    %v2453 = vunpack.c.l.b16 %v1326
    %v2454 = vunpack.c.l.b16 %v1327
    %v2455 = vunpack.c.h.b16 %v1327
    %v2456 = vunpack.c.l.b16 %v1328
    %v2457 = vunpack.c.h.b16 %v1328
    %v2458 = vunpack.c.l.b16 %v1329
    %v2459 = vunpack.c.h.b16 %v1329
    %v2460 = vunpack.c.l.b16 %v1330
    %v2461 = vunpack.c.l.b16 %v1331
    %v2462 = vunpack.c.h.b16 %v1331
    %v2463 = vunpack.c.l.b16 %v1332
    %v2464 = vunpack.c.h.b16 %v1332
    %v2465 = vunpack.c.l.b16 %v1333
    %v2466 = vunpack.c.h.b16 %v1333
    %v2467 = vunpack.c.l.b16 %v1334
    %v2468 = vunpack.c.l.b16 %v1335
    %v2469 = vunpack.c.h.b16 %v1335
    %v2470 = vunpack.c.l.b16 %v1336
    %v2471 = vunpack.c.h.b16 %v1336
    %v2472 = vunpack.c.l.b16 %v1337
    %v2473 = vunpack.c.h.b16 %v1337
    %v2474 = vunpack.c.l.b16 %v1338
    %v2475 = vunpack.c.l.b16 %v1339
    %v2476 = vunpack.c.h.b16 %v1339
    %v2477 = vunpack.c.l.b16 %v1340
    %v2478 = vunpack.c.h.b16 %v1340
    %v2479 = vunpack.c.l.b16 %v1341
    %v2480 = vunpack.c.h.b16 %v1341
    %v2481 = vunpack.c.l.b16 %v1342
    %v2482 = vunpack.c.l.b16 %v1343
    %v2483 = vunpack.c.h.b16 %v1343
    %v2484 = vunpack.c.l.b16 %v1344
    %v2485 = vunpack.c.h.b16 %v1344
    %v2486 = vunpack.c.l.b16 %v1345
    %v2487 = vunpack.c.h.b16 %v1345
    %v2488 = vunpack.c.l.b16 %v1346
    %v2489 = vunpack.c.l.b16 %v1347
    %v2490 = vunpack.c.h.b16 %v1347
    %v2491 = vunpack.c.l.b16 %v1348
    %v2492 = vunpack.c.h.b16 %v1348
    %v2493 = vunpack.c.l.b16 %v1349
    %v2494 = vunpack.c.h.b16 %v1349
    %v2495 = vunpack.c.l.b16 %v1350
    %v2496 = vunpack.c.l.b16 %v1351
    %v2497 = vunpack.c.h.b16 %v1351
    %v2498 = vunpack.c.l.b16 %v1352
    %v2499 = vunpack.c.h.b16 %v1352
    %v2500 = vunpack.c.l.b16 %v1353
    %v2501 = vunpack.c.h.b16 %v1353
    %v2502 = vunpack.c.l.b16 %v1354
    %v2503 = vunpack.c.l.b16 %v1355
    %v2504 = vunpack.c.h.b16 %v1355
    %v2505 = vunpack.c.l.b16 %v1356
    %v2506 = vunpack.c.h.b16 %v1356
    %v2507 = vunpack.c.l.b16 %v1357
    %v2508 = vunpack.c.h.b16 %v1357
    %v2509 = vunpack.c.l.b16 %v1358
    %v2510 = vunpack.c.l.b16 %v1359
    %v2511 = vunpack.c.h.b16 %v1359
    %v2512 = vunpack.c.l.b16 %v1360
    %v2513 = vunpack.c.h.b16 %v1360
    %v2514 = vunpack.c.l.b16 %v1361
    %v2515 = vunpack.c.h.b16 %v1361
    %v2516 = vunpack.c.l.b16 %v1362
    %v2517 = vunpack.c.l.b16 %v1363
    %v2518 = vunpack.c.h.b16 %v1363
    %v2519 = vunpack.c.l.b16 %v1364
    %v2520 = vunpack.c.h.b16 %v1364
    %v2521 = vunpack.c.l.b16 %v1365
    %v2522 = vunpack.c.h.b16 %v1365
    %v2523 = vunpack.c.l.b16 %v1366
    %v2524 = vunpack.c.l.b16 %v1367
    %v2525 = vunpack.c.h.b16 %v1367
    %v2526 = vunpack.c.l.b16 %v1368
    %v2527 = vunpack.c.h.b16 %v1368
    %v2528 = vunpack.c.l.b16 %v1369
    %v2529 = vunpack.c.h.b16 %v1369
    %v2530 = vunpack.c.l.b16 %v1370
    %v2531 = vunpack.c.l.b16 %v1371
    %v2532 = vunpack.c.h.b16 %v1371
    %v2533 = vunpack.c.l.b16 %v1372
    %v2534 = vunpack.c.h.b16 %v1372
    %v2535 = vunpack.c.l.b16 %v1373
    %v2536 = vunpack.c.h.b16 %v1373
    %v2537 = vunpack.c.l.b16 %v1374
    %v2538 = vunpack.c.l.b16 %v1375
    %v2539 = vunpack.c.h.b16 %v1375
    %v2540 = vunpack.c.l.b16 %v1376
    %v2541 = vunpack.c.h.b16 %v1376
    %v2542 = vunpack.c.l.b16 %v1377
    %v2543 = vunpack.c.h.b16 %v1377
    %v2544 = vunpack.c.l.b16 %v1378
    %v2545 = vunpack.c.l.b16 %v1379
    %v2546 = vunpack.c.h.b16 %v1379
    %v2547 = vunpack.c.l.b16 %v1380
    %v2548 = vunpack.c.h.b16 %v1380
    %v2549 = vunpack.c.l.b16 %v1381
    %v2550 = vunpack.c.h.b16 %v1381
    %v2551 = vunpack.c.l.b16 %v1382
    %v2552 = vunpack.c.l.b16 %v1383
    %v2553 = vunpack.c.h.b16 %v1383
    %v2554 = vunpack.c.l.b16 %v1384
    %v2555 = vunpack.c.h.b16 %v1384
    %v2556 = vunpack.c.l.b16 %v1385
    %v2557 = vunpack.c.h.b16 %v1385
    %v2558 = vunpack.c.l.b16 %v1386
    %v2559 = vunpack.c.l.b16 %v1387
    %v2560 = vunpack.c.h.b16 %v1387
    %v2561 = vunpack.c.l.b16 %v1388
    %v2562 = vunpack.c.h.b16 %v1388
    %v2563 = vunpack.c.l.b16 %v1389
    %v2564 = vunpack.c.h.b16 %v1389
    %v2565 = vunpack.c.l.b16 %v1390
    %v2566 = vunpack.c.l.b16 %v1391
    %v2567 = vunpack.c.h.b16 %v1391
    %v2568 = vunpack.c.l.b16 %v1392
    %v2569 = vunpack.c.h.b16 %v1392
    %v2570 = vunpack.c.l.b16 %v1393
    %v2571 = vunpack.c.h.b16 %v1393
    %v2572 = vunpack.c.l.b16 %v1394
    %v2573 = vunpack.c.l.b16 %v1395
    %v2574 = vunpack.c.h.b16 %v1395
    %v2575 = vunpack.c.l.b16 %v1396
    %v2576 = vunpack.c.h.b16 %v1396
    %v2577 = vunpack.c.l.b16 %v1397
    %v2578 = vunpack.c.h.b16 %v1397
    %v2579 = vunpack.c.l.b16 %v1398
    %v2580 = vunpack.c.l.b16 %v1399
    %v2581 = vunpack.c.h.b16 %v1399
    %v2582 = vunpack.c.l.b16 %v1400
    %v2583 = vunpack.c.h.b16 %v1400
    %v2584 = vunpack.c.l.b16 %v1401
    %v2585 = vunpack.c.h.b16 %v1401
    %v2586 = vunpack.c.l.b16 %v1402
    %v2587 = vunpack.c.l.b16 %v1403
    %v2588 = vunpack.c.h.b16 %v1403
    %v2589 = vunpack.c.l.b16 %v1404
    %v2590 = vunpack.c.h.b16 %v1404
    %v2591 = vunpack.c.l.b16 %v1405
    %v2592 = vunpack.c.h.b16 %v1405
    %v2593 = vunpack.c.l.b16 %v1406
    %v2594 = vunpack.c.l.b16 %v1407
    %v2595 = vunpack.c.h.b16 %v1407
    %v2596 = vunpack.c.l.b16 %v1408
    %v2597 = vunpack.c.h.b16 %v1408
    %v2598 = vunpack.c.l.b16 %v1409
    %v2599 = vunpack.c.h.b16 %v1409
    %v2600 = vunpack.c.l.b16 %v1410
    %v2601 = vunpack.c.l.b16 %v1411
    %v2602 = vunpack.c.h.b16 %v1411
    %v2603 = vunpack.c.l.b16 %v1412
    %v2604 = vunpack.c.h.b16 %v1412
    %v2605 = vunpack.c.l.b16 %v1413
    %v2606 = vunpack.c.h.b16 %v1413
    %v2607 = vunpack.c.l.b16 %v1414
    %v2608 = vunpack.c.l.b16 %v1415
    %v2609 = vunpack.c.h.b16 %v1415
    %v2610 = vunpack.c.l.b16 %v1416
    %v2611 = vunpack.c.h.b16 %v1416
    %v2612 = vunpack.c.l.b16 %v1417
    %v2613 = vunpack.c.h.b16 %v1417
    %v2614 = vunpack.c.l.b16 %v1418
    %v2615 = vunpack.c.l.b16 %v1419
    %v2616 = vunpack.c.h.b16 %v1419
    %v2617 = vunpack.c.l.b16 %v1420
    %v2618 = vunpack.c.h.b16 %v1420
    %v2619 = vunpack.c.l.b16 %v1421
    %v2620 = vunpack.c.h.b16 %v1421
    %v2621 = vunpack.c.l.b16 %v1422
    %v2622 = vunpack.c.l.b16 %v1423
    %v2623 = vunpack.c.h.b16 %v1423
    %v2624 = vunpack.c.l.b16 %v1424
    %v2625 = vunpack.c.h.b16 %v1424
    %v2626 = vunpack.c.l.b16 %v1425
    %v2627 = vunpack.c.h.b16 %v1425
    %v2628 = vunpack.c.l.b16 %v1426
    %v2629 = vunpack.c.l.b16 %v1427
    %v2630 = vunpack.c.h.b16 %v1427
    %v2631 = vunpack.c.l.b16 %v1428
    %v2632 = vunpack.c.h.b16 %v1428
    %v2633 = vunpack.c.l.b16 %v1429
    %v2634 = vunpack.c.h.b16 %v1429
    %v2635 = vunpack.c.l.b16 %v1430
    %v2636 = vunpack.c.l.b16 %v1431
    %v2637 = vunpack.c.h.b16 %v1431
    %v2638 = vunpack.c.l.b16 %v1432
    %v2639 = vunpack.c.h.b16 %v1432
    %v2640 = vunpack.c.l.b16 %v1433
    %v2641 = vunpack.c.h.b16 %v1433
    %v2642 = vunpack.c.l.b16 %v1434
    %v2643 = vunpack.c.l.b16 %v1435
    %v2644 = vunpack.c.h.b16 %v1435
    %v2645 = vunpack.c.l.b16 %v1436
    %v2646 = vunpack.c.h.b16 %v1436
    %v2647 = vunpack.c.l.b16 %v1437
    %v2648 = vunpack.c.h.b16 %v1437
    %v2649 = vunpack.c.l.b16 %v1438
    %v2650 = vunpack.c.l.b16 %v1439
    %v2651 = vunpack.c.h.b16 %v1439
    %v2652 = vunpack.c.l.b16 %v1440
    %v2653 = vunpack.c.h.b16 %v1440
    %v2654 = vunpack.c.l.b16 %v1441
    %v2655 = vunpack.c.h.b16 %v1441
    %v2656 = vunpack.c.l.b16 %v1442
    %v2657 = vunpack.c.l.b16 %v1443
    %v2658 = vunpack.c.h.b16 %v1443
    %v2659 = vunpack.c.l.b16 %v1444
    %v2660 = vunpack.c.h.b16 %v1444
    %v2661 = vunpack.c.l.b16 %v1445
    %v2662 = vunpack.c.h.b16 %v1445
    %v2663 = vunpack.c.l.b16 %v1446
    %v2664 = vunpack.c.l.b16 %v1447
    %v2665 = vunpack.c.h.b16 %v1447
    %v2666 = vunpack.c.l.b16 %v1448
    %v2667 = vunpack.c.h.b16 %v1448
    %v2668 = vunpack.c.l.b16 %v1449
    %v2669 = vunpack.c.h.b16 %v1449
    %v2670 = vunpack.c.l.b16 %v1450
    %v2671 = vunpack.c.l.b16 %v1451
    %v2672 = vunpack.c.h.b16 %v1451
    %v2673 = vunpack.c.l.b16 %v1452
    %v2674 = vunpack.c.h.b16 %v1452
    %v2675 = vunpack.c.l.b16 %v1453
    %v2676 = vunpack.c.h.b16 %v1453
    %v2677 = vunpack.c.l.b16 %v1454
    %v2678 = vunpack.c.l.b16 %v1455
    %v2679 = vunpack.c.h.b16 %v1455
    %v2680 = vunpack.c.l.b16 %v1456
    %v2681 = vunpack.c.h.b16 %v1456
    %v2682 = vunpack.c.l.b16 %v1457
    %v2683 = vunpack.c.h.b16 %v1457
    %v2684 = vunpack.c.l.b16 %v1458
    %v2685 = vunpack.c.l.b16 %v1459
    %v2686 = vunpack.c.h.b16 %v1459
    %v2687 = vunpack.c.l.b16 %v1460
    %v2688 = vunpack.c.h.b16 %v1460
    %v2689 = vunpack.c.l.b16 %v1461
    %v2690 = vunpack.c.h.b16 %v1461
    %v2691 = vunpack.c.l.b16 %v1462
    %v2692 = vunpack.c.l.b16 %v1463
    %v2693 = vunpack.c.h.b16 %v1463
    %v2694 = vunpack.c.l.b16 %v1464
    %v2695 = vunpack.c.h.b16 %v1464
    %v2696 = vunpack.c.l.b16 %v1465
    %v2697 = vunpack.c.h.b16 %v1465
    %v2698 = vunpack.c.l.b16 %v1466
    %v2699 = vunpack.c.l.b16 %v1467
    %v2700 = vunpack.c.h.b16 %v1467
    %v2701 = vunpack.c.l.b16 %v1468
    %v2702 = vunpack.c.h.b16 %v1468
    %v2703 = vunpack.c.l.b16 %v1469
    %v2704 = vunpack.c.h.b16 %v1469
    %v2705 = vunpack.c.l.b16 %v1470
    %v2706 = vunpack.c.l.b16 %v1471
    %v2707 = vunpack.c.h.b16 %v1471
    %v2708 = vunpack.c.l.b16 %v1472
    %v2709 = vunpack.c.h.b16 %v1472
    %v2710 = vunpack.c.l.b16 %v1473
    %v2711 = vunpack.c.h.b16 %v1473
    %v2712 = vunpack.c.l.b16 %v1474
    %v2713 = vunpack.c.l.b16 %v1475
    %v2714 = vunpack.c.h.b16 %v1475
    %v2715 = vunpack.c.l.b16 %v1476
    %v2716 = vunpack.c.h.b16 %v1476
    %v2717 = vunpack.c.l.b16 %v1477
    %v2718 = vunpack.c.h.b16 %v1477
    %v2719 = vunpack.c.l.b16 %v1478
    %v2720 = vunpack.c.l.b16 %v1479
    %v2721 = vunpack.c.h.b16 %v1479
    %v2722 = vunpack.c.l.b16 %v1480
    %v2723 = vunpack.c.h.b16 %v1480
    %v2724 = vunpack.c.l.b16 %v1481
    %v2725 = vunpack.c.h.b16 %v1481
    %v2726 = vunpack.c.l.b16 %v1482
    %v2727 = vunpack.c.l.b16 %v1483
    %v2728 = vunpack.c.h.b16 %v1483
    %v2729 = vunpack.c.l.b16 %v1484
    %v2730 = vunpack.c.h.b16 %v1484
    %v2731 = vunpack.c.l.b16 %v1485
    %v2732 = vunpack.c.h.b16 %v1485
    %v2733 = vunpack.c.l.b16 %v1486
    %v2734 = vunpack.c.l.b16 %v1487
    %v2735 = vunpack.c.h.b16 %v1487
    %v2736 = vunpack.c.l.b16 %v1488
    %v2737 = vunpack.c.h.b16 %v1488
    %v2738 = vunpack.c.l.b16 %v1489
    %v2739 = vunpack.c.h.b16 %v1489
    %v2740 = vunpack.c.l.b16 %v1490
    %v2741 = vunpack.c.l.b16 %v1491
    %v2742 = vunpack.c.h.b16 %v1491
    %v2743 = vunpack.c.l.b16 %v1492
    %v2744 = vunpack.c.h.b16 %v1492
    %v2745 = vunpack.c.l.b16 %v1493
    %v2746 = vunpack.c.h.b16 %v1493
    %v2747 = vunpack.c.l.b16 %v1494
    %v2748 = vunpack.c.l.b16 %v1495
    %v2749 = vunpack.c.h.b16 %v1495
    %v2750 = vunpack.c.l.b16 %v1496
    %v2751 = vunpack.c.h.b16 %v1496
    %v2752 = vunpack.c.l.b16 %v1497
    %v2753 = vunpack.c.h.b16 %v1497
    %v2754 = vunpack.c.l.b16 %v1498
    %v2755 = vunpack.c.l.b16 %v1499
    %v2756 = vunpack.c.h.b16 %v1499
    %v2757 = vunpack.c.l.b16 %v1500
    %v2758 = vunpack.c.h.b16 %v1500
    %v2759 = vunpack.c.l.b16 %v1501
    %v2760 = vunpack.c.h.b16 %v1501
    %v2761 = vunpack.c.l.b16 %v1502
    %v2762 = vunpack.c.l.b16 %v1503
    %v2763 = vunpack.c.h.b16 %v1503
    %v2764 = vunpack.c.l.b16 %v1504
    %v2765 = vunpack.c.h.b16 %v1504
    %v2766 = vunpack.c.l.b16 %v1505
    %v2767 = vunpack.c.h.b16 %v1505
    %v2768 = vunpack.c.l.b16 %v1506
    %v2769 = vunpack.c.l.b16 %v1507
    %v2770 = vunpack.c.h.b16 %v1507
    %v2771 = vunpack.c.l.b16 %v1508
    %v2772 = vunpack.c.h.b16 %v1508
    %v2773 = vunpack.c.l.b16 %v1509
    %v2774 = vunpack.c.h.b16 %v1509
    %v2775 = vunpack.c.l.b16 %v1510
    %v2776 = vunpack.c.l.b16 %v1511
    %v2777 = vunpack.c.h.b16 %v1511
    %v2778 = vunpack.c.l.b16 %v1512
    %v2779 = vunpack.c.h.b16 %v1512
    %v2780 = vunpack.c.l.b16 %v1513
    %v2781 = vunpack.c.h.b16 %v1513
    %v2782 = vunpack.c.l.b16 %v1514
    %v2783 = vunpack.c.l.b16 %v1515
    %v2784 = vunpack.c.h.b16 %v1515
    %v2785 = vunpack.c.l.b16 %v1516
    %v2786 = vunpack.c.h.b16 %v1516
    %v2787 = vunpack.c.l.b16 %v1517
    %v2788 = vunpack.c.h.b16 %v1517
    %v2789 = vunpack.c.l.b16 %v1518
    %v2790 = vunpack.c.l.b16 %v1519
    %v2791 = vunpack.c.h.b16 %v1519
    %v2792 = vunpack.c.l.b16 %v1520
    %v2793 = vunpack.c.h.b16 %v1520
    %v2794 = vunpack.c.l.b16 %v1521
    %v2795 = vunpack.c.h.b16 %v1521
    %v2796 = vunpack.c.l.b16 %v1522
    %v2797 = vunpack.c.l.b16 %v1523
    %v2798 = vunpack.c.h.b16 %v1523
    %v2799 = vunpack.c.l.b16 %v1524
    %v2800 = vunpack.c.h.b16 %v1524
    %v2801 = vunpack.c.l.b16 %v1525
    %v2802 = vunpack.c.h.b16 %v1525
    %v2803 = vunpack.c.l.b16 %v1526
    %v2804 = vunpack.c.l.b16 %v1527
    %v2805 = vunpack.c.h.b16 %v1527
    %v2806 = vunpack.c.l.b16 %v1528
    %v2807 = vunpack.c.h.b16 %v1528
    %v2808 = vunpack.c.l.b16 %v1529
    %v2809 = vunpack.c.h.b16 %v1529
    %v2810 = vunpack.c.l.b16 %v1530
    %v2811 = vunpack.c.l.b16 %v1531
    %v2812 = vunpack.c.h.b16 %v1531
    %v2813 = vunpack.c.l.b16 %v1532
    %v2814 = vunpack.c.h.b16 %v1532
    %v2815 = vunpack.c.l.b16 %v1533
    %v2816 = vunpack.c.h.b16 %v1533
    %v2817 = vunpack.c.l.b16 %v1534
    %v2818 = vunpack.c.l.b16 %v1535
    %v2819 = vunpack.c.h.b16 %v1535
    %v2820 = vunpack.c.l.b16 %v1536
    %v2821 = vunpack.c.h.b16 %v1536
    %v2822 = vunpack.c.l.b16 %v1537
    %v2823 = vunpack.c.h.b16 %v1537
    %v2824 = vunpack.c.l.b16 %v1538
    %v2825 = vunpack.c.l.b16 %v1539
    %v2826 = vunpack.c.h.b16 %v1539
    %v2827 = vunpack.c.l.b16 %v1540
    %v2828 = vunpack.c.h.b16 %v1540
    %v2829 = vunpack.c.l.b16 %v1541
    %v2830 = vunpack.c.h.b16 %v1541
    %v2831 = vunpack.c.l.b16 %v1542
    %v2832 = vunpack.c.l.b16 %v1543
    %v2833 = vunpack.c.h.b16 %v1543
    %v2834 = vunpack.c.l.b16 %v1544
    %v2835 = vunpack.c.h.b16 %v1544
    %v2836 = vunpack.c.l.b16 %v1545
    %v2837 = vunpack.c.h.b16 %v1545
    %v2838 = vunpack.c.l.b16 %v1546
    %v2839 = vunpack.c.l.b16 %v1547
    %v2840 = vunpack.c.h.b16 %v1547
    %v2841 = vunpack.c.l.b16 %v1548
    %v2842 = vunpack.c.h.b16 %v1548
    %v2843 = vunpack.c.l.b16 %v1549
    %v2844 = vunpack.c.h.b16 %v1549
    %v2845 = vunpack.c.l.b16 %v1550
    %v2846 = vunpack.c.l.b16 %v1551
    %v2847 = vunpack.c.h.b16 %v1551
    %v2848 = vunpack.c.l.b16 %v1552
    %v2849 = vunpack.c.h.b16 %v1552
    %v2850 = vunpack.c.l.b16 %v1553
    %v2851 = vunpack.c.h.b16 %v1553
    %v2852 = vunpack.c.l.b16 %v1554
    %v2853 = vunpack.c.l.b16 %v1555
    %v2854 = vunpack.c.h.b16 %v1555
    %v2855 = vunpack.c.l.b16 %v1556
    %v2856 = vunpack.c.h.b16 %v1556
    %v2857 = vunpack.c.l.b16 %v1557
    %v2858 = vunpack.c.h.b16 %v1557
    %v2859 = vunpack.c.l.b16 %v1558
    %v2860 = vunpack.c.l.b16 %v1559
    %v2861 = vunpack.c.h.b16 %v1559
    %v2862 = vunpack.c.l.b16 %v1560
    %v2863 = vunpack.c.h.b16 %v1560
    %v2864 = vunpack.c.l.b16 %v1561
    %v2865 = vunpack.c.h.b16 %v1561
    %v2866 = vunpack.c.l.b16 %v1562
    %v2867 = vunpack.c.l.b16 %v1563
    %v2868 = vunpack.c.h.b16 %v1563
    %v2869 = vunpack.c.l.b16 %v1564
    %v2870 = vunpack.c.h.b16 %v1564
    %v2871 = vunpack.c.l.b16 %v1565
    %v2872 = vunpack.c.h.b16 %v1565
    %v2873 = vunpack.c.l.b16 %v1566
    %v2874 = vunpack.c.l.b16 %v1567
    %v2875 = vunpack.c.h.b16 %v1567
    %v2876 = vunpack.c.l.b16 %v1568
    %v2877 = vunpack.c.h.b16 %v1568
    %v2878 = vunpack.c.l.b16 %v1569
    %v2879 = vunpack.c.h.b16 %v1569
    %v2880 = vunpack.c.l.b16 %v1570
    %v2881 = vunpack.c.l.b16 %v1571
    %v2882 = vunpack.c.h.b16 %v1571
    %v2883 = vunpack.c.l.b16 %v1572
    %v2884 = vunpack.c.h.b16 %v1572
    %v2885 = vunpack.c.l.b16 %v1573
    %v2886 = vunpack.c.h.b16 %v1573
    %v2887 = vunpack.c.l.b16 %v1574
    %v2888 = vunpack.c.l.b16 %v1575
    %v2889 = vunpack.c.h.b16 %v1575
    %v2890 = vunpack.c.l.b16 %v1576
    %v2891 = vunpack.c.h.b16 %v1576
    %v2892 = vunpack.c.l.b16 %v1577
    %v2893 = vunpack.c.h.b16 %v1577
    %v2894 = vunpack.c.l.b16 %v1578
    %v2895 = vunpack.c.l.b16 %v1579
    %v2896 = vunpack.c.h.b16 %v1579
    %v2897 = vunpack.c.l.b16 %v1580
    %v2898 = vunpack.c.h.b16 %v1580
    %v2899 = vunpack.c.l.b16 %v1581
    %v2900 = vunpack.c.h.b16 %v1581
    %v2901 = vunpack.c.l.b16 %v1582
    %v2902 = vunpack.c.l.b16 %v1583
    %v2903 = vunpack.c.h.b16 %v1583
    %v2904 = vunpack.c.l.b16 %v1584
    %v2905 = vunpack.c.h.b16 %v1584
    %v2906 = vunpack.c.l.b16 %v1585
    %v2907 = vunpack.c.h.b16 %v1585
    %v2908 = vunpack.c.l.b16 %v1586
    %v2909 = vunpack.c.l.b16 %v1587
    %v2910 = vunpack.c.h.b16 %v1587
    %v2911 = vunpack.c.l.b16 %v1588
    %v2912 = vunpack.c.h.b16 %v1588
    %v2913 = vunpack.c.l.b16 %v1589
    %v2914 = vunpack.c.h.b16 %v1589
    %v2915 = vunpack.c.l.b16 %v1590
    %v2916 = vunpack.c.l.b16 %v1591
    %v2917 = vunpack.c.h.b16 %v1591
    %v2918 = vunpack.c.l.b16 %v1592
    %v2919 = vunpack.c.h.b16 %v1592
    %v2920 = vunpack.c.l.b16 %v1593
    %v2921 = vunpack.c.h.b16 %v1593
    %v2922 = vunpack.c.l.b16 %v1594
    %v2923 = vunpack.c.l.b16 %v1595
    %v2924 = vunpack.c.h.b16 %v1595
    %v2925 = vunpack.c.l.b16 %v1596
    %v2926 = vunpack.c.h.b16 %v1596
    %v2927 = vunpack.c.l.b16 %v1597
    %v2928 = vunpack.c.h.b16 %v1597
    %v2929 = vunpack.c.l.b16 %v1598
    %v2930 = vunpack.c.l.b16 %v1599
    %v2931 = vunpack.c.h.b16 %v1599
    %v2932 = vunpack.c.l.b16 %v1600
    %v2933 = vunpack.c.h.b16 %v1600
    %v2934 = vunpack.c.l.b16 %v1601
    %v2935 = vunpack.c.h.b16 %v1601
    %v2936 = vunpack.c.l.b16 %v1602
    %v2937 = vunpack.c.l.b16 %v1603
    %v2938 = vunpack.c.h.b16 %v1603
    %v2939 = vunpack.c.l.b16 %v1604
    %v2940 = vunpack.c.h.b16 %v1604
    %v2941 = vunpack.c.l.b16 %v1605
    %v2942 = vunpack.c.h.b16 %v1605
    %v2943 = vunpack.c.l.b16 %v1606
    %v2944 = vunpack.c.l.b16 %v1607
    %v2945 = vunpack.c.h.b16 %v1607
    %v2946 = vunpack.c.l.b16 %v1608
    %v2947 = vunpack.c.h.b16 %v1608
    %v2948 = vunpack.c.l.b16 %v1609
    %v2949 = vunpack.c.h.b16 %v1609
    %v2950 = vunpack.c.l.b16 %v1610
    %v2951 = vunpack.c.l.b16 %v1611
    %v2952 = vunpack.c.h.b16 %v1611
    %v2953 = vunpack.c.l.b16 %v1612
    %v2954 = vunpack.c.h.b16 %v1612
    %v2955 = vunpack.c.l.b16 %v1613
    %v2956 = vunpack.c.h.b16 %v1613
    %v2957 = vunpack.c.l.b16 %v1614
    %v2958 = vunpack.c.l.b16 %v1615
    %v2959 = vunpack.c.h.b16 %v1615
    %v2960 = vunpack.c.l.b16 %v1616
    %v2961 = vunpack.c.h.b16 %v1616
    %v2962 = vunpack.c.l.b16 %v1617
    %v2963 = vunpack.c.h.b16 %v1617
    %v2964 = vunpack.c.l.b16 %v1618
    %v2965 = vunpack.c.l.b16 %v1619
    %v2966 = vunpack.c.h.b16 %v1619
    %v2967 = vunpack.c.l.b16 %v1620
    %v2968 = vunpack.c.h.b16 %v1620
    %v2969 = vunpack.c.l.b16 %v1621
    %v2970 = vunpack.c.h.b16 %v1621
    %v2971 = vunpack.c.l.b16 %v1622
    %v2972 = vunpack.c.l.b16 %v1623
    %v2973 = vunpack.c.h.b16 %v1623
    %v2974 = vunpack.c.l.b16 %v1624
    %v2975 = vunpack.c.h.b16 %v1624
    %v2976 = vunpack.c.l.b16 %v1625
    %v2977 = vunpack.c.h.b16 %v1625
    %v2978 = vunpack.c.l.b16 %v1626
    %v2979 = vunpack.c.l.b16 %v1627
    %v2980 = vunpack.c.h.b16 %v1627
    %v2981 = vunpack.c.l.b16 %v1628
    %v2982 = vunpack.c.h.b16 %v1628
    %v2983 = vunpack.c.l.b16 %v1629
    %v2984 = vunpack.c.h.b16 %v1629
    %v2985 = vunpack.c.l.b16 %v1630
    %v2986 = vunpack.c.l.b16 %v1631
    %v2987 = vunpack.c.h.b16 %v1631
    %v2988 = vunpack.c.l.b16 %v1632
    %v2989 = vunpack.c.h.b16 %v1632
    %v2990 = vunpack.c.l.b16 %v1633
    %v2991 = vunpack.c.h.b16 %v1633
    %v2992 = vunpack.c.l.b16 %v1634
    %v2993 = vunpack.c.l.b16 %v1635
    %v2994 = vunpack.c.h.b16 %v1635
    %v2995 = vunpack.c.l.b16 %v1636
    %v2996 = vunpack.c.h.b16 %v1636
    %v2997 = vunpack.c.l.b16 %v1637
    %v2998 = vunpack.c.h.b16 %v1637
    %v2999 = vunpack.c.l.b16 %v1638
    %v3000 = vunpack.c.l.b16 %v1639
    %v3001 = vunpack.c.h.b16 %v1639
    %v3002 = vunpack.c.l.b16 %v1640
    %v3003 = vunpack.c.h.b16 %v1640
    %v3004 = vunpack.c.l.b16 %v1641
    %v3005 = vunpack.c.h.b16 %v1641
    %v3006 = vunpack.c.l.b16 %v1642
    %v3007 = vunpack.c.l.b16 %v1643
    %v3008 = vunpack.c.h.b16 %v1643
    %v3009 = vunpack.c.l.b16 %v1644
    %v3010 = vunpack.c.h.b16 %v1644
    %v3011 = vunpack.c.l.b16 %v1645
    %v3012 = vunpack.c.h.b16 %v1645
    %v3013 = vunpack.c.l.b16 %v1646
    %v3014 = vunpack.c.l.b16 %v1647
    %v3015 = vunpack.c.h.b16 %v1647
    %v3016 = vunpack.c.l.b16 %v1648
    %v3017 = vunpack.c.h.b16 %v1648
    %v3018 = vunpack.c.l.b16 %v1649
    %v3019 = vunpack.c.h.b16 %v1649
    %v3020 = vunpack.c.l.b16 %v1650
    %v3021 = vunpack.c.l.b16 %v1651
    %v3022 = vunpack.c.h.b16 %v1651
    %v3023 = vunpack.c.l.b16 %v1652
    %v3024 = vunpack.c.h.b16 %v1652
    %v3025 = vunpack.c.l.b16 %v1653
    %v3026 = vunpack.c.h.b16 %v1653
    %v3027 = vunpack.c.l.b16 %v1654
    %v3028 = vunpack.c.l.b16 %v1655
    %v3029 = vunpack.c.h.b16 %v1655
    %v3030 = vunpack.c.l.b16 %v1656
    %v3031 = vunpack.c.h.b16 %v1656
    %v3032 = vunpack.c.l.b16 %v1657
    %v3033 = vunpack.c.h.b16 %v1657
    %v3034 = vunpack.c.l.b16 %v1658
    %v3035 = vunpack.c.l.b16 %v1659
    %v3036 = vunpack.c.h.b16 %v1659
    %v3037 = vunpack.c.l.b16 %v1660
    %v3038 = vunpack.c.h.b16 %v1660
    %v3039 = vunpack.c.l.b16 %v1661
    %v3040 = vunpack.c.h.b16 %v1661
    %v3041 = vunpack.c.l.b16 %v1662
    %v3042 = vunpack.c.l.b16 %v1663
    %v3043 = vunpack.c.h.b16 %v1663
    %v3044 = vunpack.c.l.b16 %v1664
    %v3045 = vunpack.c.h.b16 %v1664
    %v3046 = vunpack.c.l.b16 %v1665
    %v3047 = vunpack.c.h.b16 %v1665
    %v3048 = vunpack.c.l.b16 %v1666
    %v3049 = vunpack.c.l.b16 %v1667
    %v3050 = vunpack.c.h.b16 %v1667
    %v3051 = vunpack.c.l.b16 %v1668
    %v3052 = vunpack.c.h.b16 %v1668
    %v3053 = vunpack.c.l.b16 %v1669
    %v3054 = vunpack.c.h.b16 %v1669
    %v3055 = vunpack.c.l.b16 %v1670
    %v3056 = vunpack.c.l.b16 %v1671
    %v3057 = vunpack.c.h.b16 %v1671
    %v3058 = vunpack.c.l.b16 %v1672
    %v3059 = vunpack.c.h.b16 %v1672
    %v3060 = vunpack.c.l.b16 %v1673
    %v3061 = vunpack.c.h.b16 %v1673
    %v3062 = vunpack.c.l.b16 %v1674
    %v3063 = vunpack.c.l.b16 %v1675
    %v3064 = vunpack.c.h.b16 %v1675
    %v3065 = vunpack.c.l.b16 %v1676
    %v3066 = vunpack.c.h.b16 %v1676
    %v3067 = vunpack.c.l.b16 %v1677
    %v3068 = vunpack.c.h.b16 %v1677
    %v3069 = vunpack.c.l.b16 %v1678
    %v3070 = vunpack.c.l.b16 %v1679
    %v3071 = vunpack.c.h.b16 %v1679
    %v3072 = vunpack.c.l.b16 %v1680
    %v3073 = vunpack.c.h.b16 %v1680
    %v3074 = vunpack.c.l.b16 %v1681
    %v3075 = vunpack.c.h.b16 %v1681
    %v3076 = vunpack.c.l.b16 %v1682
    %v3077 = vunpack.c.l.b16 %v1683
    %v3078 = vunpack.c.h.b16 %v1683
    %v3079 = vunpack.c.l.b16 %v1684
    %v3080 = vunpack.c.h.b16 %v1684
    %v3081 = vunpack.c.l.b16 %v1685
    %v3082 = vunpack.c.h.b16 %v1685
    %v3083 = vunpack.c.l.b16 %v1686
    %v3084 = vunpack.c.l.b16 %v1687
    %v3085 = vunpack.c.h.b16 %v1687
    %v3086 = vunpack.c.l.b16 %v1688
    %v3087 = vunpack.c.h.b16 %v1688
    %v3088 = vunpack.c.l.b16 %v1689
    %v3089 = vunpack.c.h.b16 %v1689
    %v3090 = vunpack.c.l.b16 %v1690
    %v3091 = vunpack.c.l.b16 %v1691
    %v3092 = vunpack.c.h.b16 %v1691
    %v3093 = vunpack.c.l.b16 %v1692
    %v3094 = vunpack.c.h.b16 %v1692
    %v3095 = vunpack.c.l.b16 %v1693
    %v3096 = vunpack.c.h.b16 %v1693
    %v3097 = vunpack.c.l.b16 %v1694
    %v3098 = vunpack.c.l.b16 %v1695
    %v3099 = vunpack.c.h.b16 %v1695
    %v3100 = vunpack.c.l.b16 %v1696
    %v3101 = vunpack.c.h.b16 %v1696
    %v3102 = vunpack.c.l.b16 %v1697
    %v3103 = vunpack.c.h.b16 %v1697
    %v3104 = vunpack.c.l.b16 %v1698
    %v3105 = vunpack.c.l.b16 %v1699
    %v3106 = vunpack.c.h.b16 %v1699
    %v3107 = vunpack.c.l.b16 %v1700
    %v3108 = vunpack.c.h.b16 %v1700
    %v3109 = vunpack.c.l.b16 %v1701
    %v3110 = vunpack.c.h.b16 %v1701
    %v3111 = vunpack.c.l.b16 %v1702
    %v3112 = vunpack.c.l.b16 %v1703
    %v3113 = vunpack.c.h.b16 %v1703
    %v3114 = vunpack.c.l.b16 %v1704
    %v3115 = vunpack.c.h.b16 %v1704
    %v3116 = vunpack.c.l.b16 %v1705
    %v3117 = vunpack.c.h.b16 %v1705
    %v3118 = vunpack.c.l.b16 %v1706
    %v3119 = vunpack.c.l.b16 %v1707
    %v3120 = vunpack.c.h.b16 %v1707
    %v3121 = vunpack.c.l.b16 %v1708
    %v3122 = vunpack.c.h.b16 %v1708
    %v3123 = vunpack.c.l.b16 %v1709
    %v3124 = vunpack.c.h.b16 %v1709
    %v3125 = vunpack.c.l.b16 %v1710
    %v3126 = vunpack.c.l.b16 %v1711
    %v3127 = vunpack.c.h.b16 %v1711
    %v3128 = vunpack.c.l.b16 %v1712
    %v3129 = vunpack.c.h.b16 %v1712
    %v3130 = vunpack.c.l.b16 %v1713
    %v3131 = vunpack.c.h.b16 %v1713
    %v3132 = vunpack.c.l.b16 %v1714
    %v3133 = vunpack.c.l.b16 %v1715
    %v3134 = vunpack.c.h.b16 %v1715
    %v3135 = vunpack.c.l.b16 %v1716
    %v3136 = vunpack.c.h.b16 %v1716
    %v3137 = vunpack.c.l.b16 %v1717
    %v3138 = vunpack.c.h.b16 %v1717
    %v3139 = vunpack.c.l.b16 %v1718
    %v3140 = vunpack.c.l.b16 %v1719
    %v3141 = vunpack.c.h.b16 %v1719
    %v3142 = vunpack.c.l.b16 %v1720
    %v3143 = vunpack.c.h.b16 %v1720
    %v3144 = vunpack.c.l.b16 %v1721
    %v3145 = vunpack.c.h.b16 %v1721
    %v3146 = vunpack.c.l.b16 %v1722
    %v3147 = vunpack.c.l.b16 %v1723
    %v3148 = vunpack.c.h.b16 %v1723
    %v3149 = vunpack.c.l.b16 %v1724
    %v3150 = vunpack.c.h.b16 %v1724
    %v3151 = vunpack.c.l.b16 %v1725
    %v3152 = vunpack.c.h.b16 %v1725
    %v3153 = vunpack.c.l.b16 %v1726
    %v3154 = vunpack.c.l.b16 %v1727
    %v3155 = vunpack.c.h.b16 %v1727
    %v3156 = vunpack.c.l.b16 %v1728
    %v3157 = vunpack.c.h.b16 %v1728
    %v3158 = vunpack.c.l.b16 %v1729
    %v3159 = vunpack.c.h.b16 %v1729
    %v3160 = vunpack.c.l.b16 %v1730
    %v3161 = vunpack.c.l.b16 %v1731
    %v3162 = vunpack.c.h.b16 %v1731
    %v3163 = vunpack.c.l.b16 %v1732
    %v3164 = vunpack.c.h.b16 %v1732
    %v3165 = vunpack.c.l.b16 %v1733
    %v3166 = vunpack.c.h.b16 %v1733
    %v3167 = vunpack.c.l.b16 %v1734
    %v3168 = vunpack.c.l.b16 %v1735
    %v3169 = vunpack.c.h.b16 %v1735
    %v3170 = vunpack.c.l.b16 %v1736
    %v3171 = vunpack.c.h.b16 %v1736
    %v3172 = vunpack.c.l.b16 %v1737
    %v3173 = vunpack.c.h.b16 %v1737
    %v3174 = vunpack.c.l.b16 %v1738
    %v3175 = vunpack.c.l.b16 %v1739
    %v3176 = vunpack.c.h.b16 %v1739
    %v3177 = vunpack.c.l.b16 %v1740
    %v3178 = vunpack.c.h.b16 %v1740
    %v3179 = vunpack.c.l.b16 %v1741
    %v3180 = vunpack.c.h.b16 %v1741
    %v3181 = vunpack.c.l.b16 %v1742
    %v3182 = vunpack.c.l.b16 %v1743
    %v3183 = vunpack.c.h.b16 %v1743
    %v3184 = vunpack.c.l.b16 %v1744
    %v3185 = vunpack.c.h.b16 %v1744
    %v3186 = vunpack.c.l.b16 %v1745
    %v3187 = vunpack.c.h.b16 %v1745
    %v3188 = vunpack.c.l.b16 %v1746
    %v3189 = vunpack.c.l.b16 %v1747
    %v3190 = vunpack.c.h.b16 %v1747
    %v3191 = vunpack.c.l.b16 %v1748
    %v3192 = vunpack.c.h.b16 %v1748
    %v3193 = vunpack.c.l.b16 %v1749
    %v3194 = vunpack.c.h.b16 %v1749
    %v3195 = vunpack.c.l.b16 %v1750
    %v3196 = vpack.c.b16 %v2307, %v2300
    %v3197 = vpack.c.b16 %v2308, %v2301
    %v3198 = vpack.c.b16 %v2309, %v2302
    %v3199 = vpack.c.b16 %v2310, %v2303
    %v3200 = vpack.c.b16 %v2311, %v2304
    %v3201 = vpack.c.b16 %v2312, %v2305
    %v3202 = vpack.c.b16 %v2313, %v2306
    %v3203 = vpack.c.b16 %v2321, %v2314
    %v3204 = vpack.c.b16 %v2322, %v2315
    %v3205 = vpack.c.b16 %v2323, %v2316
    %v3206 = vpack.c.b16 %v2324, %v2317
    %v3207 = vpack.c.b16 %v2325, %v2318
    %v3208 = vpack.c.b16 %v2326, %v2319
    %v3209 = vpack.c.b16 %v2327, %v2320
    %v3210 = vpack.c.b16 %v2335, %v2328
    %v3211 = vpack.c.b16 %v2336, %v2329
    %v3212 = vpack.c.b16 %v2337, %v2330
    %v3213 = vpack.c.b16 %v2338, %v2331
    %v3214 = vpack.c.b16 %v2339, %v2332
    %v3215 = vpack.c.b16 %v2340, %v2333
    %v3216 = vpack.c.b16 %v2341, %v2334
    %v3217 = vpack.c.b16 %v2349, %v2342
    %v3218 = vpack.c.b16 %v2350, %v2343
    %v3219 = vpack.c.b16 %v2351, %v2344
    %v3220 = vpack.c.b16 %v2352, %v2345
    %v3221 = vpack.c.b16 %v2353, %v2346
    %v3222 = vpack.c.b16 %v2354, %v2347
    %v3223 = vpack.c.b16 %v2355, %v2348
    %v3224 = vpack.c.b16 %v2363, %v2356
    %v3225 = vpack.c.b16 %v2364, %v2357
    %v3226 = vpack.c.b16 %v2365, %v2358
    %v3227 = vpack.c.b16 %v2366, %v2359
    %v3228 = vpack.c.b16 %v2367, %v2360
    %v3229 = vpack.c.b16 %v2368, %v2361
    %v3230 = vpack.c.b16 %v2369, %v2362
    %v3231 = vpack.c.b16 %v2377, %v2370
    %v3232 = vpack.c.b16 %v2378, %v2371
    %v3233 = vpack.c.b16 %v2379, %v2372
    %v3234 = vpack.c.b16 %v2380, %v2373
    %v3235 = vpack.c.b16 %v2381, %v2374
    %v3236 = vpack.c.b16 %v2382, %v2375
    %v3237 = vpack.c.b16 %v2383, %v2376
    %v3238 = vpack.c.b16 %v2391, %v2384
    %v3239 = vpack.c.b16 %v2392, %v2385
    %v3240 = vpack.c.b16 %v2393, %v2386
    %v3241 = vpack.c.b16 %v2394, %v2387
    %v3242 = vpack.c.b16 %v2395, %v2388
    %v3243 = vpack.c.b16 %v2396, %v2389
    %v3244 = vpack.c.b16 %v2397, %v2390
    %v3245 = vpack.c.b16 %v2405, %v2398
    %v3246 = vpack.c.b16 %v2406, %v2399
    %v3247 = vpack.c.b16 %v2407, %v2400
    %v3248 = vpack.c.b16 %v2408, %v2401
    %v3249 = vpack.c.b16 %v2409, %v2402
    %v3250 = vpack.c.b16 %v2410, %v2403
    %v3251 = vpack.c.b16 %v2411, %v2404
    %v3252 = vpack.c.b16 %v2419, %v2412
    %v3253 = vpack.c.b16 %v2420, %v2413
    %v3254 = vpack.c.b16 %v2421, %v2414
    %v3255 = vpack.c.b16 %v2422, %v2415
    %v3256 = vpack.c.b16 %v2423, %v2416
    %v3257 = vpack.c.b16 %v2424, %v2417
    %v3258 = vpack.c.b16 %v2425, %v2418
    %v3259 = vpack.c.b16 %v2433, %v2426
    %v3260 = vpack.c.b16 %v2434, %v2427
    %v3261 = vpack.c.b16 %v2435, %v2428
    %v3262 = vpack.c.b16 %v2436, %v2429
    %v3263 = vpack.c.b16 %v2437, %v2430
    %v3264 = vpack.c.b16 %v2438, %v2431
    %v3265 = vpack.c.b16 %v2439, %v2432
    %v3266 = vpack.c.b16 %v2447, %v2440
    %v3267 = vpack.c.b16 %v2448, %v2441
    %v3268 = vpack.c.b16 %v2449, %v2442
    %v3269 = vpack.c.b16 %v2450, %v2443
    %v3270 = vpack.c.b16 %v2451, %v2444
    %v3271 = vpack.c.b16 %v2452, %v2445
    %v3272 = vpack.c.b16 %v2453, %v2446
    %v3273 = vpack.c.b16 %v2461, %v2454
    %v3274 = vpack.c.b16 %v2462, %v2455
    %v3275 = vpack.c.b16 %v2463, %v2456
    %v3276 = vpack.c.b16 %v2464, %v2457
    %v3277 = vpack.c.b16 %v2465, %v2458
    %v3278 = vpack.c.b16 %v2466, %v2459
    %v3279 = vpack.c.b16 %v2467, %v2460
    %v3280 = vpack.c.b16 %v2475, %v2468
    %v3281 = vpack.c.b16 %v2476, %v2469
    %v3282 = vpack.c.b16 %v2477, %v2470
    %v3283 = vpack.c.b16 %v2478, %v2471
    %v3284 = vpack.c.b16 %v2479, %v2472
    %v3285 = vpack.c.b16 %v2480, %v2473
    %v3286 = vpack.c.b16 %v2481, %v2474
    %v3287 = vpack.c.b16 %v2489, %v2482
    %v3288 = vpack.c.b16 %v2490, %v2483
    %v3289 = vpack.c.b16 %v2491, %v2484
    %v3290 = vpack.c.b16 %v2492, %v2485
    %v3291 = vpack.c.b16 %v2493, %v2486
    %v3292 = vpack.c.b16 %v2494, %v2487
    %v3293 = vpack.c.b16 %v2495, %v2488
    %v3294 = vpack.c.b16 %v2503, %v2496
    %v3295 = vpack.c.b16 %v2504, %v2497
    %v3296 = vpack.c.b16 %v2505, %v2498
    %v3297 = vpack.c.b16 %v2506, %v2499
    %v3298 = vpack.c.b16 %v2507, %v2500
    %v3299 = vpack.c.b16 %v2508, %v2501
    %v3300 = vpack.c.b16 %v2509, %v2502
    %v3301 = vpack.c.b16 %v2517, %v2510
    %v3302 = vpack.c.b16 %v2518, %v2511
    %v3303 = vpack.c.b16 %v2519, %v2512
    %v3304 = vpack.c.b16 %v2520, %v2513
    %v3305 = vpack.c.b16 %v2521, %v2514
    %v3306 = vpack.c.b16 %v2522, %v2515
    %v3307 = vpack.c.b16 %v2523, %v2516
    %v3308 = vpack.c.b16 %v2531, %v2524
    %v3309 = vpack.c.b16 %v2532, %v2525
    %v3310 = vpack.c.b16 %v2533, %v2526
    %v3311 = vpack.c.b16 %v2534, %v2527
    %v3312 = vpack.c.b16 %v2535, %v2528
    %v3313 = vpack.c.b16 %v2536, %v2529
    %v3314 = vpack.c.b16 %v2537, %v2530
    %v3315 = vpack.c.b16 %v2545, %v2538
    %v3316 = vpack.c.b16 %v2546, %v2539
    %v3317 = vpack.c.b16 %v2547, %v2540
    %v3318 = vpack.c.b16 %v2548, %v2541
    %v3319 = vpack.c.b16 %v2549, %v2542
    %v3320 = vpack.c.b16 %v2550, %v2543
    %v3321 = vpack.c.b16 %v2551, %v2544
    %v3322 = vpack.c.b16 %v2559, %v2552
    %v3323 = vpack.c.b16 %v2560, %v2553
    %v3324 = vpack.c.b16 %v2561, %v2554
    %v3325 = vpack.c.b16 %v2562, %v2555
    %v3326 = vpack.c.b16 %v2563, %v2556
    %v3327 = vpack.c.b16 %v2564, %v2557
    %v3328 = vpack.c.b16 %v2565, %v2558
    %v3329 = vpack.c.b16 %v2573, %v2566
    %v3330 = vpack.c.b16 %v2574, %v2567
    %v3331 = vpack.c.b16 %v2575, %v2568
    %v3332 = vpack.c.b16 %v2576, %v2569
    %v3333 = vpack.c.b16 %v2577, %v2570
    %v3334 = vpack.c.b16 %v2578, %v2571
    %v3335 = vpack.c.b16 %v2579, %v2572
    %v3336 = vpack.c.b16 %v2587, %v2580
    %v3337 = vpack.c.b16 %v2588, %v2581
    %v3338 = vpack.c.b16 %v2589, %v2582
    %v3339 = vpack.c.b16 %v2590, %v2583
    %v3340 = vpack.c.b16 %v2591, %v2584
    %v3341 = vpack.c.b16 %v2592, %v2585
    %v3342 = vpack.c.b16 %v2593, %v2586
    %v3343 = vpack.c.b16 %v2601, %v2594
    %v3344 = vpack.c.b16 %v2602, %v2595
    %v3345 = vpack.c.b16 %v2603, %v2596
    %v3346 = vpack.c.b16 %v2604, %v2597
    %v3347 = vpack.c.b16 %v2605, %v2598
    %v3348 = vpack.c.b16 %v2606, %v2599
    %v3349 = vpack.c.b16 %v2607, %v2600
    %v3350 = vpack.c.b16 %v2615, %v2608
    %v3351 = vpack.c.b16 %v2616, %v2609
    %v3352 = vpack.c.b16 %v2617, %v2610
    %v3353 = vpack.c.b16 %v2618, %v2611
    %v3354 = vpack.c.b16 %v2619, %v2612
    %v3355 = vpack.c.b16 %v2620, %v2613
    %v3356 = vpack.c.b16 %v2621, %v2614
    %v3357 = vpack.c.b16 %v2629, %v2622
    %v3358 = vpack.c.b16 %v2630, %v2623
    %v3359 = vpack.c.b16 %v2631, %v2624
    %v3360 = vpack.c.b16 %v2632, %v2625
    %v3361 = vpack.c.b16 %v2633, %v2626
    %v3362 = vpack.c.b16 %v2634, %v2627
    %v3363 = vpack.c.b16 %v2635, %v2628
    %v3364 = vpack.c.b16 %v2643, %v2636
    %v3365 = vpack.c.b16 %v2644, %v2637
    %v3366 = vpack.c.b16 %v2645, %v2638
    %v3367 = vpack.c.b16 %v2646, %v2639
    %v3368 = vpack.c.b16 %v2647, %v2640
    %v3369 = vpack.c.b16 %v2648, %v2641
    %v3370 = vpack.c.b16 %v2649, %v2642
    %v3371 = vpack.c.b16 %v2657, %v2650
    %v3372 = vpack.c.b16 %v2658, %v2651
    %v3373 = vpack.c.b16 %v2659, %v2652
    %v3374 = vpack.c.b16 %v2660, %v2653
    %v3375 = vpack.c.b16 %v2661, %v2654
    %v3376 = vpack.c.b16 %v2662, %v2655
    %v3377 = vpack.c.b16 %v2663, %v2656
    %v3378 = vpack.c.b16 %v2671, %v2664
    %v3379 = vpack.c.b16 %v2672, %v2665
    %v3380 = vpack.c.b16 %v2673, %v2666
    %v3381 = vpack.c.b16 %v2674, %v2667
    %v3382 = vpack.c.b16 %v2675, %v2668
    %v3383 = vpack.c.b16 %v2676, %v2669
    %v3384 = vpack.c.b16 %v2677, %v2670
    %v3385 = vpack.c.b16 %v2685, %v2678
    %v3386 = vpack.c.b16 %v2686, %v2679
    %v3387 = vpack.c.b16 %v2687, %v2680
    %v3388 = vpack.c.b16 %v2688, %v2681
    %v3389 = vpack.c.b16 %v2689, %v2682
    %v3390 = vpack.c.b16 %v2690, %v2683
    %v3391 = vpack.c.b16 %v2691, %v2684
    %v3392 = vpack.c.b16 %v2699, %v2692
    %v3393 = vpack.c.b16 %v2700, %v2693
    %v3394 = vpack.c.b16 %v2701, %v2694
    %v3395 = vpack.c.b16 %v2702, %v2695
    %v3396 = vpack.c.b16 %v2703, %v2696
    %v3397 = vpack.c.b16 %v2704, %v2697
    %v3398 = vpack.c.b16 %v2705, %v2698
    %v3399 = vpack.c.b16 %v2713, %v2706
    %v3400 = vpack.c.b16 %v2714, %v2707
    %v3401 = vpack.c.b16 %v2715, %v2708
    %v3402 = vpack.c.b16 %v2716, %v2709
    %v3403 = vpack.c.b16 %v2717, %v2710
    %v3404 = vpack.c.b16 %v2718, %v2711
    %v3405 = vpack.c.b16 %v2719, %v2712
    %v3406 = vpack.c.b16 %v2727, %v2720
    %v3407 = vpack.c.b16 %v2728, %v2721
    %v3408 = vpack.c.b16 %v2729, %v2722
    %v3409 = vpack.c.b16 %v2730, %v2723
    %v3410 = vpack.c.b16 %v2731, %v2724
    %v3411 = vpack.c.b16 %v2732, %v2725
    %v3412 = vpack.c.b16 %v2733, %v2726
    %v3413 = vpack.c.b16 %v2741, %v2734
    %v3414 = vpack.c.b16 %v2742, %v2735
    %v3415 = vpack.c.b16 %v2743, %v2736
    %v3416 = vpack.c.b16 %v2744, %v2737
    %v3417 = vpack.c.b16 %v2745, %v2738
    %v3418 = vpack.c.b16 %v2746, %v2739
    %v3419 = vpack.c.b16 %v2747, %v2740
    %v3420 = vpack.c.b16 %v2755, %v2748
    %v3421 = vpack.c.b16 %v2756, %v2749
    %v3422 = vpack.c.b16 %v2757, %v2750
    %v3423 = vpack.c.b16 %v2758, %v2751
    %v3424 = vpack.c.b16 %v2759, %v2752
    %v3425 = vpack.c.b16 %v2760, %v2753
    %v3426 = vpack.c.b16 %v2761, %v2754
    %v3427 = vpack.c.b16 %v2769, %v2762
    %v3428 = vpack.c.b16 %v2770, %v2763
    %v3429 = vpack.c.b16 %v2771, %v2764
    %v3430 = vpack.c.b16 %v2772, %v2765
    %v3431 = vpack.c.b16 %v2773, %v2766
    %v3432 = vpack.c.b16 %v2774, %v2767
    %v3433 = vpack.c.b16 %v2775, %v2768
    %v3434 = vpack.c.b16 %v2783, %v2776
    %v3435 = vpack.c.b16 %v2784, %v2777
    %v3436 = vpack.c.b16 %v2785, %v2778
    %v3437 = vpack.c.b16 %v2786, %v2779
    %v3438 = vpack.c.b16 %v2787, %v2780
    %v3439 = vpack.c.b16 %v2788, %v2781
    %v3440 = vpack.c.b16 %v2789, %v2782
    %v3441 = vpack.c.b16 %v2797, %v2790
    %v3442 = vpack.c.b16 %v2798, %v2791
    %v3443 = vpack.c.b16 %v2799, %v2792
    %v3444 = vpack.c.b16 %v2800, %v2793
    %v3445 = vpack.c.b16 %v2801, %v2794
    %v3446 = vpack.c.b16 %v2802, %v2795
    %v3447 = vpack.c.b16 %v2803, %v2796
    %v3448 = vpack.c.b16 %v2811, %v2804
    %v3449 = vpack.c.b16 %v2812, %v2805
    %v3450 = vpack.c.b16 %v2813, %v2806
    %v3451 = vpack.c.b16 %v2814, %v2807
    %v3452 = vpack.c.b16 %v2815, %v2808
    %v3453 = vpack.c.b16 %v2816, %v2809
    %v3454 = vpack.c.b16 %v2817, %v2810
    %v3455 = vpack.c.b16 %v2825, %v2818
    %v3456 = vpack.c.b16 %v2826, %v2819
    %v3457 = vpack.c.b16 %v2827, %v2820
    %v3458 = vpack.c.b16 %v2828, %v2821
    %v3459 = vpack.c.b16 %v2829, %v2822
    %v3460 = vpack.c.b16 %v2830, %v2823
    %v3461 = vpack.c.b16 %v2831, %v2824
    %v3462 = vpack.c.b16 %v2839, %v2832
    %v3463 = vpack.c.b16 %v2840, %v2833
    %v3464 = vpack.c.b16 %v2841, %v2834
    %v3465 = vpack.c.b16 %v2842, %v2835
    %v3466 = vpack.c.b16 %v2843, %v2836
    %v3467 = vpack.c.b16 %v2844, %v2837
    %v3468 = vpack.c.b16 %v2845, %v2838
    %v3469 = vpack.c.b16 %v2853, %v2846
    %v3470 = vpack.c.b16 %v2854, %v2847
    %v3471 = vpack.c.b16 %v2855, %v2848
    %v3472 = vpack.c.b16 %v2856, %v2849
    %v3473 = vpack.c.b16 %v2857, %v2850
    %v3474 = vpack.c.b16 %v2858, %v2851
    %v3475 = vpack.c.b16 %v2859, %v2852
    %v3476 = vpack.c.b16 %v2867, %v2860
    %v3477 = vpack.c.b16 %v2868, %v2861
    %v3478 = vpack.c.b16 %v2869, %v2862
    %v3479 = vpack.c.b16 %v2870, %v2863
    %v3480 = vpack.c.b16 %v2871, %v2864
    %v3481 = vpack.c.b16 %v2872, %v2865
    %v3482 = vpack.c.b16 %v2873, %v2866
    %v3483 = vpack.c.b16 %v2881, %v2874
    %v3484 = vpack.c.b16 %v2882, %v2875
    %v3485 = vpack.c.b16 %v2883, %v2876
    %v3486 = vpack.c.b16 %v2884, %v2877
    %v3487 = vpack.c.b16 %v2885, %v2878
    %v3488 = vpack.c.b16 %v2886, %v2879
    %v3489 = vpack.c.b16 %v2887, %v2880
    %v3490 = vpack.c.b16 %v2895, %v2888
    %v3491 = vpack.c.b16 %v2896, %v2889
    %v3492 = vpack.c.b16 %v2897, %v2890
    %v3493 = vpack.c.b16 %v2898, %v2891
    %v3494 = vpack.c.b16 %v2899, %v2892
    %v3495 = vpack.c.b16 %v2900, %v2893
    %v3496 = vpack.c.b16 %v2901, %v2894
    %v3497 = vpack.c.b16 %v2909, %v2902
    %v3498 = vpack.c.b16 %v2910, %v2903
    %v3499 = vpack.c.b16 %v2911, %v2904
    %v3500 = vpack.c.b16 %v2912, %v2905
    %v3501 = vpack.c.b16 %v2913, %v2906
    %v3502 = vpack.c.b16 %v2914, %v2907
    %v3503 = vpack.c.b16 %v2915, %v2908
    %v3504 = vpack.c.b16 %v2923, %v2916
    %v3505 = vpack.c.b16 %v2924, %v2917
    %v3506 = vpack.c.b16 %v2925, %v2918
    %v3507 = vpack.c.b16 %v2926, %v2919
    %v3508 = vpack.c.b16 %v2927, %v2920
    %v3509 = vpack.c.b16 %v2928, %v2921
    %v3510 = vpack.c.b16 %v2929, %v2922
    %v3511 = vpack.c.b16 %v2937, %v2930
    %v3512 = vpack.c.b16 %v2938, %v2931
    %v3513 = vpack.c.b16 %v2939, %v2932
    %v3514 = vpack.c.b16 %v2940, %v2933
    %v3515 = vpack.c.b16 %v2941, %v2934
    %v3516 = vpack.c.b16 %v2942, %v2935
    %v3517 = vpack.c.b16 %v2943, %v2936
    %v3518 = vpack.c.b16 %v2951, %v2944
    %v3519 = vpack.c.b16 %v2952, %v2945
    %v3520 = vpack.c.b16 %v2953, %v2946
    %v3521 = vpack.c.b16 %v2954, %v2947
    %v3522 = vpack.c.b16 %v2955, %v2948
    %v3523 = vpack.c.b16 %v2956, %v2949
    %v3524 = vpack.c.b16 %v2957, %v2950
    %v3525 = vpack.c.b16 %v2965, %v2958
    %v3526 = vpack.c.b16 %v2966, %v2959
    %v3527 = vpack.c.b16 %v2967, %v2960
    %v3528 = vpack.c.b16 %v2968, %v2961
    %v3529 = vpack.c.b16 %v2969, %v2962
    %v3530 = vpack.c.b16 %v2970, %v2963
    %v3531 = vpack.c.b16 %v2971, %v2964
    %v3532 = vpack.c.b16 %v2979, %v2972
    %v3533 = vpack.c.b16 %v2980, %v2973
    %v3534 = vpack.c.b16 %v2981, %v2974
    %v3535 = vpack.c.b16 %v2982, %v2975
    %v3536 = vpack.c.b16 %v2983, %v2976
    %v3537 = vpack.c.b16 %v2984, %v2977
    %v3538 = vpack.c.b16 %v2985, %v2978
    %v3539 = vpack.c.b16 %v2993, %v2986
    %v3540 = vpack.c.b16 %v2994, %v2987
    %v3541 = vpack.c.b16 %v2995, %v2988
    %v3542 = vpack.c.b16 %v2996, %v2989
    %v3543 = vpack.c.b16 %v2997, %v2990
    %v3544 = vpack.c.b16 %v2998, %v2991
    %v3545 = vpack.c.b16 %v2999, %v2992
    %v3546 = vpack.c.b16 %v3007, %v3000
    %v3547 = vpack.c.b16 %v3008, %v3001
    %v3548 = vpack.c.b16 %v3009, %v3002
    %v3549 = vpack.c.b16 %v3010, %v3003
    %v3550 = vpack.c.b16 %v3011, %v3004
    %v3551 = vpack.c.b16 %v3012, %v3005
    %v3552 = vpack.c.b16 %v3013, %v3006
    %v3553 = vpack.c.b16 %v3021, %v3014
    %v3554 = vpack.c.b16 %v3022, %v3015
    %v3555 = vpack.c.b16 %v3023, %v3016
    %v3556 = vpack.c.b16 %v3024, %v3017
    %v3557 = vpack.c.b16 %v3025, %v3018
    %v3558 = vpack.c.b16 %v3026, %v3019
    %v3559 = vpack.c.b16 %v3027, %v3020
    %v3560 = vpack.c.b16 %v3035, %v3028
    %v3561 = vpack.c.b16 %v3036, %v3029
    %v3562 = vpack.c.b16 %v3037, %v3030
    %v3563 = vpack.c.b16 %v3038, %v3031
    %v3564 = vpack.c.b16 %v3039, %v3032
    %v3565 = vpack.c.b16 %v3040, %v3033
    %v3566 = vpack.c.b16 %v3041, %v3034
    %v3567 = vpack.c.b16 %v3049, %v3042
    %v3568 = vpack.c.b16 %v3050, %v3043
    %v3569 = vpack.c.b16 %v3051, %v3044
    %v3570 = vpack.c.b16 %v3052, %v3045
    %v3571 = vpack.c.b16 %v3053, %v3046
    %v3572 = vpack.c.b16 %v3054, %v3047
    %v3573 = vpack.c.b16 %v3055, %v3048
    %v3574 = vpack.c.b16 %v3063, %v3056
    %v3575 = vpack.c.b16 %v3064, %v3057
    %v3576 = vpack.c.b16 %v3065, %v3058
    %v3577 = vpack.c.b16 %v3066, %v3059
    %v3578 = vpack.c.b16 %v3067, %v3060
    %v3579 = vpack.c.b16 %v3068, %v3061
    %v3580 = vpack.c.b16 %v3069, %v3062
    %v3581 = vpack.c.b16 %v3077, %v3070
    %v3582 = vpack.c.b16 %v3078, %v3071
    %v3583 = vpack.c.b16 %v3079, %v3072
    %v3584 = vpack.c.b16 %v3080, %v3073
    %v3585 = vpack.c.b16 %v3081, %v3074
    %v3586 = vpack.c.b16 %v3082, %v3075
    %v3587 = vpack.c.b16 %v3083, %v3076
    %v3588 = vpack.c.b16 %v3091, %v3084
    %v3589 = vpack.c.b16 %v3092, %v3085
    %v3590 = vpack.c.b16 %v3093, %v3086
    %v3591 = vpack.c.b16 %v3094, %v3087
    %v3592 = vpack.c.b16 %v3095, %v3088
    %v3593 = vpack.c.b16 %v3096, %v3089
    %v3594 = vpack.c.b16 %v3097, %v3090
    %v3595 = vpack.c.b16 %v3105, %v3098
    %v3596 = vpack.c.b16 %v3106, %v3099
    %v3597 = vpack.c.b16 %v3107, %v3100
    %v3598 = vpack.c.b16 %v3108, %v3101
    %v3599 = vpack.c.b16 %v3109, %v3102
    %v3600 = vpack.c.b16 %v3110, %v3103
    %v3601 = vpack.c.b16 %v3111, %v3104
    %v3602 = vpack.c.b16 %v3119, %v3112
    %v3603 = vpack.c.b16 %v3120, %v3113
    %v3604 = vpack.c.b16 %v3121, %v3114
    %v3605 = vpack.c.b16 %v3122, %v3115
    %v3606 = vpack.c.b16 %v3123, %v3116
    %v3607 = vpack.c.b16 %v3124, %v3117
    %v3608 = vpack.c.b16 %v3125, %v3118
    %v3609 = vpack.c.b16 %v3133, %v3126
    %v3610 = vpack.c.b16 %v3134, %v3127
    %v3611 = vpack.c.b16 %v3135, %v3128
    %v3612 = vpack.c.b16 %v3136, %v3129
    %v3613 = vpack.c.b16 %v3137, %v3130
    %v3614 = vpack.c.b16 %v3138, %v3131
    %v3615 = vpack.c.b16 %v3139, %v3132
    %v3616 = vpack.c.b16 %v3147, %v3140
    %v3617 = vpack.c.b16 %v3148, %v3141
    %v3618 = vpack.c.b16 %v3149, %v3142
    %v3619 = vpack.c.b16 %v3150, %v3143
    %v3620 = vpack.c.b16 %v3151, %v3144
    %v3621 = vpack.c.b16 %v3152, %v3145
    %v3622 = vpack.c.b16 %v3153, %v3146
    %v3623 = vpack.c.b16 %v3161, %v3154
    %v3624 = vpack.c.b16 %v3162, %v3155
    %v3625 = vpack.c.b16 %v3163, %v3156
    %v3626 = vpack.c.b16 %v3164, %v3157
    %v3627 = vpack.c.b16 %v3165, %v3158
    %v3628 = vpack.c.b16 %v3166, %v3159
    %v3629 = vpack.c.b16 %v3167, %v3160
    %v3630 = vpack.c.b16 %v3175, %v3168
    %v3631 = vpack.c.b16 %v3176, %v3169
    %v3632 = vpack.c.b16 %v3177, %v3170
    %v3633 = vpack.c.b16 %v3178, %v3171
    %v3634 = vpack.c.b16 %v3179, %v3172
    %v3635 = vpack.c.b16 %v3180, %v3173
    %v3636 = vpack.c.b16 %v3181, %v3174
    %v3637 = vpack.c.b16 %v3189, %v3182
    %v3638 = vpack.c.b16 %v3190, %v3183
    %v3639 = vpack.c.b16 %v3191, %v3184
    %v3640 = vpack.c.b16 %v3192, %v3185
    %v3641 = vpack.c.b16 %v3193, %v3186
    %v3642 = vpack.c.b16 %v3194, %v3187
    %v3643 = vpack.c.b16 %v3195, %v3188
    %4092 = vmatprep.subr.bf16.mxu0 %v3197
    %4093 = vmatpush1.bf16.msra.mxu0 %v3196
    %4094 = vmatprep.subr.bf16.mxu0 %v3204
    %4095 = vmatpush1.bf16.msra.mxu0 %v3203
    %4096 = vmatprep.subr.bf16.mxu0 %v3211
    %4097 = vmatpush1.bf16.msra.mxu0 %v3210
    %4098 = vmatprep.subr.bf16.mxu0 %v3218
    %4099 = vmatpush1.bf16.msra.mxu0 %v3217
    %4100 = vmatprep.subr.bf16.mxu0 %v3225
    %4101 = vmatpush1.bf16.msra.mxu0 %v3224
    %4102 = vmatprep.subr.bf16.mxu0 %v3232
    %4103 = vmatpush1.bf16.msra.mxu0 %v3231
    %4104 = vmatprep.subr.bf16.mxu0 %v3239
    %4105 = vmatpush1.bf16.msra.mxu0 %v3238
    %4106 = vmatprep.subr.bf16.mxu0 %v3246
    %4107 = vmatpush1.bf16.msra.mxu0 %v3245
    %4108 = vmatprep.subr.bf16.mxu0 %v3253
    %4109 = vmatpush1.bf16.msra.mxu0 %v3252
    %4110 = vmatprep.subr.bf16.mxu0 %v3260
    %4111 = vmatpush1.bf16.msra.mxu0 %v3259
    %4112 = vmatprep.subr.bf16.mxu0 %v3267
    %4113 = vmatpush1.bf16.msra.mxu0 %v3266
    %4114 = vmatprep.subr.bf16.mxu0 %v3274
    %4115 = vmatpush1.bf16.msra.mxu0 %v3273
    %4116 = vmatprep.subr.bf16.mxu0 %v3281
    %4117 = vmatpush1.bf16.msra.mxu0 %v3280
    %4118 = vmatprep.subr.bf16.mxu0 %v3288
    %4119 = vmatpush1.bf16.msra.mxu0 %v3287
    %4120 = vmatprep.subr.bf16.mxu0 %v3295
    %4121 = vmatpush1.bf16.msra.mxu0 %v3294
    %4122 = vmatprep.subr.bf16.mxu0 %v3302
    %4123 = vmatpush1.bf16.msra.mxu0 %v3301
    %4124 = vmatprep.mubr.bf16.mxu0 %v1232
    %4125 = vmatmul.mubr.bf16.gmra.mrb[0].mxu0 %v1231
    %v4126 = vpop.f32.mrb[0].mxu0
    %v4127 = vadd.f32 %v1756, %v4126
    %v4128 = vpop.f32.mrb[0].mxu0
    %v4129 = vadd.f32 %v1760, %v4128
    %v4130 = vpop.f32.mrb[0].mxu0
    %v4131 = vadd.f32 %v1756, %v4130
    %v4132 = vpop.f32.mrb[0].mxu0
    %v4133 = vadd.f32 %v1760, %v4132
    %4134 = vdwg.mxu0
    %4135 = vmatprep.subr.bf16.mxu0 %v3309
    %4136 = vmatpush1.bf16.msra.mxu0 %v3308
    %4137 = vmatprep.subr.bf16.mxu0 %v3316
    %4138 = vmatpush1.bf16.msra.mxu0 %v3315
    %4139 = vmatprep.subr.bf16.mxu0 %v3323
    %4140 = vmatpush1.bf16.msra.mxu0 %v3322
    %4141 = vmatprep.subr.bf16.mxu0 %v3330
    %4142 = vmatpush1.bf16.msra.mxu0 %v3329
    %4143 = vmatprep.subr.bf16.mxu0 %v3337
    %4144 = vmatpush1.bf16.msra.mxu0 %v3336
    %4145 = vmatprep.subr.bf16.mxu0 %v3344
    %4146 = vmatpush1.bf16.msra.mxu0 %v3343
    %4147 = vmatprep.subr.bf16.mxu0 %v3351
    %4148 = vmatpush1.bf16.msra.mxu0 %v3350
    %4149 = vmatprep.subr.bf16.mxu0 %v3358
    %4150 = vmatpush1.bf16.msra.mxu0 %v3357
    %4151 = vmatprep.subr.bf16.mxu0 %v3365
    %4152 = vmatpush1.bf16.msra.mxu0 %v3364
    %4153 = vmatprep.subr.bf16.mxu0 %v3372
    %4154 = vmatpush1.bf16.msra.mxu0 %v3371
    %4155 = vmatprep.subr.bf16.mxu0 %v3379
    %4156 = vmatpush1.bf16.msra.mxu0 %v3378
    %4157 = vmatprep.subr.bf16.mxu0 %v3386
    %4158 = vmatpush1.bf16.msra.mxu0 %v3385
    %4159 = vmatprep.subr.bf16.mxu0 %v3393
    %4160 = vmatpush1.bf16.msra.mxu0 %v3392
    %4161 = vmatprep.subr.bf16.mxu0 %v3400
    %4162 = vmatpush1.bf16.msra.mxu0 %v3399
    %4163 = vmatprep.subr.bf16.mxu0 %v3407
    %4164 = vmatpush1.bf16.msra.mxu0 %v3406
    %4165 = vmatprep.subr.bf16.mxu0 %v3414
    %4166 = vmatpush1.bf16.msra.mxu0 %v3413
    %4167 = vmatprep.mubr.bf16.mxu0 %v1234
    %4168 = vmatmul.mubr.bf16.gmra.mrb[0].mxu0 %v1233
    %v4169 = vpop.f32.mrb[0].mxu0
    %v4170 = vadd.f32 %v4127, %v4169
    %v4171 = vpop.f32.mrb[0].mxu0
    %v4172 = vadd.f32 %v4129, %v4171
    %v4173 = vpop.f32.mrb[0].mxu0
    %v4174 = vadd.f32 %v4131, %v4173
    %v4175 = vpop.f32.mrb[0].mxu0
    %v4176 = vadd.f32 %v4133, %v4175
    %4177 = vdwg.mxu0
    %4178 = vmatprep.subr.bf16.mxu0 %v3421
    %4179 = vmatpush1.bf16.msra.mxu0 %v3420
    %4180 = vmatprep.subr.bf16.mxu0 %v3428
    %4181 = vmatpush1.bf16.msra.mxu0 %v3427
    %4182 = vmatprep.subr.bf16.mxu0 %v3435
    %4183 = vmatpush1.bf16.msra.mxu0 %v3434
    %4184 = vmatprep.subr.bf16.mxu0 %v3442
    %4185 = vmatpush1.bf16.msra.mxu0 %v3441
    %4186 = vmatprep.subr.bf16.mxu0 %v3449
    %4187 = vmatpush1.bf16.msra.mxu0 %v3448
    %4188 = vmatprep.subr.bf16.mxu0 %v3456
    %4189 = vmatpush1.bf16.msra.mxu0 %v3455
    %4190 = vmatprep.subr.bf16.mxu0 %v3463
    %4191 = vmatpush1.bf16.msra.mxu0 %v3462
    %4192 = vmatprep.subr.bf16.mxu0 %v3470
    %4193 = vmatpush1.bf16.msra.mxu0 %v3469
    %4194 = vmatprep.subr.bf16.mxu0 %v3477
    %4195 = vmatpush1.bf16.msra.mxu0 %v3476
    %4196 = vmatprep.subr.bf16.mxu0 %v3484
    %4197 = vmatpush1.bf16.msra.mxu0 %v3483
    %4198 = vmatprep.subr.bf16.mxu0 %v3491
    %4199 = vmatpush1.bf16.msra.mxu0 %v3490
    %4200 = vmatprep.subr.bf16.mxu0 %v3498
    %4201 = vmatpush1.bf16.msra.mxu0 %v3497
    %4202 = vmatprep.subr.bf16.mxu0 %v3505
    %4203 = vmatpush1.bf16.msra.mxu0 %v3504
    %4204 = vmatprep.subr.bf16.mxu0 %v3512
    %4205 = vmatpush1.bf16.msra.mxu0 %v3511
    %4206 = vmatprep.subr.bf16.mxu0 %v3519
    %4207 = vmatpush1.bf16.msra.mxu0 %v3518
    %4208 = vmatprep.subr.bf16.mxu0 %v3526
    %4209 = vmatpush1.bf16.msra.mxu0 %v3525
    %4210 = vmatprep.mubr.bf16.mxu0 %v1236
    %4211 = vmatmul.mubr.bf16.gmra.mrb[0].mxu0 %v1235
    %v4212 = vpop.f32.mrb[0].mxu0
    %v4213 = vadd.f32 %v4170, %v4212
    %v4214 = vpop.f32.mrb[0].mxu0
    %v4215 = vadd.f32 %v4172, %v4214
    %v4216 = vpop.f32.mrb[0].mxu0
    %v4217 = vadd.f32 %v4174, %v4216
    %v4218 = vpop.f32.mrb[0].mxu0
    %v4219 = vadd.f32 %v4176, %v4218
    %4220 = vdwg.mxu0
    %4221 = vmatprep.subr.bf16.mxu0 %v3533
    %4222 = vmatpush1.bf16.msra.mxu0 %v3532
    %4223 = vmatprep.subr.bf16.mxu0 %v3540
    %4224 = vmatpush1.bf16.msra.mxu0 %v3539
    %4225 = vmatprep.subr.bf16.mxu0 %v3547
    %4226 = vmatpush1.bf16.msra.mxu0 %v3546
    %4227 = vmatprep.subr.bf16.mxu0 %v3554
    %4228 = vmatpush1.bf16.msra.mxu0 %v3553
    %4229 = vmatprep.subr.bf16.mxu0 %v3561
    %4230 = vmatpush1.bf16.msra.mxu0 %v3560
    %4231 = vmatprep.subr.bf16.mxu0 %v3568
    %4232 = vmatpush1.bf16.msra.mxu0 %v3567
    %4233 = vmatprep.subr.bf16.mxu0 %v3575
    %4234 = vmatpush1.bf16.msra.mxu0 %v3574
    %4235 = vmatprep.subr.bf16.mxu0 %v3582
    %4236 = vmatpush1.bf16.msra.mxu0 %v3581
    %4237 = vmatprep.subr.bf16.mxu0 %v3589
    %4238 = vmatpush1.bf16.msra.mxu0 %v3588
    %4239 = vmatprep.subr.bf16.mxu0 %v3596
    %4240 = vmatpush1.bf16.msra.mxu0 %v3595
    %4241 = vmatprep.subr.bf16.mxu0 %v3603
    %4242 = vmatpush1.bf16.msra.mxu0 %v3602
    %4243 = vmatprep.subr.bf16.mxu0 %v3610
    %4244 = vmatpush1.bf16.msra.mxu0 %v3609
    %4245 = vmatprep.subr.bf16.mxu0 %v3617
    %4246 = vmatpush1.bf16.msra.mxu0 %v3616
    %4247 = vmatprep.subr.bf16.mxu0 %v3624
    %4248 = vmatpush1.bf16.msra.mxu0 %v3623
    %4249 = vmatprep.subr.bf16.mxu0 %v3631
    %4250 = vmatpush1.bf16.msra.mxu0 %v3630
    %4251 = vmatprep.subr.bf16.mxu0 %v3638
    %4252 = vmatpush1.bf16.msra.mxu0 %v3637
    %4253 = vmatprep.mubr.bf16.mxu0 %v1238
    %4254 = vmatmul.mubr.bf16.gmra.mrb[0].mxu0 %v1237
    %v4255 = vpop.f32.mrb[0].mxu0
    %v4256 = vadd.f32 %v4213, %v4255
    %v4257 = vpop.f32.mrb[0].mxu0
    %v4258 = vadd.f32 %v4215, %v4257
    %v4259 = vpop.f32.mrb[0].mxu0
    %v4260 = vadd.f32 %v4217, %v4259
    %v4261 = vpop.f32.mrb[0].mxu0
    %v4262 = vadd.f32 %v4219, %v4261
    %4263 = vdwg.mxu0
    %4264 = vmatprep.subr.bf16.mxu0 %v3199
    %4265 = vmatpush1.bf16.msra.mxu0 %v3198
    %4266 = vmatprep.subr.bf16.mxu0 %v3206
    %4267 = vmatpush1.bf16.msra.mxu0 %v3205
    %4268 = vmatprep.subr.bf16.mxu0 %v3213
    %4269 = vmatpush1.bf16.msra.mxu0 %v3212
    %4270 = vmatprep.subr.bf16.mxu0 %v3220
    %4271 = vmatpush1.bf16.msra.mxu0 %v3219
    %4272 = vmatprep.subr.bf16.mxu0 %v3227
    %4273 = vmatpush1.bf16.msra.mxu0 %v3226
    %4274 = vmatprep.subr.bf16.mxu0 %v3234
    %4275 = vmatpush1.bf16.msra.mxu0 %v3233
    %4276 = vmatprep.subr.bf16.mxu0 %v3241
    %4277 = vmatpush1.bf16.msra.mxu0 %v3240
    %4278 = vmatprep.subr.bf16.mxu0 %v3248
    %4279 = vmatpush1.bf16.msra.mxu0 %v3247
    %4280 = vmatprep.subr.bf16.mxu0 %v3255
    %4281 = vmatpush1.bf16.msra.mxu0 %v3254
    %4282 = vmatprep.subr.bf16.mxu0 %v3262
    %4283 = vmatpush1.bf16.msra.mxu0 %v3261
    %4284 = vmatprep.subr.bf16.mxu0 %v3269
    %4285 = vmatpush1.bf16.msra.mxu0 %v3268
    %4286 = vmatprep.subr.bf16.mxu0 %v3276
    %4287 = vmatpush1.bf16.msra.mxu0 %v3275
    %4288 = vmatprep.subr.bf16.mxu0 %v3283
    %4289 = vmatpush1.bf16.msra.mxu0 %v3282
    %4290 = vmatprep.subr.bf16.mxu0 %v3290
    %4291 = vmatpush1.bf16.msra.mxu0 %v3289
    %4292 = vmatprep.subr.bf16.mxu0 %v3297
    %4293 = vmatpush1.bf16.msra.mxu0 %v3296
    %4294 = vmatprep.subr.bf16.mxu0 %v3304
    %4295 = vmatpush1.bf16.msra.mxu0 %v3303
    %4296 = vmatprep.mubr.bf16.mxu0 %v1232
    %4297 = vmatmul.mubr.bf16.gmra.mrb[0].mxu0 %v1231
    %v4298 = vpop.f32.mrb[0].mxu0
    %v4299 = vadd.f32 %v1764, %v4298
    %v4300 = vpop.f32.mrb[0].mxu0
    %v4301 = vadd.f32 %v1768, %v4300
    %v4302 = vpop.f32.mrb[0].mxu0
    %v4303 = vadd.f32 %v1764, %v4302
    %v4304 = vpop.f32.mrb[0].mxu0
    %v4305 = vadd.f32 %v1768, %v4304
    %4306 = vdwg.mxu0
    %4307 = vmatprep.subr.bf16.mxu0 %v3311
    %4308 = vmatpush1.bf16.msra.mxu0 %v3310
    %4309 = vmatprep.subr.bf16.mxu0 %v3318
    %4310 = vmatpush1.bf16.msra.mxu0 %v3317
    %4311 = vmatprep.subr.bf16.mxu0 %v3325
    %4312 = vmatpush1.bf16.msra.mxu0 %v3324
    %4313 = vmatprep.subr.bf16.mxu0 %v3332
    %4314 = vmatpush1.bf16.msra.mxu0 %v3331
    %4315 = vmatprep.subr.bf16.mxu0 %v3339
    %4316 = vmatpush1.bf16.msra.mxu0 %v3338
    %4317 = vmatprep.subr.bf16.mxu0 %v3346
    %4318 = vmatpush1.bf16.msra.mxu0 %v3345
    %4319 = vmatprep.subr.bf16.mxu0 %v3353
    %4320 = vmatpush1.bf16.msra.mxu0 %v3352
    %4321 = vmatprep.subr.bf16.mxu0 %v3360
    %4322 = vmatpush1.bf16.msra.mxu0 %v3359
    %4323 = vmatprep.subr.bf16.mxu0 %v3367
    %4324 = vmatpush1.bf16.msra.mxu0 %v3366
    %4325 = vmatprep.subr.bf16.mxu0 %v3374
    %4326 = vmatpush1.bf16.msra.mxu0 %v3373
    %4327 = vmatprep.subr.bf16.mxu0 %v3381
    %4328 = vmatpush1.bf16.msra.mxu0 %v3380
    %4329 = vmatprep.subr.bf16.mxu0 %v3388
    %4330 = vmatpush1.bf16.msra.mxu0 %v3387
    %4331 = vmatprep.subr.bf16.mxu0 %v3395
    %4332 = vmatpush1.bf16.msra.mxu0 %v3394
    %4333 = vmatprep.subr.bf16.mxu0 %v3402
    %4334 = vmatpush1.bf16.msra.mxu0 %v3401
    %4335 = vmatprep.subr.bf16.mxu0 %v3409
    %4336 = vmatpush1.bf16.msra.mxu0 %v3408
    %4337 = vmatprep.subr.bf16.mxu0 %v3416
    %4338 = vmatpush1.bf16.msra.mxu0 %v3415
    %4339 = vmatprep.mubr.bf16.mxu0 %v1234
    %4340 = vmatmul.mubr.bf16.gmra.mrb[0].mxu0 %v1233
    %v4341 = vpop.f32.mrb[0].mxu0
    %v4342 = vadd.f32 %v4299, %v4341
    %v4343 = vpop.f32.mrb[0].mxu0
    %v4344 = vadd.f32 %v4301, %v4343
    %v4345 = vpop.f32.mrb[0].mxu0
    %v4346 = vadd.f32 %v4303, %v4345
    %v4347 = vpop.f32.mrb[0].mxu0
    %v4348 = vadd.f32 %v4305, %v4347
    %4349 = vdwg.mxu0
    %4350 = vmatprep.subr.bf16.mxu0 %v3423
    %4351 = vmatpush1.bf16.msra.mxu0 %v3422
    %4352 = vmatprep.subr.bf16.mxu0 %v3430
    %4353 = vmatpush1.bf16.msra.mxu0 %v3429
    %4354 = vmatprep.subr.bf16.mxu0 %v3437
    %4355 = vmatpush1.bf16.msra.mxu0 %v3436
    %4356 = vmatprep.subr.bf16.mxu0 %v3444
    %4357 = vmatpush1.bf16.msra.mxu0 %v3443
    %4358 = vmatprep.subr.bf16.mxu0 %v3451
    %4359 = vmatpush1.bf16.msra.mxu0 %v3450
    %4360 = vmatprep.subr.bf16.mxu0 %v3458
    %4361 = vmatpush1.bf16.msra.mxu0 %v3457
    %4362 = vmatprep.subr.bf16.mxu0 %v3465
    %4363 = vmatpush1.bf16.msra.mxu0 %v3464
    %4364 = vmatprep.subr.bf16.mxu0 %v3472
    %4365 = vmatpush1.bf16.msra.mxu0 %v3471
    %4366 = vmatprep.subr.bf16.mxu0 %v3479
    %4367 = vmatpush1.bf16.msra.mxu0 %v3478
    %4368 = vmatprep.subr.bf16.mxu0 %v3486
    %4369 = vmatpush1.bf16.msra.mxu0 %v3485
    %4370 = vmatprep.subr.bf16.mxu0 %v3493
    %4371 = vmatpush1.bf16.msra.mxu0 %v3492
    %4372 = vmatprep.subr.bf16.mxu0 %v3500
    %4373 = vmatpush1.bf16.msra.mxu0 %v3499
    %4374 = vmatprep.subr.bf16.mxu0 %v3507
    %4375 = vmatpush1.bf16.msra.mxu0 %v3506
    %4376 = vmatprep.subr.bf16.mxu0 %v3514
    %4377 = vmatpush1.bf16.msra.mxu0 %v3513
    %4378 = vmatprep.subr.bf16.mxu0 %v3521
    %4379 = vmatpush1.bf16.msra.mxu0 %v3520
    %4380 = vmatprep.subr.bf16.mxu0 %v3528
    %4381 = vmatpush1.bf16.msra.mxu0 %v3527
    %4382 = vmatprep.mubr.bf16.mxu0 %v1236
    %4383 = vmatmul.mubr.bf16.gmra.mrb[0].mxu0 %v1235
    %v4384 = vpop.f32.mrb[0].mxu0
    %v4385 = vadd.f32 %v4342, %v4384
    %v4386 = vpop.f32.mrb[0].mxu0
    %v4387 = vadd.f32 %v4344, %v4386
    %v4388 = vpop.f32.mrb[0].mxu0
    %v4389 = vadd.f32 %v4346, %v4388
    %v4390 = vpop.f32.mrb[0].mxu0
    %v4391 = vadd.f32 %v4348, %v4390
    %4392 = vdwg.mxu0
    %4393 = vmatprep.subr.bf16.mxu0 %v3535
    %4394 = vmatpush1.bf16.msra.mxu0 %v3534
    %4395 = vmatprep.subr.bf16.mxu0 %v3542
    %4396 = vmatpush1.bf16.msra.mxu0 %v3541
    %4397 = vmatprep.subr.bf16.mxu0 %v3549
    %4398 = vmatpush1.bf16.msra.mxu0 %v3548
    %4399 = vmatprep.subr.bf16.mxu0 %v3556
    %4400 = vmatpush1.bf16.msra.mxu0 %v3555
    %4401 = vmatprep.subr.bf16.mxu0 %v3563
    %4402 = vmatpush1.bf16.msra.mxu0 %v3562
    %4403 = vmatprep.subr.bf16.mxu0 %v3570
    %4404 = vmatpush1.bf16.msra.mxu0 %v3569
    %4405 = vmatprep.subr.bf16.mxu0 %v3577
    %4406 = vmatpush1.bf16.msra.mxu0 %v3576
    %4407 = vmatprep.subr.bf16.mxu0 %v3584
    %4408 = vmatpush1.bf16.msra.mxu0 %v3583
    %4409 = vmatprep.subr.bf16.mxu0 %v3591
    %4410 = vmatpush1.bf16.msra.mxu0 %v3590
    %4411 = vmatprep.subr.bf16.mxu0 %v3598
    %4412 = vmatpush1.bf16.msra.mxu0 %v3597
    %4413 = vmatprep.subr.bf16.mxu0 %v3605
    %4414 = vmatpush1.bf16.msra.mxu0 %v3604
    %4415 = vmatprep.subr.bf16.mxu0 %v3612
    %4416 = vmatpush1.bf16.msra.mxu0 %v3611
    %4417 = vmatprep.subr.bf16.mxu0 %v3619
    %4418 = vmatpush1.bf16.msra.mxu0 %v3618
    %4419 = vmatprep.subr.bf16.mxu0 %v3626
    %4420 = vmatpush1.bf16.msra.mxu0 %v3625
    %4421 = vmatprep.subr.bf16.mxu0 %v3633
    %4422 = vmatpush1.bf16.msra.mxu0 %v3632
    %4423 = vmatprep.subr.bf16.mxu0 %v3640
    %4424 = vmatpush1.bf16.msra.mxu0 %v3639
    %4425 = vmatprep.mubr.bf16.mxu0 %v1238
    %4426 = vmatmul.mubr.bf16.gmra.mrb[0].mxu0 %v1237
    %v4427 = vpop.f32.mrb[0].mxu0
    %v4428 = vadd.f32 %v4385, %v4427
    %v4429 = vpop.f32.mrb[0].mxu0
    %v4430 = vadd.f32 %v4387, %v4429
    %v4431 = vpop.f32.mrb[0].mxu0
    %v4432 = vadd.f32 %v4389, %v4431
    %v4433 = vpop.f32.mrb[0].mxu0
    %v4434 = vadd.f32 %v4391, %v4433
    %4435 = vdwg.mxu0
    %4436 = vmatprep.subr.bf16.mxu0 %v3201
    %4437 = vmatpush1.bf16.msra.mxu0 %v3200
    %4438 = vmatprep.subr.bf16.mxu0 %v3208
    %4439 = vmatpush1.bf16.msra.mxu0 %v3207
    %4440 = vmatprep.subr.bf16.mxu0 %v3215
    %4441 = vmatpush1.bf16.msra.mxu0 %v3214
    %4442 = vmatprep.subr.bf16.mxu0 %v3222
    %4443 = vmatpush1.bf16.msra.mxu0 %v3221
    %4444 = vmatprep.subr.bf16.mxu0 %v3229
    %4445 = vmatpush1.bf16.msra.mxu0 %v3228
    %4446 = vmatprep.subr.bf16.mxu0 %v3236
    %4447 = vmatpush1.bf16.msra.mxu0 %v3235
    %4448 = vmatprep.subr.bf16.mxu0 %v3243
    %4449 = vmatpush1.bf16.msra.mxu0 %v3242
    %4450 = vmatprep.subr.bf16.mxu0 %v3250
    %4451 = vmatpush1.bf16.msra.mxu0 %v3249
    %4452 = vmatprep.subr.bf16.mxu0 %v3257
    %4453 = vmatpush1.bf16.msra.mxu0 %v3256
    %4454 = vmatprep.subr.bf16.mxu0 %v3264
    %4455 = vmatpush1.bf16.msra.mxu0 %v3263
    %4456 = vmatprep.subr.bf16.mxu0 %v3271
    %4457 = vmatpush1.bf16.msra.mxu0 %v3270
    %4458 = vmatprep.subr.bf16.mxu0 %v3278
    %4459 = vmatpush1.bf16.msra.mxu0 %v3277
    %4460 = vmatprep.subr.bf16.mxu0 %v3285
    %4461 = vmatpush1.bf16.msra.mxu0 %v3284
    %4462 = vmatprep.subr.bf16.mxu0 %v3292
    %4463 = vmatpush1.bf16.msra.mxu0 %v3291
    %4464 = vmatprep.subr.bf16.mxu0 %v3299
    %4465 = vmatpush1.bf16.msra.mxu0 %v3298
    %4466 = vmatprep.subr.bf16.mxu0 %v3306
    %4467 = vmatpush1.bf16.msra.mxu0 %v3305
    %4468 = vmatprep.mubr.bf16.mxu0 %v1232
    %4469 = vmatmul.mubr.bf16.gmra.mrb[0].mxu0 %v1231
    %v4470 = vpop.f32.mrb[0].mxu0
    %v4471 = vadd.f32 %v1772, %v4470
    %v4472 = vpop.f32.mrb[0].mxu0
    %v4473 = vadd.f32 %v1776, %v4472
    %v4474 = vpop.f32.mrb[0].mxu0
    %v4475 = vadd.f32 %v1772, %v4474
    %v4476 = vpop.f32.mrb[0].mxu0
    %v4477 = vadd.f32 %v1776, %v4476
    %4478 = vdwg.mxu0
    %4479 = vmatprep.subr.bf16.mxu0 %v3313
    %4480 = vmatpush1.bf16.msra.mxu0 %v3312
    %4481 = vmatprep.subr.bf16.mxu0 %v3320
    %4482 = vmatpush1.bf16.msra.mxu0 %v3319
    %4483 = vmatprep.subr.bf16.mxu0 %v3327
    %4484 = vmatpush1.bf16.msra.mxu0 %v3326
    %4485 = vmatprep.subr.bf16.mxu0 %v3334
    %4486 = vmatpush1.bf16.msra.mxu0 %v3333
    %4487 = vmatprep.subr.bf16.mxu0 %v3341
    %4488 = vmatpush1.bf16.msra.mxu0 %v3340
    %4489 = vmatprep.subr.bf16.mxu0 %v3348
    %4490 = vmatpush1.bf16.msra.mxu0 %v3347
    %4491 = vmatprep.subr.bf16.mxu0 %v3355
    %4492 = vmatpush1.bf16.msra.mxu0 %v3354
    %4493 = vmatprep.subr.bf16.mxu0 %v3362
    %4494 = vmatpush1.bf16.msra.mxu0 %v3361
    %4495 = vmatprep.subr.bf16.mxu0 %v3369
    %4496 = vmatpush1.bf16.msra.mxu0 %v3368
    %4497 = vmatprep.subr.bf16.mxu0 %v3376
    %4498 = vmatpush1.bf16.msra.mxu0 %v3375
    %4499 = vmatprep.subr.bf16.mxu0 %v3383
    %4500 = vmatpush1.bf16.msra.mxu0 %v3382
    %4501 = vmatprep.subr.bf16.mxu0 %v3390
    %4502 = vmatpush1.bf16.msra.mxu0 %v3389
    %4503 = vmatprep.subr.bf16.mxu0 %v3397
    %4504 = vmatpush1.bf16.msra.mxu0 %v3396
    %4505 = vmatprep.subr.bf16.mxu0 %v3404
    %4506 = vmatpush1.bf16.msra.mxu0 %v3403
    %4507 = vmatprep.subr.bf16.mxu0 %v3411
    %4508 = vmatpush1.bf16.msra.mxu0 %v3410
    %4509 = vmatprep.subr.bf16.mxu0 %v3418
    %4510 = vmatpush1.bf16.msra.mxu0 %v3417
    %4511 = vmatprep.mubr.bf16.mxu0 %v1234
    %4512 = vmatmul.mubr.bf16.gmra.mrb[0].mxu0 %v1233
    %v4513 = vpop.f32.mrb[0].mxu0
    %v4514 = vadd.f32 %v4471, %v4513
    %v4515 = vpop.f32.mrb[0].mxu0
    %v4516 = vadd.f32 %v4473, %v4515
    %v4517 = vpop.f32.mrb[0].mxu0
    %v4518 = vadd.f32 %v4475, %v4517
    %v4519 = vpop.f32.mrb[0].mxu0
    %v4520 = vadd.f32 %v4477, %v4519
    %4521 = vdwg.mxu0
    %4522 = vmatprep.subr.bf16.mxu0 %v3425
    %4523 = vmatpush1.bf16.msra.mxu0 %v3424
    %4524 = vmatprep.subr.bf16.mxu0 %v3432
    %4525 = vmatpush1.bf16.msra.mxu0 %v3431
    %4526 = vmatprep.subr.bf16.mxu0 %v3439
    %4527 = vmatpush1.bf16.msra.mxu0 %v3438
    %4528 = vmatprep.subr.bf16.mxu0 %v3446
    %4529 = vmatpush1.bf16.msra.mxu0 %v3445
    %4530 = vmatprep.subr.bf16.mxu0 %v3453
    %4531 = vmatpush1.bf16.msra.mxu0 %v3452
    %4532 = vmatprep.subr.bf16.mxu0 %v3460
    %4533 = vmatpush1.bf16.msra.mxu0 %v3459
    %4534 = vmatprep.subr.bf16.mxu0 %v3467
    %4535 = vmatpush1.bf16.msra.mxu0 %v3466
    %4536 = vmatprep.subr.bf16.mxu0 %v3474
    %4537 = vmatpush1.bf16.msra.mxu0 %v3473
    %4538 = vmatprep.subr.bf16.mxu0 %v3481
    %4539 = vmatpush1.bf16.msra.mxu0 %v3480
    %4540 = vmatprep.subr.bf16.mxu0 %v3488
    %4541 = vmatpush1.bf16.msra.mxu0 %v3487
    %4542 = vmatprep.subr.bf16.mxu0 %v3495
    %4543 = vmatpush1.bf16.msra.mxu0 %v3494
    %4544 = vmatprep.subr.bf16.mxu0 %v3502
    %4545 = vmatpush1.bf16.msra.mxu0 %v3501
    %4546 = vmatprep.subr.bf16.mxu0 %v3509
    %4547 = vmatpush1.bf16.msra.mxu0 %v3508
    %4548 = vmatprep.subr.bf16.mxu0 %v3516
    %4549 = vmatpush1.bf16.msra.mxu0 %v3515
    %4550 = vmatprep.subr.bf16.mxu0 %v3523
    %4551 = vmatpush1.bf16.msra.mxu0 %v3522
    %4552 = vmatprep.subr.bf16.mxu0 %v3530
    %4553 = vmatpush1.bf16.msra.mxu0 %v3529
    %4554 = vmatprep.mubr.bf16.mxu0 %v1236
    %4555 = vmatmul.mubr.bf16.gmra.mrb[0].mxu0 %v1235
    %v4556 = vpop.f32.mrb[0].mxu0
    %v4557 = vadd.f32 %v4514, %v4556
    %v4558 = vpop.f32.mrb[0].mxu0
    %v4559 = vadd.f32 %v4516, %v4558
    %v4560 = vpop.f32.mrb[0].mxu0
    %v4561 = vadd.f32 %v4518, %v4560
    %v4562 = vpop.f32.mrb[0].mxu0
    %v4563 = vadd.f32 %v4520, %v4562
    %4564 = vdwg.mxu0
    %4565 = vmatprep.subr.bf16.mxu0 %v3537
    %4566 = vmatpush1.bf16.msra.mxu0 %v3536
    %4567 = vmatprep.subr.bf16.mxu0 %v3544
    %4568 = vmatpush1.bf16.msra.mxu0 %v3543
    %4569 = vmatprep.subr.bf16.mxu0 %v3551
    %4570 = vmatpush1.bf16.msra.mxu0 %v3550
    %4571 = vmatprep.subr.bf16.mxu0 %v3558
    %4572 = vmatpush1.bf16.msra.mxu0 %v3557
    %4573 = vmatprep.subr.bf16.mxu0 %v3565
    %4574 = vmatpush1.bf16.msra.mxu0 %v3564
    %4575 = vmatprep.subr.bf16.mxu0 %v3572
    %4576 = vmatpush1.bf16.msra.mxu0 %v3571
    %4577 = vmatprep.subr.bf16.mxu0 %v3579
    %4578 = vmatpush1.bf16.msra.mxu0 %v3578
    %4579 = vmatprep.subr.bf16.mxu0 %v3586
    %4580 = vmatpush1.bf16.msra.mxu0 %v3585
    %4581 = vmatprep.subr.bf16.mxu0 %v3593
    %4582 = vmatpush1.bf16.msra.mxu0 %v3592
    %4583 = vmatprep.subr.bf16.mxu0 %v3600
    %4584 = vmatpush1.bf16.msra.mxu0 %v3599
    %4585 = vmatprep.subr.bf16.mxu0 %v3607
    %4586 = vmatpush1.bf16.msra.mxu0 %v3606
    %4587 = vmatprep.subr.bf16.mxu0 %v3614
    %4588 = vmatpush1.bf16.msra.mxu0 %v3613
    %4589 = vmatprep.subr.bf16.mxu0 %v3621
    %4590 = vmatpush1.bf16.msra.mxu0 %v3620
    %4591 = vmatprep.subr.bf16.mxu0 %v3628
    %4592 = vmatpush1.bf16.msra.mxu0 %v3627
    %4593 = vmatprep.subr.bf16.mxu0 %v3635
    %4594 = vmatpush1.bf16.msra.mxu0 %v3634
    %4595 = vmatprep.subr.bf16.mxu0 %v3642
    %4596 = vmatpush1.bf16.msra.mxu0 %v3641
    %4597 = vmatprep.mubr.bf16.mxu0 %v1238
    %4598 = vmatmul.mubr.bf16.gmra.mrb[0].mxu0 %v1237
    %v4599 = vpop.f32.mrb[0].mxu0
    %v4600 = vadd.f32 %v4557, %v4599
    %v4601 = vpop.f32.mrb[0].mxu0
    %v4602 = vadd.f32 %v4559, %v4601
    %v4603 = vpop.f32.mrb[0].mxu0
    %v4604 = vadd.f32 %v4561, %v4603
    %v4605 = vpop.f32.mrb[0].mxu0
    %v4606 = vadd.f32 %v4563, %v4605
    %4607 = vdwg.mxu0
    %4608 = vmatprep.subr.bf16.mxu0 0
    %4609 = vmatpush1.bf16.msra.mxu0 %v3202
    %4610 = vmatprep.subr.bf16.mxu0 0
    %4611 = vmatpush1.bf16.msra.mxu0 %v3209
    %4612 = vmatprep.subr.bf16.mxu0 0
    %4613 = vmatpush1.bf16.msra.mxu0 %v3216
    %4614 = vmatprep.subr.bf16.mxu0 0
    %4615 = vmatpush1.bf16.msra.mxu0 %v3223
    %4616 = vmatprep.subr.bf16.mxu0 0
    %4617 = vmatpush1.bf16.msra.mxu0 %v3230
    %4618 = vmatprep.subr.bf16.mxu0 0
    %4619 = vmatpush1.bf16.msra.mxu0 %v3237
    %4620 = vmatprep.subr.bf16.mxu0 0
    %4621 = vmatpush1.bf16.msra.mxu0 %v3244
    %4622 = vmatprep.subr.bf16.mxu0 0
    %4623 = vmatpush1.bf16.msra.mxu0 %v3251
    %4624 = vmatprep.subr.bf16.mxu0 0
    %4625 = vmatpush1.bf16.msra.mxu0 %v3258
    %4626 = vmatprep.subr.bf16.mxu0 0
    %4627 = vmatpush1.bf16.msra.mxu0 %v3265
    %4628 = vmatprep.subr.bf16.mxu0 0
    %4629 = vmatpush1.bf16.msra.mxu0 %v3272
    %4630 = vmatprep.subr.bf16.mxu0 0
    %4631 = vmatpush1.bf16.msra.mxu0 %v3279
    %4632 = vmatprep.subr.bf16.mxu0 0
    %4633 = vmatpush1.bf16.msra.mxu0 %v3286
    %4634 = vmatprep.subr.bf16.mxu0 0
    %4635 = vmatpush1.bf16.msra.mxu0 %v3293
    %4636 = vmatprep.subr.bf16.mxu0 0
    %4637 = vmatpush1.bf16.msra.mxu0 %v3300
    %4638 = vmatprep.subr.bf16.mxu0 0
    %4639 = vmatpush1.bf16.msra.mxu0 %v3307
    %4640 = vmatprep.mubr.bf16.mxu0 %v1232
    %4641 = vmatmul.mubr.bf16.gmra.mrb[0].mxu0 %v1231
    %v4642 = vpop.f32.mrb[0].mxu0
    %v4643 = vadd.f32 %v1780, %v4642
    %v4644 = vpop.f32.mrb[0].mxu0
    %v4645 = vpop.f32.mrb[0].mxu0
    %v4646 = vadd.f32 %v1780, %v4645
    %v4647 = vpop.f32.mrb[0].mxu0
    %4648 = vdwg.mxu0
    %4649 = vmatprep.subr.bf16.mxu0 0
    %4650 = vmatpush1.bf16.msra.mxu0 %v3314
    %4651 = vmatprep.subr.bf16.mxu0 0
    %4652 = vmatpush1.bf16.msra.mxu0 %v3321
    %4653 = vmatprep.subr.bf16.mxu0 0
    %4654 = vmatpush1.bf16.msra.mxu0 %v3328
    %4655 = vmatprep.subr.bf16.mxu0 0
    %4656 = vmatpush1.bf16.msra.mxu0 %v3335
    %4657 = vmatprep.subr.bf16.mxu0 0
    %4658 = vmatpush1.bf16.msra.mxu0 %v3342
    %4659 = vmatprep.subr.bf16.mxu0 0
    %4660 = vmatpush1.bf16.msra.mxu0 %v3349
    %4661 = vmatprep.subr.bf16.mxu0 0
    %4662 = vmatpush1.bf16.msra.mxu0 %v3356
    %4663 = vmatprep.subr.bf16.mxu0 0
    %4664 = vmatpush1.bf16.msra.mxu0 %v3363
    %4665 = vmatprep.subr.bf16.mxu0 0
    %4666 = vmatpush1.bf16.msra.mxu0 %v3370
    %4667 = vmatprep.subr.bf16.mxu0 0
    %4668 = vmatpush1.bf16.msra.mxu0 %v3377
    %4669 = vmatprep.subr.bf16.mxu0 0
    %4670 = vmatpush1.bf16.msra.mxu0 %v3384
    %4671 = vmatprep.subr.bf16.mxu0 0
    %4672 = vmatpush1.bf16.msra.mxu0 %v3391
    %4673 = vmatprep.subr.bf16.mxu0 0
    %4674 = vmatpush1.bf16.msra.mxu0 %v3398
    %4675 = vmatprep.subr.bf16.mxu0 0
    %4676 = vmatpush1.bf16.msra.mxu0 %v3405
    %4677 = vmatprep.subr.bf16.mxu0 0
    %4678 = vmatpush1.bf16.msra.mxu0 %v3412
    %4679 = vmatprep.subr.bf16.mxu0 0
    %4680 = vmatpush1.bf16.msra.mxu0 %v3419
    %4681 = vmatprep.mubr.bf16.mxu0 %v1234
    %4682 = vmatmul.mubr.bf16.gmra.mrb[0].mxu0 %v1233
    %v4683 = vpop.f32.mrb[0].mxu0
    %v4684 = vadd.f32 %v4643, %v4683
    %v4685 = vpop.f32.mrb[0].mxu0
    %v4686 = vpop.f32.mrb[0].mxu0
    %v4687 = vadd.f32 %v4646, %v4686
    %v4688 = vpop.f32.mrb[0].mxu0
    %4689 = vdwg.mxu0
    %4690 = vmatprep.subr.bf16.mxu0 0
    %4691 = vmatpush1.bf16.msra.mxu0 %v3426
    %4692 = vmatprep.subr.bf16.mxu0 0
    %4693 = vmatpush1.bf16.msra.mxu0 %v3433
    %4694 = vmatprep.subr.bf16.mxu0 0
    %4695 = vmatpush1.bf16.msra.mxu0 %v3440
    %4696 = vmatprep.subr.bf16.mxu0 0
    %4697 = vmatpush1.bf16.msra.mxu0 %v3447
    %4698 = vmatprep.subr.bf16.mxu0 0
    %4699 = vmatpush1.bf16.msra.mxu0 %v3454
    %4700 = vmatprep.subr.bf16.mxu0 0
    %4701 = vmatpush1.bf16.msra.mxu0 %v3461
    %4702 = vmatprep.subr.bf16.mxu0 0
    %4703 = vmatpush1.bf16.msra.mxu0 %v3468
    %4704 = vmatprep.subr.bf16.mxu0 0
    %4705 = vmatpush1.bf16.msra.mxu0 %v3475
    %4706 = vmatprep.subr.bf16.mxu0 0
    %4707 = vmatpush1.bf16.msra.mxu0 %v3482
    %4708 = vmatprep.subr.bf16.mxu0 0
    %4709 = vmatpush1.bf16.msra.mxu0 %v3489
    %4710 = vmatprep.subr.bf16.mxu0 0
    %4711 = vmatpush1.bf16.msra.mxu0 %v3496
    %4712 = vmatprep.subr.bf16.mxu0 0
    %4713 = vmatpush1.bf16.msra.mxu0 %v3503
    %4714 = vmatprep.subr.bf16.mxu0 0
    %4715 = vmatpush1.bf16.msra.mxu0 %v3510
    %4716 = vmatprep.subr.bf16.mxu0 0
    %4717 = vmatpush1.bf16.msra.mxu0 %v3517
    %4718 = vmatprep.subr.bf16.mxu0 0
    %4719 = vmatpush1.bf16.msra.mxu0 %v3524
    %4720 = vmatprep.subr.bf16.mxu0 0
    %4721 = vmatpush1.bf16.msra.mxu0 %v3531
    %4722 = vmatprep.mubr.bf16.mxu0 %v1236
    %4723 = vmatmul.mubr.bf16.gmra.mrb[0].mxu0 %v1235
    %v4724 = vpop.f32.mrb[0].mxu0
    %v4725 = vadd.f32 %v4684, %v4724
    %v4726 = vpop.f32.mrb[0].mxu0
    %v4727 = vpop.f32.mrb[0].mxu0
    %v4728 = vadd.f32 %v4687, %v4727
    %v4729 = vpop.f32.mrb[0].mxu0
    %4730 = vdwg.mxu0
    %4731 = vmatprep.subr.bf16.mxu0 0
    %4732 = vmatpush1.bf16.msra.mxu0 %v3538
    %4733 = vmatprep.subr.bf16.mxu0 0
    %4734 = vmatpush1.bf16.msra.mxu0 %v3545
    %4735 = vmatprep.subr.bf16.mxu0 0
    %4736 = vmatpush1.bf16.msra.mxu0 %v3552
    %4737 = vmatprep.subr.bf16.mxu0 0
    %4738 = vmatpush1.bf16.msra.mxu0 %v3559
    %4739 = vmatprep.subr.bf16.mxu0 0
    %4740 = vmatpush1.bf16.msra.mxu0 %v3566
    %4741 = vmatprep.subr.bf16.mxu0 0
    %4742 = vmatpush1.bf16.msra.mxu0 %v3573
    %4743 = vmatprep.subr.bf16.mxu0 0
    %4744 = vmatpush1.bf16.msra.mxu0 %v3580
    %4745 = vmatprep.subr.bf16.mxu0 0
    %4746 = vmatpush1.bf16.msra.mxu0 %v3587
    %4747 = vmatprep.subr.bf16.mxu0 0
    %4748 = vmatpush1.bf16.msra.mxu0 %v3594
    %4749 = vmatprep.subr.bf16.mxu0 0
    %4750 = vmatpush1.bf16.msra.mxu0 %v3601
    %4751 = vmatprep.subr.bf16.mxu0 0
    %4752 = vmatpush1.bf16.msra.mxu0 %v3608
    %4753 = vmatprep.subr.bf16.mxu0 0
    %4754 = vmatpush1.bf16.msra.mxu0 %v3615
    %4755 = vmatprep.subr.bf16.mxu0 0
    %4756 = vmatpush1.bf16.msra.mxu0 %v3622
    %4757 = vmatprep.subr.bf16.mxu0 0
    %4758 = vmatpush1.bf16.msra.mxu0 %v3629
    %4759 = vmatprep.subr.bf16.mxu0 0
    %4760 = vmatpush1.bf16.msra.mxu0 %v3636
    %4761 = vmatprep.subr.bf16.mxu0 0
    %4762 = vmatpush1.bf16.msra.mxu0 %v3643
    %4763 = vmatprep.mubr.bf16.mxu0 %v1238
    %4764 = vmatmul.mubr.bf16.gmra.mrb[0].mxu0 %v1237
    %v4765 = vpop.f32.mrb[0].mxu0
    %v4766 = vadd.f32 %v4725, %v4765
    %v4767 = vpop.f32.mrb[0].mxu0
    %v4768 = vpop.f32.mrb[0].mxu0
    %v4769 = vadd.f32 %v4728, %v4768
    %v4770 = vpop.f32.mrb[0].mxu0
    %4771 = vdwg.mxu0
    %v4772 = vtanh.pop %v4256
    %v4773 = vtanh.pop %v4258
    %v4774 = vtanh.pop %v4428
    %v4775 = vtanh.pop %v4430
    %v4776 = vtanh.pop %v4600
    %v4777 = vtanh.pop %v4602
    %v4778 = vtanh.pop %v4766
    %v4779 = vtanh.pop %v4260
    %v4780 = vtanh.pop %v4262
    %v4781 = vtanh.pop %v4432
    %v4782 = vtanh.pop %v4434
    %v4783 = vtanh.pop %v4604
    %v4784 = vtanh.pop %v4606
    %v4785 = vtanh.pop %v4769
    %v4786 = vpack.c.bf16 %v4779, %v4772
    %v4787 = vpack.c.bf16 %v4780, %v4773
    %v4788 = vpack.c.bf16 %v4781, %v4774
    %v4789 = vpack.c.bf16 %v4782, %v4775
    %v4790 = vpack.c.bf16 %v4783, %v4776
    %v4791 = vpack.c.bf16 %v4784, %v4777
    %v4792 = vpack.c.bf16 %v4785, %v4778
    %v4800 = vunpack.c.l.b16 %v4786
    %v4801 = vunpack.c.l.b16 %v4787
    %v4802 = vunpack.c.l.b16 %v4788
    %v4803 = vunpack.c.l.b16 %v4789
    %v4804 = vunpack.c.l.b16 %v4790
    %v4805 = vunpack.c.l.b16 %v4791
    %v4806 = vunpack.c.l.b16 %v4792
    %v4807 = vunpack.c.h.b16 %v4786
    %v4808 = vunpack.c.h.b16 %v4787
    %v4809 = vunpack.c.h.b16 %v4788
    %v4810 = vunpack.c.h.b16 %v4789
    %v4811 = vunpack.c.h.b16 %v4790
    %v4812 = vunpack.c.h.b16 %v4791
    %v4813 = vunpack.c.h.b16 %v4792
    %v4814 = vpack.c.b16 %v4801, %v4800
    %v4815 = vpack.c.b16 %v4803, %v4802
    %v4816 = vpack.c.b16 %v4805, %v4804
    %v4817 = vpack.c.b16 %v4806, %v4806
    %v4818 = vpack.c.b16 %v4808, %v4807
    %v4819 = vpack.c.b16 %v4810, %v4809
    %v4820 = vpack.c.b16 %v4812, %v4811
    %v4821 = vpack.c.b16 %v4813, %v4813
    %4830 = vst [vmem:[#allocation2] sm:$0xff] %v4814
    %4831 = vst [vmem:[#allocation2 + $0x8] sm:$0xff] %v4815
    %4832 = vst [vmem:[#allocation2 + $0x10] sm:$0xff] %v4816
    %vm4833 = vcmask 125952
    %4834 = vst.msk [vmem:[#allocation2 + $0x18] sm:$0xf] %vm4833, %v4817
    %4835 = vst [vmem:[#allocation2 + $0x1c] sm:$0xff] %v4818
    %4836 = vst [vmem:[#allocation2 + $0x24] sm:$0xff] %v4819
    %4837 = vst [vmem:[#allocation2 + $0x2c] sm:$0xff] %v4820
    %4838 = vst.msk [vmem:[#allocation2 + $0x34] sm:$0xf] %vm4833, %v4821
    // Predicated region
    $region30: #{tpu_custom_call.1} parent=1 // pred_check
      _
    $region31: #{tpu_custom_call.1} parent=1 // pred_check_branch
      %4840 = sbr.rel (0) target = $region33
    $region32: #{tpu_custom_call.1} parent=1 // pred_region
      %s4842 = ssub.s32 896, 896
      %4843 = vsyncadd [#allocation3], %s4842
      %s4844 = sshll.u32 [#allocation2], 4
      %s4845 = int_to_ptr.vmem [resolvable:$true] %s4844
      %4850 = dma.vmem_to_hbm [thread:$0]  %s4845, 896, %s7, [#allocation3], 448, 448, 28
    $region33: #{tpu_custom_call.1} parent=1 // pred_fallthru
      _
    // Predicated region
    $region34: #{tpu_custom_call.1} parent=1 // pred_check
      _
    $region35: #{tpu_custom_call.1} parent=1 // pred_check_branch
      %4852 = sbr.rel (0) target = $region37
    $region36: #{tpu_custom_call.1} parent=1 // pred_region
      %4853 = dma.done [#allocation3], 896
    $region37: #{tpu_custom_call.1} parent=1 // pred_fallthru
      _
    %4854 = vsyncpa [#allocation3], 1

</llo_original>
